<compile_context>
chip_gen: v5e
topology: v5e:2x2
jax: 0.10.0
libtpu: 0.0.40
codegen_flags: <defaults>
</compile_context>

<pallas_src>
import functools
import math

import jax
import jax.numpy as jnp
import numpy as np
from jax import lax
from jax.experimental import pallas as pl
from jax.experimental.pallas import tpu as pltpu


# ---------------------------------------------------------------------------
# Fused kernel (one grid step == one batch block)
# ---------------------------------------------------------------------------

def _fused_kernel(
    queen_ref, workers_ref,
    wqp_ref, bqp_ref,
    a_wq_ref, a_bq_ref, a_wk_ref, a_bk_ref, a_wv_ref, a_bv_ref, a_wo_ref, a_bo_ref,
    g_w1q_ref, g_w1w_ref, g_b1_ref, g_w2_ref, g_b2_ref,
    wwp_ref, bwp_ref,
    b_wq_ref, b_bq_ref, b_wk_ref, b_bk_ref, b_wv_ref, b_bv_ref, b_wo_ref, b_bo_ref,
    out_ref,
    *, num_heads, num_workers,
):
    f32 = jnp.float32
    H = num_heads
    Nw = num_workers
    Bb, S, Dq = queen_ref.shape
    Dw = wqp_ref.shape[1]
    hd_w = Dw // H
    hd_q = Dq // H

    def mm(a, b):                       # plain 2-D matmul, f32 accumulation
        return jnp.dot(a, b, preferred_element_type=f32)

    def bmm(a, b):                      # [G,M,K] x [G,K,N] -> [G,M,N]
        return lax.dot_general(a, b, (((2,), (1,)), ((0,), (0,))),
                               preferred_element_type=f32)

    def bmm_nt(a, b):                   # [G,M,K] x [G,N,K] -> [G,M,N]
        return lax.dot_general(a, b, (((2,), (2,)), ((0,), (0,))),
                               preferred_element_type=f32)

    def attend(q3, k3, v3, hd):
        # q3/k3/v3: [G, S, hd]  (G folds batch x [workers x] heads)
        s = bmm_nt(q3, k3) * (1.0 / math.sqrt(hd))        # [G,S,S]
        m = jnp.max(s, axis=-1, keepdims=True)
        p = jnp.exp(s - m)
        l = jnp.sum(p, axis=-1, keepdims=True)
        p = p * pl.reciprocal(l, approx=True)             # EUP reciprocal
        return bmm(p, v3)                                 # [G,S,hd]

    queen = queen_ref[...]                                # [Bb,S,Dq]
    workers = workers_ref[...]                            # [Bb,Nw,S,Dw]

    q2 = queen.reshape(Bb * S, Dq)
    w2 = workers.reshape(Bb * Nw * S, Dw)

    # --- queen projection: one 2-D matmul over all rows ---------------------
    qproj = mm(q2, wqp_ref[...]) + bqp_ref[...]           # [Bb*S, Dw]

    # --- queen -> worker attention (all workers & heads in one shot) --------
    qa = mm(qproj, a_wq_ref[...]) + a_bq_ref[...]         # [Bb*S,    H*hd_w]
    ka = mm(w2,    a_wk_ref[...]) + a_bk_ref[...]         # [Bb*Nw*S, H*hd_w]
    va = mm(w2,    a_wv_ref[...]) + a_bv_ref[...]         # [Bb*Nw*S, H*hd_w]

    # head split for score/PV only; queen queries are shared across workers,
    # so replicate q along the (leading) worker axis of the group dim.
    q4 = qa.reshape(Bb, S, H, hd_w).transpose(0, 2, 1, 3)             # [Bb,H,S,hd]
    q5 = jnp.broadcast_to(q4.reshape(Bb, 1, H * S, hd_w),
                          (Bb, Nw, H * S, hd_w)).reshape(Bb * Nw * H, S, hd_w)
    k5 = (ka.reshape(Bb * Nw, S, H, hd_w).transpose(0, 2, 1, 3)
            .reshape(Bb * Nw * H, S, hd_w))
    v5 = (va.reshape(Bb * Nw, S, H, hd_w).transpose(0, 2, 1, 3)
            .reshape(Bb * Nw * H, S, hd_w))

    o5 = attend(q5, k5, v5, hd_w)                                      # [Bb*Nw*H,S,hd]
    o_m = (o5.reshape(Bb * Nw, H, S, hd_w).transpose(0, 2, 1, 3)
             .reshape(Bb * Nw * S, Dw))                                # head merge
    updated = mm(o_m, a_wo_ref[...]) + a_bo_ref[...]                   # [Bb*Nw*S, Dw]
    updated = updated.reshape(Bb, Nw, S, Dw)

    # --- communication gate (split first-layer weight; no lane concat) ------
    qmean = jnp.mean(queen, axis=1)                                    # [Bb, Dq]
    wmean = jnp.mean(updated, axis=2).reshape(Bb, Nw * Dw)             # [Bb, Nw*Dw]
    h = mm(qmean, g_w1q_ref[...]) + mm(wmean, g_w1w_ref[...]) + g_b1_ref[...]
    h = jnp.maximum(h, 0.0)
    gates = jax.nn.sigmoid(mm(h, g_w2_ref[...]) + g_b2_ref[...])       # [Bb, Nw]

    # --- gate application: single broadcast multiply (no per-worker loop) ---
    gated = updated * gates[:, :, None, None]                          # [Bb,Nw,S,Dw]

    # --- worker aggregation: mean_i(g_i @ W + b) == (mean_i g_i) @ W + b ----
    gmean = jnp.mean(gated, axis=1).reshape(Bb * S, Dw)
    agg = mm(gmean, wwp_ref[...]) + bwp_ref[...]                       # [Bb*S, Dq]

    # --- worker -> queen attention -------------------------------------------
    qb = mm(q2,  b_wq_ref[...]) + b_bq_ref[...]                        # [Bb*S, H*hd_q]
    kb = mm(agg, b_wk_ref[...]) + b_bk_ref[...]
    vb = mm(agg, b_wv_ref[...]) + b_bv_ref[...]

    def heads_q(x):
        return (x.reshape(Bb, S, H, hd_q).transpose(0, 2, 1, 3)
                 .reshape(Bb * H, S, hd_q))

    ob = attend(heads_q(qb), heads_q(kb), heads_q(vb), hd_q)           # [Bb*H,S,hd_q]
    ob_m = (ob.reshape(Bb, H, S, hd_q).transpose(0, 2, 1, 3)
              .reshape(Bb * S, Dq))
    uq = (mm(ob_m, b_wo_ref[...]) + b_bo_ref[...]).reshape(Bb, S, Dq)

    # --- single lane-dense store: [updated_queen | gated workers] -----------
    gated_slab = gated.transpose(0, 2, 1, 3).reshape(Bb, S, Nw * Dw)
    out_ref[...] = jnp.concatenate([uq, gated_slab], axis=-1).astype(out_ref.dtype)


# ---------------------------------------------------------------------------
# Wrapper: single pallas_call; batch blocking depends on TPU generation
# ---------------------------------------------------------------------------

def queen_worker_communication(params, queen_state, worker_states, num_heads,
                               *, compute_dtype=jnp.float32):
    # compute_dtype=jnp.bfloat16 halves DMA bytes / doubles MXU rate on v6e/v7x
    # at larger sizes (keep f32 on v5e); f32 by default for strict parity.
    b, s, dq = queen_state.shape
    nw = len(worker_states)
    dw = worker_states[0].shape[-1]

    workers = jnp.stack(worker_states, axis=1)             # [B, Nw, S, Dw]

    wqp, bqp = params["queen_proj"]
    wwp, bwp = params["worker_proj"]
    (w1, b1), (w2g, b2g) = params["gate1"], params["gate2"]
    w1_q, w1_w = w1[:dq], w1[dq:]                          # [Dq,128], [Nw*Dw,128]

    a, btq = params["queen_to_worker"], params["worker_to_queen"]
    weights = [
        wqp, bqp,
        a["wq"], a["bq"], a["wk"], a["bk"], a["wv"], a["bv"], a["wo"], a["bo"],
        w1_q, w1_w, b1, w2g, b2g,
        wwp, bwp,
        btq["wq"], btq["bq"], btq["wk"], btq["bk"], btq["wv"], btq["bv"],
        btq["wo"], btq["bo"],
    ]

    cd = compute_dtype
    queen_in = queen_state.astype(cd)
    workers_in = workers.astype(cd)
    weights = [w.astype(cd) for w in weights]

    # Single-TC chips (v5e/v6e): one grid step over the whole (tiny) batch to
    # amortize per-step overhead.  Dual-TC v7x: grid over batch, "parallel".
    try:
        kind = jax.devices()[0].device_kind.lower()
    except Exception:
        kind = ""
    two_tc = ("v7" in kind) or ("tpu7" in kind)
    bb = 1 if (two_tc and b > 1) else b
    grid = (b // bb,)

    def full_spec(x):
        zeros = (0,) * x.ndim
        return pl.BlockSpec(x.shape, lambda i, z=zeros: z)

    d_out = dq + nw * dw
    slab = pl.pallas_call(
        functools.partial(_fused_kernel, num_heads=num_heads, num_workers=nw),
        grid=grid,
        in_specs=[pl.BlockSpec((bb, s, dq), lambda i: (i, 0, 0)),
                  pl.BlockSpec((bb, nw, s, dw), lambda i: (i, 0, 0, 0))]
                 + [full_spec(w) for w in weights],
        out_specs=pl.BlockSpec((bb, s, d_out), lambda i: (i, 0, 0)),
        out_shape=jax.ShapeDtypeStruct((b, s, d_out), jnp.float32),
        compiler_params=pltpu.CompilerParams(dimension_semantics=("parallel",)),
    )(queen_in, workers_in, *weights)

    updated_queen = slab[..., :dq]
    gated_workers = [slab[..., dq + i * dw: dq + (i + 1) * dw] for i in range(nw)]
    return updated_queen, gated_workers


# ---------------------------------------------------------------------------
# Deterministic parameter initialization (synthetic, no checkpoint)
# ---------------------------------------------------------------------------

def init_params(key, queen_dim, worker_dim, num_workers):
    def dense(k, din, dout, scale=0.05):
        kw, kb = jax.random.split(k)
        return (scale * jax.random.normal(kw, (din, dout), jnp.float32),
                scale * jax.random.normal(kb, (1, dout), jnp.float32))

    def mha_params(k, e):
        ks = jax.random.split(k, 4)
        wq, bq = dense(ks[0], e, e)
        wk, bk = dense(ks[1], e, e)
        wv, bv = dense(ks[2], e, e)
        wo, bo = dense(ks[3], e, e)
        return dict(wq=wq, wk=wk, wv=wv, bq=bq, bk=bk, bv=bv, wo=wo, bo=bo)

    keys = jax.random.split(key, 6)
    gate_in = queen_dim + worker_dim * num_workers
    return {
        "queen_to_worker": mha_params(keys[0], worker_dim),
        "worker_to_queen": mha_params(keys[1], queen_dim),
        "queen_proj": dense(keys[2], queen_dim, worker_dim),
        "worker_proj": dense(keys[3], worker_dim, queen_dim),
        "gate1": dense(keys[4], gate_in, 128),
        "gate2": dense(keys[5], 128, num_workers),
    }


# ---------------------------------------------------------------------------
# Pure-JAX reference (for correctness check)
# ---------------------------------------------------------------------------

def _ref_mha(q, k, v, p, num_heads):
    e = q.shape[-1]
    hd = e // num_heads
    qq = q @ p["wq"] + p["bq"]
    kk = k @ p["wk"] + p["bk"]
    vv = v @ p["wv"] + p["bv"]

    def split(x):
        bb, ss, _ = x.shape
        return x.reshape(bb, ss, num_heads, hd).transpose(0, 2, 1, 3)

    qh, kh, vh = split(qq), split(kk), split(vv)
    s = jnp.einsum("bhqd,bhkd->bhqk", qh, kh) / math.sqrt(hd)
    o = jnp.einsum("bhqk,bhkd->bhqd", jax.nn.softmax(s, -1), vh)
    bb, _, ss, _ = o.shape
    o = o.transpose(0, 2, 1, 3).reshape(bb, ss, e)
    return o @ p["wo"] + p["bo"]


def _ref_forward(params, queen_state, worker_states, num_heads):
    wqp, bqp = params["queen_proj"]
    queen_projected = queen_state @ wqp + bqp
    updated = [_ref_mha(queen_projected, w, w, params["queen_to_worker"], num_heads)
               for w in worker_states]
    combined = jnp.concatenate([queen_state] + updated, axis=-1)
    (w1, b1), (w2, b2) = params["gate1"], params["gate2"]
    gates = jax.nn.sigmoid(jnp.maximum(combined.mean(1) @ w1 + b1, 0.0) @ w2 + b2)
    gated = [u * gates[:, i][:, None, None] for i, u in enumerate(updated)]
    wwp, bwp = params["worker_proj"]
    proj = [g @ wwp + bwp for g in gated]
    agg = jnp.mean(jnp.stack(proj, 0), 0)
    updated_queen = _ref_mha(queen_state, agg, agg, params["worker_to_queen"], num_heads)
    return updated_queen, gated


# ---------------------------------------------------------------------------
# Main
# ---------------------------------------------------------------------------

if __name__ == "__main__":
    B, S = 2, 8
    QUEEN_DIM, WORKER_DIM, NUM_WORKERS, HEADS = 32, 16, 2, 4

    key = jax.random.PRNGKey(0)
    kp, kq, kw = jax.random.split(key, 3)
    params = init_params(kp, QUEEN_DIM, WORKER_DIM, NUM_WORKERS)

    queen_state = jax.random.normal(kq, (B, S, QUEEN_DIM), jnp.float32)
    wkeys = jax.random.split(kw, NUM_WORKERS)
    worker_states = [jax.random.normal(k, (B, S, WORKER_DIM), jnp.float32) for k in wkeys]

    updated_queen, gated_workers = queen_worker_communication(
        params, queen_state, worker_states, HEADS)
    jax.block_until_ready((updated_queen, gated_workers))

    ref_queen, ref_gated = _ref_forward(params, queen_state, worker_states, HEADS)
    np.testing.assert_allclose(np.asarray(updated_queen), np.asarray(ref_queen),
                               rtol=2e-3, atol=2e-3)
    for gw, rgw in zip(gated_workers, ref_gated):
        np.testing.assert_allclose(np.asarray(gw), np.asarray(rgw),
                                   rtol=2e-3, atol=2e-3)

    print("KERNEL_OK")
</pallas_src>

<mosaic_0001>
module attributes {stable_mosaic.version = 11 : i64} {
  func.func @_fused_kernel(%arg0: i32, %arg1: memref<2x8x32xf32, #tpu.memory_space<vmem>>, %arg2: memref<2x2x8x16xf32, #tpu.memory_space<vmem>>, %arg3: memref<32x16xf32, #tpu.memory_space<vmem>>, %arg4: memref<1x16xf32, #tpu.memory_space<vmem>>, %arg5: memref<16x16xf32, #tpu.memory_space<vmem>>, %arg6: memref<1x16xf32, #tpu.memory_space<vmem>>, %arg7: memref<16x16xf32, #tpu.memory_space<vmem>>, %arg8: memref<1x16xf32, #tpu.memory_space<vmem>>, %arg9: memref<16x16xf32, #tpu.memory_space<vmem>>, %arg10: memref<1x16xf32, #tpu.memory_space<vmem>>, %arg11: memref<16x16xf32, #tpu.memory_space<vmem>>, %arg12: memref<1x16xf32, #tpu.memory_space<vmem>>, %arg13: memref<32x128xf32, #tpu.memory_space<vmem>>, %arg14: memref<32x128xf32, #tpu.memory_space<vmem>>, %arg15: memref<1x128xf32, #tpu.memory_space<vmem>>, %arg16: memref<128x2xf32, #tpu.memory_space<vmem>>, %arg17: memref<1x2xf32, #tpu.memory_space<vmem>>, %arg18: memref<16x32xf32, #tpu.memory_space<vmem>>, %arg19: memref<1x32xf32, #tpu.memory_space<vmem>>, %arg20: memref<32x32xf32, #tpu.memory_space<vmem>>, %arg21: memref<1x32xf32, #tpu.memory_space<vmem>>, %arg22: memref<32x32xf32, #tpu.memory_space<vmem>>, %arg23: memref<1x32xf32, #tpu.memory_space<vmem>>, %arg24: memref<32x32xf32, #tpu.memory_space<vmem>>, %arg25: memref<1x32xf32, #tpu.memory_space<vmem>>, %arg26: memref<32x32xf32, #tpu.memory_space<vmem>>, %arg27: memref<1x32xf32, #tpu.memory_space<vmem>>, %arg28: memref<2x8x64xf32, #tpu.memory_space<vmem>>) attributes {dimension_semantics = [#tpu.dimension_semantics<parallel>], iteration_bounds = array<i64: 1>, scalar_prefetch = 0 : i64, scratch_operands = 0 : i64, tpu.core_type = #tpu.core_type<tc>, window_params = [{transform_indices = @transform_0, window_bounds = array<i64: 2, 8, 32>}, {transform_indices = @transform_1, window_bounds = array<i64: 2, 2, 8, 16>}, {pipeline_mode = #tpu.pipeline_mode<synchronous>, transform_indices = @transform_2, window_bounds = array<i64: 32, 16>}, {pipeline_mode = #tpu.pipeline_mode<synchronous>, transform_indices = @transform_3, window_bounds = array<i64: 1, 16>}, {pipeline_mode = #tpu.pipeline_mode<synchronous>, transform_indices = @transform_4, window_bounds = array<i64: 16, 16>}, {pipeline_mode = #tpu.pipeline_mode<synchronous>, transform_indices = @transform_5, window_bounds = array<i64: 1, 16>}, {pipeline_mode = #tpu.pipeline_mode<synchronous>, transform_indices = @transform_6, window_bounds = array<i64: 16, 16>}, {pipeline_mode = #tpu.pipeline_mode<synchronous>, transform_indices = @transform_7, window_bounds = array<i64: 1, 16>}, {pipeline_mode = #tpu.pipeline_mode<synchronous>, transform_indices = @transform_8, window_bounds = array<i64: 16, 16>}, {pipeline_mode = #tpu.pipeline_mode<synchronous>, transform_indices = @transform_9, window_bounds = array<i64: 1, 16>}, {pipeline_mode = #tpu.pipeline_mode<synchronous>, transform_indices = @transform_10, window_bounds = array<i64: 16, 16>}, {pipeline_mode = #tpu.pipeline_mode<synchronous>, transform_indices = @transform_11, window_bounds = array<i64: 1, 16>}, {pipeline_mode = #tpu.pipeline_mode<synchronous>, transform_indices = @transform_12, window_bounds = array<i64: 32, 128>}, {pipeline_mode = #tpu.pipeline_mode<synchronous>, transform_indices = @transform_13, window_bounds = array<i64: 32, 128>}, {pipeline_mode = #tpu.pipeline_mode<synchronous>, transform_indices = @transform_14, window_bounds = array<i64: 1, 128>}, {pipeline_mode = #tpu.pipeline_mode<synchronous>, transform_indices = @transform_15, window_bounds = array<i64: 128, 2>}, {pipeline_mode = #tpu.pipeline_mode<synchronous>, transform_indices = @transform_16, window_bounds = array<i64: 1, 2>}, {pipeline_mode = #tpu.pipeline_mode<synchronous>, transform_indices = @transform_17, window_bounds = array<i64: 16, 32>}, {pipeline_mode = #tpu.pipeline_mode<synchronous>, transform_indices = @transform_18, window_bounds = array<i64: 1, 32>}, {pipeline_mode = #tpu.pipeline_mode<synchronous>, transform_indices = @transform_19, window_bounds = array<i64: 32, 32>}, {pipeline_mode = #tpu.pipeline_mode<synchronous>, transform_indices = @transform_20, window_bounds = array<i64: 1, 32>}, {pipeline_mode = #tpu.pipeline_mode<synchronous>, transform_indices = @transform_21, window_bounds = array<i64: 32, 32>}, {pipeline_mode = #tpu.pipeline_mode<synchronous>, transform_indices = @transform_22, window_bounds = array<i64: 1, 32>}, {pipeline_mode = #tpu.pipeline_mode<synchronous>, transform_indices = @transform_23, window_bounds = array<i64: 32, 32>}, {pipeline_mode = #tpu.pipeline_mode<synchronous>, transform_indices = @transform_24, window_bounds = array<i64: 1, 32>}, {pipeline_mode = #tpu.pipeline_mode<synchronous>, transform_indices = @transform_25, window_bounds = array<i64: 32, 32>}, {pipeline_mode = #tpu.pipeline_mode<synchronous>, transform_indices = @transform_26, window_bounds = array<i64: 1, 32>}, {transform_indices = @transform_27, window_bounds = array<i64: 2, 8, 64>}]} {
    %c0 = arith.constant 0 : index
    %c0_0 = arith.constant 0 : index
    %c0_1 = arith.constant 0 : index
    %0 = vector.load %arg1[%c0, %c0_0, %c0_1] : memref<2x8x32xf32, #tpu.memory_space<vmem>>, vector<2x8x32xf32>
    %c0_2 = arith.constant 0 : index
    %c0_3 = arith.constant 0 : index
    %c0_4 = arith.constant 0 : index
    %c0_5 = arith.constant 0 : index
    %1 = vector.load %arg2[%c0_2, %c0_3, %c0_4, %c0_5] : memref<2x2x8x16xf32, #tpu.memory_space<vmem>>, vector<2x2x8x16xf32>
    %2 = vector.shape_cast %0 : vector<2x8x32xf32> to vector<16x32xf32>
    %3 = vector.shape_cast %1 : vector<2x2x8x16xf32> to vector<32x16xf32>
    %c0_6 = arith.constant 0 : index
    %c0_7 = arith.constant 0 : index
    %4 = vector.load %arg3[%c0_6, %c0_7] : memref<32x16xf32, #tpu.memory_space<vmem>>, vector<32x16xf32>
    %cst = arith.constant dense<0.000000e+00> : vector<16x16xf32>
    %5 = tpu.matmul %2, %4, %cst {dimension_numbers = #tpu.dot_dimension_numbers<[1], [0], [0], [1], [0, 0, 1, 1], [], []>} : vector<16x32xf32>, vector<32x16xf32>, vector<16x16xf32> -> vector<16x16xf32>
    %c0_8 = arith.constant 0 : index
    %c0_9 = arith.constant 0 : index
    %6 = vector.load %arg4[%c0_8, %c0_9] : memref<1x16xf32, #tpu.memory_space<vmem>>, vector<1x16xf32>
    %7 = vector.broadcast %6 : vector<1x16xf32> to vector<16x16xf32>
    %8 = arith.addf %5, %7 : vector<16x16xf32>
    %c0_10 = arith.constant 0 : index
    %c0_11 = arith.constant 0 : index
    %9 = vector.load %arg5[%c0_10, %c0_11] : memref<16x16xf32, #tpu.memory_space<vmem>>, vector<16x16xf32>
    %cst_12 = arith.constant dense<0.000000e+00> : vector<16x16xf32>
    %10 = tpu.matmul %8, %9, %cst_12 {dimension_numbers = #tpu.dot_dimension_numbers<[1], [0], [0], [1], [0, 0, 1, 1], [], []>} : vector<16x16xf32>, vector<16x16xf32>, vector<16x16xf32> -> vector<16x16xf32>
    %c0_13 = arith.constant 0 : index
    %c0_14 = arith.constant 0 : index
    %11 = vector.load %arg6[%c0_13, %c0_14] : memref<1x16xf32, #tpu.memory_space<vmem>>, vector<1x16xf32>
    %12 = vector.broadcast %11 : vector<1x16xf32> to vector<16x16xf32>
    %13 = arith.addf %10, %12 : vector<16x16xf32>
    %c0_15 = arith.constant 0 : index
    %c0_16 = arith.constant 0 : index
    %14 = vector.load %arg7[%c0_15, %c0_16] : memref<16x16xf32, #tpu.memory_space<vmem>>, vector<16x16xf32>
    %cst_17 = arith.constant dense<0.000000e+00> : vector<32x16xf32>
    %15 = tpu.matmul %3, %14, %cst_17 {dimension_numbers = #tpu.dot_dimension_numbers<[1], [0], [0], [1], [0, 0, 1, 1], [], []>} : vector<32x16xf32>, vector<16x16xf32>, vector<32x16xf32> -> vector<32x16xf32>
    %c0_18 = arith.constant 0 : index
    %c0_19 = arith.constant 0 : index
    %16 = vector.load %arg8[%c0_18, %c0_19] : memref<1x16xf32, #tpu.memory_space<vmem>>, vector<1x16xf32>
    %17 = vector.broadcast %16 : vector<1x16xf32> to vector<32x16xf32>
    %18 = arith.addf %15, %17 : vector<32x16xf32>
    %c0_20 = arith.constant 0 : index
    %c0_21 = arith.constant 0 : index
    %19 = vector.load %arg9[%c0_20, %c0_21] : memref<16x16xf32, #tpu.memory_space<vmem>>, vector<16x16xf32>
    %cst_22 = arith.constant dense<0.000000e+00> : vector<32x16xf32>
    %20 = tpu.matmul %3, %19, %cst_22 {dimension_numbers = #tpu.dot_dimension_numbers<[1], [0], [0], [1], [0, 0, 1, 1], [], []>} : vector<32x16xf32>, vector<16x16xf32>, vector<32x16xf32> -> vector<32x16xf32>
    %c0_23 = arith.constant 0 : index
    %c0_24 = arith.constant 0 : index
    %21 = vector.load %arg10[%c0_23, %c0_24] : memref<1x16xf32, #tpu.memory_space<vmem>>, vector<1x16xf32>
    %22 = vector.broadcast %21 : vector<1x16xf32> to vector<32x16xf32>
    %23 = arith.addf %20, %22 : vector<32x16xf32>
    %24 = vector.shape_cast %13 : vector<16x16xf32> to vector<2x8x4x4xf32>
    %25 = tpu.transpose %24, [0, 2, 1, 3] : vector<2x8x4x4xf32> -> vector<2x4x8x4xf32>
    %26 = vector.shape_cast %25 : vector<2x4x8x4xf32> to vector<2x1x32x4xf32>
    %27 = vector.shape_cast %26 : vector<2x1x32x4xf32> to vector<2x1x32x4xf32>
    %28 = vector.broadcast %27 : vector<2x1x32x4xf32> to vector<2x2x32x4xf32>
    %29 = vector.shape_cast %28 : vector<2x2x32x4xf32> to vector<16x8x4xf32>
    %30 = vector.shape_cast %18 : vector<32x16xf32> to vector<4x8x4x4xf32>
    %31 = tpu.transpose %30, [0, 2, 1, 3] : vector<4x8x4x4xf32> -> vector<4x4x8x4xf32>
    %32 = vector.shape_cast %31 : vector<4x4x8x4xf32> to vector<16x8x4xf32>
    %33 = vector.shape_cast %23 : vector<32x16xf32> to vector<4x8x4x4xf32>
    %34 = tpu.transpose %33, [0, 2, 1, 3] : vector<4x8x4x4xf32> -> vector<4x4x8x4xf32>
    %35 = vector.shape_cast %34 : vector<4x4x8x4xf32> to vector<16x8x4xf32>
    %cst_25 = arith.constant dense<0.000000e+00> : vector<16x8x8xf32>
    %36 = tpu.matmul %29, %32, %cst_25 {dimension_numbers = #tpu.dot_dimension_numbers<[2], [2], [1], [1], [0, 0, 0, 1, 1, 1], [0], [0]>} : vector<16x8x4xf32>, vector<16x8x4xf32>, vector<16x8x8xf32> -> vector<16x8x8xf32>
    %cst_26 = arith.constant 5.000000e-01 : f32
    %37 = vector.broadcast %cst_26 : f32 to vector<16x8x8xf32>
    %38 = arith.mulf %36, %37 : vector<16x8x8xf32>
    %cst_27 = arith.constant dense<0xFF800000> : vector<16x8xf32>
    %39 = vector.multi_reduction <maximumf>, %38, %cst_27 [2] : vector<16x8x8xf32> to vector<16x8xf32>
    %40 = vector.shape_cast %39 : vector<16x8xf32> to vector<16x8x1xf32>
    %41 = vector.broadcast %40 : vector<16x8x1xf32> to vector<16x8x8xf32>
    %42 = arith.subf %38, %41 : vector<16x8x8xf32>
    %43 = math.exp %42 : vector<16x8x8xf32>
    %cst_28 = arith.constant dense<0.000000e+00> : vector<16x8xf32>
    %44 = vector.multi_reduction <add>, %43, %cst_28 [2] : vector<16x8x8xf32> to vector<16x8xf32>
    %45 = vector.shape_cast %44 : vector<16x8xf32> to vector<16x8x1xf32>
    %46 = tpu.reciprocal %45 {approx = true} : vector<16x8x1xf32> -> vector<16x8x1xf32>
    %47 = vector.broadcast %46 : vector<16x8x1xf32> to vector<16x8x8xf32>
    %48 = arith.mulf %43, %47 : vector<16x8x8xf32>
    %cst_29 = arith.constant dense<0.000000e+00> : vector<16x8x4xf32>
    %49 = tpu.matmul %48, %35, %cst_29 {dimension_numbers = #tpu.dot_dimension_numbers<[2], [1], [1], [2], [0, 0, 0, 1, 1, 2], [0], [0]>} : vector<16x8x8xf32>, vector<16x8x4xf32>, vector<16x8x4xf32> -> vector<16x8x4xf32>
    %50 = vector.shape_cast %49 : vector<16x8x4xf32> to vector<4x4x8x4xf32>
    %51 = tpu.transpose %50, [0, 2, 1, 3] : vector<4x4x8x4xf32> -> vector<4x8x4x4xf32>
    %52 = vector.shape_cast %51 : vector<4x8x4x4xf32> to vector<32x16xf32>
    %c0_30 = arith.constant 0 : index
    %c0_31 = arith.constant 0 : index
    %53 = vector.load %arg11[%c0_30, %c0_31] : memref<16x16xf32, #tpu.memory_space<vmem>>, vector<16x16xf32>
    %cst_32 = arith.constant dense<0.000000e+00> : vector<32x16xf32>
    %54 = tpu.matmul %52, %53, %cst_32 {dimension_numbers = #tpu.dot_dimension_numbers<[1], [0], [0], [1], [0, 0, 1, 1], [], []>} : vector<32x16xf32>, vector<16x16xf32>, vector<32x16xf32> -> vector<32x16xf32>
    %c0_33 = arith.constant 0 : index
    %c0_34 = arith.constant 0 : index
    %55 = vector.load %arg12[%c0_33, %c0_34] : memref<1x16xf32, #tpu.memory_space<vmem>>, vector<1x16xf32>
    %56 = vector.broadcast %55 : vector<1x16xf32> to vector<32x16xf32>
    %57 = arith.addf %54, %56 : vector<32x16xf32>
    %58 = vector.shape_cast %57 : vector<32x16xf32> to vector<2x2x8x16xf32>
    %cst_35 = arith.constant dense<0.000000e+00> : vector<2x32xf32>
    %59 = vector.multi_reduction <add>, %0, %cst_35 [1] : vector<2x8x32xf32> to vector<2x32xf32>
    %cst_36 = arith.constant 8.000000e+00 : f32
    %60 = vector.broadcast %cst_36 : f32 to vector<2x32xf32>
    %61 = arith.divf %59, %60 : vector<2x32xf32>
    %cst_37 = arith.constant dense<0.000000e+00> : vector<2x2x16xf32>
    %62 = vector.multi_reduction <add>, %58, %cst_37 [2] : vector<2x2x8x16xf32> to vector<2x2x16xf32>
    %cst_38 = arith.constant 8.000000e+00 : f32
    %63 = vector.broadcast %cst_38 : f32 to vector<2x2x16xf32>
    %64 = arith.divf %62, %63 : vector<2x2x16xf32>
    %65 = vector.shape_cast %64 : vector<2x2x16xf32> to vector<2x32xf32>
    %c0_39 = arith.constant 0 : index
    %c0_40 = arith.constant 0 : index
    %66 = vector.load %arg13[%c0_39, %c0_40] : memref<32x128xf32, #tpu.memory_space<vmem>>, vector<32x128xf32>
    %cst_41 = arith.constant dense<0.000000e+00> : vector<2x128xf32>
    %67 = tpu.matmul %61, %66, %cst_41 {dimension_numbers = #tpu.dot_dimension_numbers<[1], [0], [0], [1], [0, 0, 1, 1], [], []>} : vector<2x32xf32>, vector<32x128xf32>, vector<2x128xf32> -> vector<2x128xf32>
    %c0_42 = arith.constant 0 : index
    %c0_43 = arith.constant 0 : index
    %68 = vector.load %arg14[%c0_42, %c0_43] : memref<32x128xf32, #tpu.memory_space<vmem>>, vector<32x128xf32>
    %cst_44 = arith.constant dense<0.000000e+00> : vector<2x128xf32>
    %69 = tpu.matmul %65, %68, %cst_44 {dimension_numbers = #tpu.dot_dimension_numbers<[1], [0], [0], [1], [0, 0, 1, 1], [], []>} : vector<2x32xf32>, vector<32x128xf32>, vector<2x128xf32> -> vector<2x128xf32>
    %70 = arith.addf %67, %69 : vector<2x128xf32>
    %c0_45 = arith.constant 0 : index
    %c0_46 = arith.constant 0 : index
    %71 = vector.load %arg15[%c0_45, %c0_46] : memref<1x128xf32, #tpu.memory_space<vmem>>, vector<1x128xf32>
    %72 = vector.broadcast %71 : vector<1x128xf32> to vector<2x128xf32>
    %73 = arith.addf %70, %72 : vector<2x128xf32>
    %cst_47 = arith.constant 0.000000e+00 : f32
    %74 = vector.broadcast %cst_47 : f32 to vector<2x128xf32>
    %75 = arith.maximumf %73, %74 : vector<2x128xf32>
    %c0_48 = arith.constant 0 : index
    %c0_49 = arith.constant 0 : index
    %76 = vector.load %arg16[%c0_48, %c0_49] : memref<128x2xf32, #tpu.memory_space<vmem>>, vector<128x2xf32>
    %cst_50 = arith.constant dense<0.000000e+00> : vector<2x2xf32>
    %77 = tpu.matmul %75, %76, %cst_50 {dimension_numbers = #tpu.dot_dimension_numbers<[1], [0], [0], [1], [0, 0, 1, 1], [], []>} : vector<2x128xf32>, vector<128x2xf32>, vector<2x2xf32> -> vector<2x2xf32>
    %c0_51 = arith.constant 0 : index
    %c0_52 = arith.constant 0 : index
    %78 = vector.load %arg17[%c0_51, %c0_52] : memref<1x2xf32, #tpu.memory_space<vmem>>, vector<1x2xf32>
    %79 = vector.broadcast %78 : vector<1x2xf32> to vector<2x2xf32>
    %80 = arith.addf %77, %79 : vector<2x2xf32>
    %81 = arith.negf %80 : vector<2x2xf32>
    %82 = math.exp %81 : vector<2x2xf32>
    %cst_53 = arith.constant 1.000000e+00 : f32
    %83 = vector.broadcast %cst_53 : f32 to vector<2x2xf32>
    %84 = arith.addf %83, %82 : vector<2x2xf32>
    %85 = arith.divf %83, %84 : vector<2x2xf32>
    %86 = vector.shape_cast %85 : vector<2x2xf32> to vector<2x2x1x1xf32>
    %87 = vector.broadcast %86 : vector<2x2x1x1xf32> to vector<2x2x8x16xf32>
    %88 = arith.mulf %58, %87 : vector<2x2x8x16xf32>
    %cst_54 = arith.constant dense<0.000000e+00> : vector<2x8x16xf32>
    %89 = vector.multi_reduction <add>, %88, %cst_54 [1] : vector<2x2x8x16xf32> to vector<2x8x16xf32>
    %cst_55 = arith.constant 2.000000e+00 : f32
    %90 = vector.broadcast %cst_55 : f32 to vector<2x8x16xf32>
    %91 = arith.divf %89, %90 : vector<2x8x16xf32>
    %92 = vector.shape_cast %91 : vector<2x8x16xf32> to vector<16x16xf32>
    %c0_56 = arith.constant 0 : index
    %c0_57 = arith.constant 0 : index
    %93 = vector.load %arg18[%c0_56, %c0_57] : memref<16x32xf32, #tpu.memory_space<vmem>>, vector<16x32xf32>
    %cst_58 = arith.constant dense<0.000000e+00> : vector<16x32xf32>
    %94 = tpu.matmul %92, %93, %cst_58 {dimension_numbers = #tpu.dot_dimension_numbers<[1], [0], [0], [1], [0, 0, 1, 1], [], []>} : vector<16x16xf32>, vector<16x32xf32>, vector<16x32xf32> -> vector<16x32xf32>
    %c0_59 = arith.constant 0 : index
    %c0_60 = arith.constant 0 : index
    %95 = vector.load %arg19[%c0_59, %c0_60] : memref<1x32xf32, #tpu.memory_space<vmem>>, vector<1x32xf32>
    %96 = vector.broadcast %95 : vector<1x32xf32> to vector<16x32xf32>
    %97 = arith.addf %94, %96 : vector<16x32xf32>
    %c0_61 = arith.constant 0 : index
    %c0_62 = arith.constant 0 : index
    %98 = vector.load %arg20[%c0_61, %c0_62] : memref<32x32xf32, #tpu.memory_space<vmem>>, vector<32x32xf32>
    %cst_63 = arith.constant dense<0.000000e+00> : vector<16x32xf32>
    %99 = tpu.matmul %2, %98, %cst_63 {dimension_numbers = #tpu.dot_dimension_numbers<[1], [0], [0], [1], [0, 0, 1, 1], [], []>} : vector<16x32xf32>, vector<32x32xf32>, vector<16x32xf32> -> vector<16x32xf32>
    %c0_64 = arith.constant 0 : index
    %c0_65 = arith.constant 0 : index
    %100 = vector.load %arg21[%c0_64, %c0_65] : memref<1x32xf32, #tpu.memory_space<vmem>>, vector<1x32xf32>
    %101 = vector.broadcast %100 : vector<1x32xf32> to vector<16x32xf32>
    %102 = arith.addf %99, %101 : vector<16x32xf32>
    %c0_66 = arith.constant 0 : index
    %c0_67 = arith.constant 0 : index
    %103 = vector.load %arg22[%c0_66, %c0_67] : memref<32x32xf32, #tpu.memory_space<vmem>>, vector<32x32xf32>
    %cst_68 = arith.constant dense<0.000000e+00> : vector<16x32xf32>
    %104 = tpu.matmul %97, %103, %cst_68 {dimension_numbers = #tpu.dot_dimension_numbers<[1], [0], [0], [1], [0, 0, 1, 1], [], []>} : vector<16x32xf32>, vector<32x32xf32>, vector<16x32xf32> -> vector<16x32xf32>
    %c0_69 = arith.constant 0 : index
    %c0_70 = arith.constant 0 : index
    %105 = vector.load %arg23[%c0_69, %c0_70] : memref<1x32xf32, #tpu.memory_space<vmem>>, vector<1x32xf32>
    %106 = vector.broadcast %105 : vector<1x32xf32> to vector<16x32xf32>
    %107 = arith.addf %104, %106 : vector<16x32xf32>
    %c0_71 = arith.constant 0 : index
    %c0_72 = arith.constant 0 : index
    %108 = vector.load %arg24[%c0_71, %c0_72] : memref<32x32xf32, #tpu.memory_space<vmem>>, vector<32x32xf32>
    %cst_73 = arith.constant dense<0.000000e+00> : vector<16x32xf32>
    %109 = tpu.matmul %97, %108, %cst_73 {dimension_numbers = #tpu.dot_dimension_numbers<[1], [0], [0], [1], [0, 0, 1, 1], [], []>} : vector<16x32xf32>, vector<32x32xf32>, vector<16x32xf32> -> vector<16x32xf32>
    %c0_74 = arith.constant 0 : index
    %c0_75 = arith.constant 0 : index
    %110 = vector.load %arg25[%c0_74, %c0_75] : memref<1x32xf32, #tpu.memory_space<vmem>>, vector<1x32xf32>
    %111 = vector.broadcast %110 : vector<1x32xf32> to vector<16x32xf32>
    %112 = arith.addf %109, %111 : vector<16x32xf32>
    %113 = vector.shape_cast %102 : vector<16x32xf32> to vector<2x8x4x8xf32>
    %114 = tpu.transpose %113, [0, 2, 1, 3] : vector<2x8x4x8xf32> -> vector<2x4x8x8xf32>
    %115 = vector.shape_cast %114 : vector<2x4x8x8xf32> to vector<8x8x8xf32>
    %116 = vector.shape_cast %107 : vector<16x32xf32> to vector<2x8x4x8xf32>
    %117 = tpu.transpose %116, [0, 2, 1, 3] : vector<2x8x4x8xf32> -> vector<2x4x8x8xf32>
    %118 = vector.shape_cast %117 : vector<2x4x8x8xf32> to vector<8x8x8xf32>
    %119 = vector.shape_cast %112 : vector<16x32xf32> to vector<2x8x4x8xf32>
    %120 = tpu.transpose %119, [0, 2, 1, 3] : vector<2x8x4x8xf32> -> vector<2x4x8x8xf32>
    %121 = vector.shape_cast %120 : vector<2x4x8x8xf32> to vector<8x8x8xf32>
    %cst_76 = arith.constant dense<0.000000e+00> : vector<8x8x8xf32>
    %122 = tpu.matmul %115, %118, %cst_76 {dimension_numbers = #tpu.dot_dimension_numbers<[2], [2], [1], [1], [0, 0, 0, 1, 1, 1], [0], [0]>} : vector<8x8x8xf32>, vector<8x8x8xf32>, vector<8x8x8xf32> -> vector<8x8x8xf32>
    %cst_77 = arith.constant 0.353553385 : f32
    %123 = vector.broadcast %cst_77 : f32 to vector<8x8x8xf32>
    %124 = arith.mulf %122, %123 : vector<8x8x8xf32>
    %cst_78 = arith.constant dense<0xFF800000> : vector<8x8xf32>
    %125 = vector.multi_reduction <maximumf>, %124, %cst_78 [2] : vector<8x8x8xf32> to vector<8x8xf32>
    %126 = vector.shape_cast %125 : vector<8x8xf32> to vector<8x8x1xf32>
    %127 = vector.broadcast %126 : vector<8x8x1xf32> to vector<8x8x8xf32>
    %128 = arith.subf %124, %127 : vector<8x8x8xf32>
    %129 = math.exp %128 : vector<8x8x8xf32>
    %cst_79 = arith.constant dense<0.000000e+00> : vector<8x8xf32>
    %130 = vector.multi_reduction <add>, %129, %cst_79 [2] : vector<8x8x8xf32> to vector<8x8xf32>
    %131 = vector.shape_cast %130 : vector<8x8xf32> to vector<8x8x1xf32>
    %132 = tpu.reciprocal %131 {approx = true} : vector<8x8x1xf32> -> vector<8x8x1xf32>
    %133 = vector.broadcast %132 : vector<8x8x1xf32> to vector<8x8x8xf32>
    %134 = arith.mulf %129, %133 : vector<8x8x8xf32>
    %cst_80 = arith.constant dense<0.000000e+00> : vector<8x8x8xf32>
    %135 = tpu.matmul %134, %121, %cst_80 {dimension_numbers = #tpu.dot_dimension_numbers<[2], [1], [1], [2], [0, 0, 0, 1, 1, 2], [0], [0]>} : vector<8x8x8xf32>, vector<8x8x8xf32>, vector<8x8x8xf32> -> vector<8x8x8xf32>
    %136 = vector.shape_cast %135 : vector<8x8x8xf32> to vector<2x4x8x8xf32>
    %137 = tpu.transpose %136, [0, 2, 1, 3] : vector<2x4x8x8xf32> -> vector<2x8x4x8xf32>
    %138 = vector.shape_cast %137 : vector<2x8x4x8xf32> to vector<16x32xf32>
    %c0_81 = arith.constant 0 : index
    %c0_82 = arith.constant 0 : index
    %139 = vector.load %arg26[%c0_81, %c0_82] : memref<32x32xf32, #tpu.memory_space<vmem>>, vector<32x32xf32>
    %cst_83 = arith.constant dense<0.000000e+00> : vector<16x32xf32>
    %140 = tpu.matmul %138, %139, %cst_83 {dimension_numbers = #tpu.dot_dimension_numbers<[1], [0], [0], [1], [0, 0, 1, 1], [], []>} : vector<16x32xf32>, vector<32x32xf32>, vector<16x32xf32> -> vector<16x32xf32>
    %c0_84 = arith.constant 0 : index
    %c0_85 = arith.constant 0 : index
    %141 = vector.load %arg27[%c0_84, %c0_85] : memref<1x32xf32, #tpu.memory_space<vmem>>, vector<1x32xf32>
    %142 = vector.broadcast %141 : vector<1x32xf32> to vector<16x32xf32>
    %143 = arith.addf %140, %142 : vector<16x32xf32>
    %144 = vector.shape_cast %143 : vector<16x32xf32> to vector<2x8x32xf32>
    %145 = tpu.transpose %88, [0, 2, 1, 3] : vector<2x2x8x16xf32> -> vector<2x8x2x16xf32>
    %146 = vector.shape_cast %145 : vector<2x8x2x16xf32> to vector<2x8x32xf32>
    %147 = tpu.concatenate %144, %146 in 2 : vector<2x8x32xf32>, vector<2x8x32xf32> -> vector<2x8x64xf32>
    %c0_86 = arith.constant 0 : index
    %c0_87 = arith.constant 0 : index
    %c0_88 = arith.constant 0 : index
    %148 = vector.load %arg28[%c0_86, %c0_87, %c0_88] : memref<2x8x64xf32, #tpu.memory_space<vmem>>, vector<2x8x64xf32>
    tpu.vector_store %arg28[%c0_86, %c0_87, %c0_88], %147 {strides = array<i32>} : memref<2x8x64xf32, #tpu.memory_space<vmem>>, vector<2x8x64xf32>,
    return
  }
  func.func @transform_0(%arg0: i32) -> (i32, i32, i32) {
    %c0_i32 = arith.constant 0 : i32
    %c0_i32_0 = arith.constant 0 : i32
    %c0_i32_1 = arith.constant 0 : i32
    return %arg0, %c0_i32, %c0_i32_0 : i32, i32, i32
  }
  func.func @transform_1(%arg0: i32) -> (i32, i32, i32, i32) {
    %c0_i32 = arith.constant 0 : i32
    %c0_i32_0 = arith.constant 0 : i32
    %c0_i32_1 = arith.constant 0 : i32
    %c0_i32_2 = arith.constant 0 : i32
    return %arg0, %c0_i32, %c0_i32_0, %c0_i32_1 : i32, i32, i32, i32
  }
  func.func @transform_2(%arg0: i32) -> (i32, i32) {
    %c0_i32 = arith.constant 0 : i32
    %c0_i32_0 = arith.constant 0 : i32
    %c0_i32_1 = arith.constant 0 : i32
    return %c0_i32, %c0_i32_0 : i32, i32
  }
  func.func @transform_3(%arg0: i32) -> (i32, i32) {
    %c0_i32 = arith.constant 0 : i32
    %c0_i32_0 = arith.constant 0 : i32
    %c0_i32_1 = arith.constant 0 : i32
    return %c0_i32, %c0_i32_0 : i32, i32
  }
  func.func @transform_4(%arg0: i32) -> (i32, i32) {
    %c0_i32 = arith.constant 0 : i32
    %c0_i32_0 = arith.constant 0 : i32
    %c0_i32_1 = arith.constant 0 : i32
    return %c0_i32, %c0_i32_0 : i32, i32
  }
  func.func @transform_5(%arg0: i32) -> (i32, i32) {
    %c0_i32 = arith.constant 0 : i32
    %c0_i32_0 = arith.constant 0 : i32
    %c0_i32_1 = arith.constant 0 : i32
    return %c0_i32, %c0_i32_0 : i32, i32
  }
  func.func @transform_6(%arg0: i32) -> (i32, i32) {
    %c0_i32 = arith.constant 0 : i32
    %c0_i32_0 = arith.constant 0 : i32
    %c0_i32_1 = arith.constant 0 : i32
    return %c0_i32, %c0_i32_0 : i32, i32
  }
  func.func @transform_7(%arg0: i32) -> (i32, i32) {
    %c0_i32 = arith.constant 0 : i32
    %c0_i32_0 = arith.constant 0 : i32
    %c0_i32_1 = arith.constant 0 : i32
    return %c0_i32, %c0_i32_0 : i32, i32
  }
  func.func @transform_8(%arg0: i32) -> (i32, i32) {
    %c0_i32 = arith.constant 0 : i32
    %c0_i32_0 = arith.constant 0 : i32
    %c0_i32_1 = arith.constant 0 : i32
    return %c0_i32, %c0_i32_0 : i32, i32
  }
  func.func @transform_9(%arg0: i32) -> (i32, i32) {
    %c0_i32 = arith.constant 0 : i32
    %c0_i32_0 = arith.constant 0 : i32
    %c0_i32_1 = arith.constant 0 : i32
    return %c0_i32, %c0_i32_0 : i32, i32
  }
  func.func @transform_10(%arg0: i32) -> (i32, i32) {
    %c0_i32 = arith.constant 0 : i32
    %c0_i32_0 = arith.constant 0 : i32
    %c0_i32_1 = arith.constant 0 : i32
    return %c0_i32, %c0_i32_0 : i32, i32
  }
  func.func @transform_11(%arg0: i32) -> (i32, i32) {
    %c0_i32 = arith.constant 0 : i32
    %c0_i32_0 = arith.constant 0 : i32
    %c0_i32_1 = arith.constant 0 : i32
    return %c0_i32, %c0_i32_0 : i32, i32
  }
  func.func @transform_12(%arg0: i32) -> (i32, i32) {
    %c0_i32 = arith.constant 0 : i32
    %c0_i32_0 = arith.constant 0 : i32
    %c0_i32_1 = arith.constant 0 : i32
    return %c0_i32, %c0_i32_0 : i32, i32
  }
  func.func @transform_13(%arg0: i32) -> (i32, i32) {
    %c0_i32 = arith.constant 0 : i32
    %c0_i32_0 = arith.constant 0 : i32
    %c0_i32_1 = arith.constant 0 : i32
    return %c0_i32, %c0_i32_0 : i32, i32
  }
  func.func @transform_14(%arg0: i32) -> (i32, i32) {
    %c0_i32 = arith.constant 0 : i32
    %c0_i32_0 = arith.constant 0 : i32
    %c0_i32_1 = arith.constant 0 : i32
    return %c0_i32, %c0_i32_0 : i32, i32
  }
  func.func @transform_15(%arg0: i32) -> (i32, i32) {
    %c0_i32 = arith.constant 0 : i32
    %c0_i32_0 = arith.constant 0 : i32
    %c0_i32_1 = arith.constant 0 : i32
    return %c0_i32, %c0_i32_0 : i32, i32
  }
  func.func @transform_16(%arg0: i32) -> (i32, i32) {
    %c0_i32 = arith.constant 0 : i32
    %c0_i32_0 = arith.constant 0 : i32
    %c0_i32_1 = arith.constant 0 : i32
    return %c0_i32, %c0_i32_0 : i32, i32
  }
  func.func @transform_17(%arg0: i32) -> (i32, i32) {
    %c0_i32 = arith.constant 0 : i32
    %c0_i32_0 = arith.constant 0 : i32
    %c0_i32_1 = arith.constant 0 : i32
    return %c0_i32, %c0_i32_0 : i32, i32
  }
  func.func @transform_18(%arg0: i32) -> (i32, i32) {
    %c0_i32 = arith.constant 0 : i32
    %c0_i32_0 = arith.constant 0 : i32
    %c0_i32_1 = arith.constant 0 : i32
    return %c0_i32, %c0_i32_0 : i32, i32
  }
  func.func @transform_19(%arg0: i32) -> (i32, i32) {
    %c0_i32 = arith.constant 0 : i32
    %c0_i32_0 = arith.constant 0 : i32
    %c0_i32_1 = arith.constant 0 : i32
    return %c0_i32, %c0_i32_0 : i32, i32
  }
  func.func @transform_20(%arg0: i32) -> (i32, i32) {
    %c0_i32 = arith.constant 0 : i32
    %c0_i32_0 = arith.constant 0 : i32
    %c0_i32_1 = arith.constant 0 : i32
    return %c0_i32, %c0_i32_0 : i32, i32
  }
  func.func @transform_21(%arg0: i32) -> (i32, i32) {
    %c0_i32 = arith.constant 0 : i32
    %c0_i32_0 = arith.constant 0 : i32
    %c0_i32_1 = arith.constant 0 : i32
    return %c0_i32, %c0_i32_0 : i32, i32
  }
  func.func @transform_22(%arg0: i32) -> (i32, i32) {
    %c0_i32 = arith.constant 0 : i32
    %c0_i32_0 = arith.constant 0 : i32
    %c0_i32_1 = arith.constant 0 : i32
    return %c0_i32, %c0_i32_0 : i32, i32
  }
  func.func @transform_23(%arg0: i32) -> (i32, i32) {
    %c0_i32 = arith.constant 0 : i32
    %c0_i32_0 = arith.constant 0 : i32
    %c0_i32_1 = arith.constant 0 : i32
    return %c0_i32, %c0_i32_0 : i32, i32
  }
  func.func @transform_24(%arg0: i32) -> (i32, i32) {
    %c0_i32 = arith.constant 0 : i32
    %c0_i32_0 = arith.constant 0 : i32
    %c0_i32_1 = arith.constant 0 : i32
    return %c0_i32, %c0_i32_0 : i32, i32
  }
  func.func @transform_25(%arg0: i32) -> (i32, i32) {
    %c0_i32 = arith.constant 0 : i32
    %c0_i32_0 = arith.constant 0 : i32
    %c0_i32_1 = arith.constant 0 : i32
    return %c0_i32, %c0_i32_0 : i32, i32
  }
  func.func @transform_26(%arg0: i32) -> (i32, i32) {
    %c0_i32 = arith.constant 0 : i32
    %c0_i32_0 = arith.constant 0 : i32
    %c0_i32_1 = arith.constant 0 : i32
    return %c0_i32, %c0_i32_0 : i32, i32
  }
  func.func @transform_27(%arg0: i32) -> (i32, i32, i32) {
    %c0_i32 = arith.constant 0 : i32
    %c0_i32_0 = arith.constant 0 : i32
    %c0_i32_1 = arith.constant 0 : i32
    return %arg0, %c0_i32, %c0_i32_0 : i32, i32, i32
  }
}

</mosaic_0001>

<llo_original>
// kernel: tpu_custom_call.1
$region0: #{tpu_custom_call.1}
  #allocation0 [shape = 'u32[]', space=smem, size = 0x4, offset = 0x4, fixed_abs, tag = 'smem constant byte address 0x4 - core index']
  #allocation1 [shape = 'u32[72,128]{1,0:T(1,128)}', space=vmem, size = 0x9000, scoped, tag = 'internal scratch']
  %s0 = inlined_call_operand.hbm [shape: f32[2,8,32], index: 0, kind: input, shape index: {}]
  %s1 = inlined_call_operand.vmem [shape: f32[2,2,8,16], index: 1, kind: input, shape index: {}]
  %s2 = inlined_call_operand.vmem [shape: f32[32,16], index: 2, kind: input, shape index: {}]
  %s3 = inlined_call_operand.vmem [shape: f32[1,16], index: 3, kind: input, shape index: {}]
  %s4 = inlined_call_operand.hbm [shape: f32[16,16], index: 4, kind: input, shape index: {}]
  %s5 = inlined_call_operand.hbm [shape: f32[1,16], index: 5, kind: input, shape index: {}]
  %s6 = inlined_call_operand.hbm [shape: f32[16,16], index: 6, kind: input, shape index: {}]
  %s7 = inlined_call_operand.hbm [shape: f32[1,16], index: 7, kind: input, shape index: {}]
  %s8 = inlined_call_operand.hbm [shape: f32[16,16], index: 8, kind: input, shape index: {}]
  %s9 = inlined_call_operand.hbm [shape: f32[1,16], index: 9, kind: input, shape index: {}]
  %s10 = inlined_call_operand.hbm [shape: f32[16,16], index: 10, kind: input, shape index: {}]
  %s11 = inlined_call_operand.hbm [shape: f32[1,16], index: 11, kind: input, shape index: {}]
  %s12 = inlined_call_operand.vmem [shape: f32[32,128], index: 12, kind: input, shape index: {}]
  %s13 = inlined_call_operand.vmem [shape: f32[32,128], index: 13, kind: input, shape index: {}]
  %s14 = inlined_call_operand.hbm [shape: f32[1,128], index: 14, kind: input, shape index: {}]
  %s15 = inlined_call_operand.vmem [shape: f32[128,2], index: 15, kind: input, shape index: {}]
  %s16 = inlined_call_operand.hbm [shape: f32[1,2], index: 16, kind: input, shape index: {}]
  %s17 = inlined_call_operand.hbm [shape: f32[16,32], index: 17, kind: input, shape index: {}]
  %s18 = inlined_call_operand.hbm [shape: f32[1,32], index: 18, kind: input, shape index: {}]
  %s19 = inlined_call_operand.vmem [shape: f32[32,32], index: 19, kind: input, shape index: {}]
  %s20 = inlined_call_operand.hbm [shape: f32[1,32], index: 20, kind: input, shape index: {}]
  %s21 = inlined_call_operand.vmem [shape: f32[32,32], index: 21, kind: input, shape index: {}]
  %s22 = inlined_call_operand.vmem [shape: f32[1,32], index: 22, kind: input, shape index: {}]
  %s23 = inlined_call_operand.vmem [shape: f32[32,32], index: 23, kind: input, shape index: {}]
  %s24 = inlined_call_operand.vmem [shape: f32[1,32], index: 24, kind: input, shape index: {}]
  %s25 = inlined_call_operand.hbm [shape: f32[32,32], index: 25, kind: input, shape index: {}]
  %s26 = inlined_call_operand.vmem [shape: f32[1,32], index: 26, kind: input, shape index: {}]
  %s27 = inlined_call_operand.hbm [shape: f32[2,8,64], index: 27, kind: output, shape index: {}]
  %s28 = sld [smem:[#allocation0]]
  $region178: #{tpu_custom_call.1} parent=0
    _
  %s30 = ssub.s32 1, %s28
  %s31 = scalar_select 0, %s30, %s28
  $region1: #{tpu_custom_call.1} parent=0
    #allocation2 [shape = 'u8[8192]{0}', space=vmem, size = 0x2000, scoped, tag = 'input window, operand 0, single buffered']
    #allocation3 [shape = 's32[1]{0}', space=sflag, size = 0x4, scoped, tag = 'scoped memory for tpu_custom_call.1']
    #allocation4 [shape = 's32[1]{0}', space=sflag, size = 0x4, scoped, tag = 'scoped memory for tpu_custom_call.1']
    #allocation5 [shape = 'u8[8192]{0}', space=vmem, size = 0x2000, scoped, tag = 'input window, operand 4, single buffered']
    #allocation6 [shape = 's32[1]{0}', space=sflag, size = 0x4, scoped, tag = 'scoped memory for tpu_custom_call.1']
    #allocation7 [shape = 'u8[512]{0}', space=vmem, size = 0x400, scoped, tag = 'input window, operand 5, single buffered']
    #allocation8 [shape = 'u8[8192]{0}', space=vmem, size = 0x2000, scoped, tag = 'input window, operand 6, single buffered']
    #allocation9 [shape = 's32[1]{0}', space=sflag, size = 0x4, scoped, tag = 'scoped memory for tpu_custom_call.1']
    #allocation10 [shape = 'u8[512]{0}', space=vmem, size = 0x400, scoped, tag = 'input window, operand 7, single buffered']
    #allocation11 [shape = 'u8[8192]{0}', space=vmem, size = 0x2000, scoped, tag = 'input window, operand 8, single buffered']
    #allocation12 [shape = 's32[1]{0}', space=sflag, size = 0x4, scoped, tag = 'scoped memory for tpu_custom_call.1']
    #allocation13 [shape = 'u8[512]{0}', space=vmem, size = 0x400, scoped, tag = 'input window, operand 9, single buffered']
    #allocation14 [shape = 'u8[8192]{0}', space=vmem, size = 0x2000, scoped, tag = 'input window, operand 10, single buffered']
    #allocation15 [shape = 's32[1]{0}', space=sflag, size = 0x4, scoped, tag = 'scoped memory for tpu_custom_call.1']
    #allocation16 [shape = 'u8[512]{0}', space=vmem, size = 0x400, scoped, tag = 'input window, operand 11, single buffered']
    #allocation17 [shape = 'u8[512]{0}', space=vmem, size = 0x400, scoped, tag = 'input window, operand 14, single buffered']
    #allocation18 [shape = 's32[1]{0}', space=sflag, size = 0x4, scoped, tag = 'scoped memory for tpu_custom_call.1']
    #allocation19 [shape = 'u8[512]{0}', space=vmem, size = 0x400, scoped, tag = 'input window, operand 16, single buffered']
    #allocation20 [shape = 'u8[8192]{0}', space=vmem, size = 0x2000, scoped, tag = 'input window, operand 17, single buffered']
    #allocation21 [shape = 's32[1]{0}', space=sflag, size = 0x4, scoped, tag = 'scoped memory for tpu_custom_call.1']
    #allocation22 [shape = 'u8[512]{0}', space=vmem, size = 0x400, scoped, tag = 'input window, operand 18, single buffered']
    #allocation23 [shape = 'u8[512]{0}', space=vmem, size = 0x400, scoped, tag = 'input window, operand 20, single buffered']
    #allocation24 [shape = 's32[1]{0}', space=sflag, size = 0x4, scoped, tag = 'scoped memory for tpu_custom_call.1']
    #allocation25 [shape = 'u8[16384]{0}', space=vmem, size = 0x4000, scoped, tag = 'input window, operand 25, single buffered']
    #allocation26 [shape = 'u8[8192]{0}', space=vmem, size = 0x2000, scoped, tag = 'output window, operand 0, single buffered']
    %32 = vsyncpa [#allocation3], 0
    %33 = vsyncpa [#allocation6], 0
    %34 = vsyncpa [#allocation9], 0
    %35 = vsyncpa [#allocation12], 0
    %36 = vsyncpa [#allocation15], 0
    %37 = vsyncpa [#allocation18], 0
    %38 = vsyncpa [#allocation21], 0
    %39 = vsyncpa [#allocation24], 0
    %40 = vsyncpa [#allocation4], 0
    // Predicated region
    $region2: #{tpu_custom_call.1} parent=1 // pred_check
      _
    $region3: #{tpu_custom_call.1} parent=1 // pred_check_branch
      %42 = sbr.rel (0) target = $region5
    $region4: #{tpu_custom_call.1} parent=1 // pred_region
      %44 = vsyncadd [#allocation3], 0
      %s45 = sshll.u32 %s0, 4
      %s46 = int_to_ptr.hbm [resolvable:$true] %s45
      %s47 = sshll.u32 [#allocation2], 4
      %s48 = int_to_ptr.vmem [resolvable:$true] %s47
      %53 = dma.hbm_to_vmem [thread:$0]  %s46, 256, %s48, [#allocation3], 128, 128, 8
    $region5: #{tpu_custom_call.1} parent=1 // pred_fallthru
      _
    // Predicated region
    $region6: #{tpu_custom_call.1} parent=1 // pred_check
      _
    $region7: #{tpu_custom_call.1} parent=1 // pred_check_branch
      %55 = sbr.rel (0) target = $region9
    $region8: #{tpu_custom_call.1} parent=1 // pred_region
      _
    $region9: #{tpu_custom_call.1} parent=1 // pred_fallthru
      _
    // Predicated region
    $region10: #{tpu_custom_call.1} parent=1 // pred_check
      _
    $region11: #{tpu_custom_call.1} parent=1 // pred_check_branch
      %57 = sbr.rel (0) target = $region13
    $region12: #{tpu_custom_call.1} parent=1 // pred_region
      _
    $region13: #{tpu_custom_call.1} parent=1 // pred_fallthru
      _
    // Predicated region
    $region14: #{tpu_custom_call.1} parent=1 // pred_check
      _
    $region15: #{tpu_custom_call.1} parent=1 // pred_check_branch
      %59 = sbr.rel (0) target = $region17
    $region16: #{tpu_custom_call.1} parent=1 // pred_region
      _
    $region17: #{tpu_custom_call.1} parent=1 // pred_fallthru
      _
    // Predicated region
    $region18: #{tpu_custom_call.1} parent=1 // pred_check
      _
    $region19: #{tpu_custom_call.1} parent=1 // pred_check_branch
      %61 = sbr.rel (0) target = $region21
    $region20: #{tpu_custom_call.1} parent=1 // pred_region
      %63 = vsyncadd [#allocation6], 0
      %s64 = sshll.u32 %s4, 4
      %s65 = int_to_ptr.hbm [resolvable:$true] %s64
      %s66 = sshll.u32 [#allocation5], 4
      %s67 = int_to_ptr.vmem [resolvable:$true] %s66
      %72 = dma.hbm_to_vmem [thread:$0]  %s65, 256, %s67, [#allocation6], 128, 128, 8
    $region21: #{tpu_custom_call.1} parent=1 // pred_fallthru
      _
    // Predicated region
    $region22: #{tpu_custom_call.1} parent=1 // pred_check
      _
    $region23: #{tpu_custom_call.1} parent=1 // pred_check_branch
      %74 = sbr.rel (0) target = $region25
    $region24: #{tpu_custom_call.1} parent=1 // pred_region
      %76 = vsyncadd [#allocation6], 0
      %s78 = sshll.u32 %s5, 4
      %s79 = int_to_ptr.hbm [resolvable:$true] %s78
      %s80 = sshll.u32 [#allocation7], 4
      %s81 = int_to_ptr.vmem [resolvable:$true] %s80
      %83 = dma.hbm_to_vmem [thread:$0]  %s79, 16, %s81, [#allocation6]
    $region25: #{tpu_custom_call.1} parent=1 // pred_fallthru
      _
    // Predicated region
    $region26: #{tpu_custom_call.1} parent=1 // pred_check
      _
    $region27: #{tpu_custom_call.1} parent=1 // pred_check_branch
      %85 = sbr.rel (0) target = $region29
    $region28: #{tpu_custom_call.1} parent=1 // pred_region
      %87 = vsyncadd [#allocation9], 0
      %s88 = sshll.u32 %s6, 4
      %s89 = int_to_ptr.hbm [resolvable:$true] %s88
      %s90 = sshll.u32 [#allocation8], 4
      %s91 = int_to_ptr.vmem [resolvable:$true] %s90
      %96 = dma.hbm_to_vmem [thread:$0]  %s89, 256, %s91, [#allocation9], 128, 128, 8
    $region29: #{tpu_custom_call.1} parent=1 // pred_fallthru
      _
    // Predicated region
    $region30: #{tpu_custom_call.1} parent=1 // pred_check
      _
    $region31: #{tpu_custom_call.1} parent=1 // pred_check_branch
      %98 = sbr.rel (0) target = $region33
    $region32: #{tpu_custom_call.1} parent=1 // pred_region
      %100 = vsyncadd [#allocation9], 0
      %s102 = sshll.u32 %s7, 4
      %s103 = int_to_ptr.hbm [resolvable:$true] %s102
      %s104 = sshll.u32 [#allocation10], 4
      %s105 = int_to_ptr.vmem [resolvable:$true] %s104
      %107 = dma.hbm_to_vmem [thread:$0]  %s103, 16, %s105, [#allocation9]
    $region33: #{tpu_custom_call.1} parent=1 // pred_fallthru
      _
    // Predicated region
    $region34: #{tpu_custom_call.1} parent=1 // pred_check
      _
    $region35: #{tpu_custom_call.1} parent=1 // pred_check_branch
      %109 = sbr.rel (0) target = $region37
    $region36: #{tpu_custom_call.1} parent=1 // pred_region
      %111 = vsyncadd [#allocation12], 0
      %s112 = sshll.u32 %s8, 4
      %s113 = int_to_ptr.hbm [resolvable:$true] %s112
      %s114 = sshll.u32 [#allocation11], 4
      %s115 = int_to_ptr.vmem [resolvable:$true] %s114
      %120 = dma.hbm_to_vmem [thread:$0]  %s113, 256, %s115, [#allocation12], 128, 128, 8
    $region37: #{tpu_custom_call.1} parent=1 // pred_fallthru
      _
    // Predicated region
    $region38: #{tpu_custom_call.1} parent=1 // pred_check
      _
    $region39: #{tpu_custom_call.1} parent=1 // pred_check_branch
      %122 = sbr.rel (0) target = $region41
    $region40: #{tpu_custom_call.1} parent=1 // pred_region
      %124 = vsyncadd [#allocation12], 0
      %s126 = sshll.u32 %s9, 4
      %s127 = int_to_ptr.hbm [resolvable:$true] %s126
      %s128 = sshll.u32 [#allocation13], 4
      %s129 = int_to_ptr.vmem [resolvable:$true] %s128
      %131 = dma.hbm_to_vmem [thread:$0]  %s127, 16, %s129, [#allocation12]
    $region41: #{tpu_custom_call.1} parent=1 // pred_fallthru
      _
    // Predicated region
    $region42: #{tpu_custom_call.1} parent=1 // pred_check
      _
    $region43: #{tpu_custom_call.1} parent=1 // pred_check_branch
      %133 = sbr.rel (0) target = $region45
    $region44: #{tpu_custom_call.1} parent=1 // pred_region
      %135 = vsyncadd [#allocation15], 0
      %s136 = sshll.u32 %s10, 4
      %s137 = int_to_ptr.hbm [resolvable:$true] %s136
      %s138 = sshll.u32 [#allocation14], 4
      %s139 = int_to_ptr.vmem [resolvable:$true] %s138
      %144 = dma.hbm_to_vmem [thread:$0]  %s137, 256, %s139, [#allocation15], 128, 128, 8
    $region45: #{tpu_custom_call.1} parent=1 // pred_fallthru
      _
    // Predicated region
    $region46: #{tpu_custom_call.1} parent=1 // pred_check
      _
    $region47: #{tpu_custom_call.1} parent=1 // pred_check_branch
      %146 = sbr.rel (0) target = $region49
    $region48: #{tpu_custom_call.1} parent=1 // pred_region
      %148 = vsyncadd [#allocation15], 0
      %s150 = sshll.u32 %s11, 4
      %s151 = int_to_ptr.hbm [resolvable:$true] %s150
      %s152 = sshll.u32 [#allocation16], 4
      %s153 = int_to_ptr.vmem [resolvable:$true] %s152
      %155 = dma.hbm_to_vmem [thread:$0]  %s151, 16, %s153, [#allocation15]
    $region49: #{tpu_custom_call.1} parent=1 // pred_fallthru
      _
    // Predicated region
    $region50: #{tpu_custom_call.1} parent=1 // pred_check
      _
    $region51: #{tpu_custom_call.1} parent=1 // pred_check_branch
      %157 = sbr.rel (0) target = $region53
    $region52: #{tpu_custom_call.1} parent=1 // pred_region
      _
    $region53: #{tpu_custom_call.1} parent=1 // pred_fallthru
      _
    // Predicated region
    $region54: #{tpu_custom_call.1} parent=1 // pred_check
      _
    $region55: #{tpu_custom_call.1} parent=1 // pred_check_branch
      %159 = sbr.rel (0) target = $region57
    $region56: #{tpu_custom_call.1} parent=1 // pred_region
      _
    $region57: #{tpu_custom_call.1} parent=1 // pred_fallthru
      _
    // Predicated region
    $region58: #{tpu_custom_call.1} parent=1 // pred_check
      _
    $region59: #{tpu_custom_call.1} parent=1 // pred_check_branch
      %161 = sbr.rel (0) target = $region61
    $region60: #{tpu_custom_call.1} parent=1 // pred_region
      %163 = vsyncadd [#allocation18], 0
      %s165 = sshll.u32 %s14, 4
      %s166 = int_to_ptr.hbm [resolvable:$true] %s165
      %s167 = sshll.u32 [#allocation17], 4
      %s168 = int_to_ptr.vmem [resolvable:$true] %s167
      %170 = dma.hbm_to_vmem [thread:$0]  %s166, 16, %s168, [#allocation18]
    $region61: #{tpu_custom_call.1} parent=1 // pred_fallthru
      _
    // Predicated region
    $region62: #{tpu_custom_call.1} parent=1 // pred_check
      _
    $region63: #{tpu_custom_call.1} parent=1 // pred_check_branch
      %172 = sbr.rel (0) target = $region65
    $region64: #{tpu_custom_call.1} parent=1 // pred_region
      _
    $region65: #{tpu_custom_call.1} parent=1 // pred_fallthru
      _
    // Predicated region
    $region66: #{tpu_custom_call.1} parent=1 // pred_check
      _
    $region67: #{tpu_custom_call.1} parent=1 // pred_check_branch
      %174 = sbr.rel (0) target = $region69
    $region68: #{tpu_custom_call.1} parent=1 // pred_region
      %176 = vsyncadd [#allocation18], 0
      %s178 = sshll.u32 %s16, 4
      %s179 = int_to_ptr.hbm [resolvable:$true] %s178
      %s180 = sshll.u32 [#allocation19], 4
      %s181 = int_to_ptr.vmem [resolvable:$true] %s180
      %183 = dma.hbm_to_vmem [thread:$0]  %s179, 16, %s181, [#allocation18]
    $region69: #{tpu_custom_call.1} parent=1 // pred_fallthru
      _
    // Predicated region
    $region70: #{tpu_custom_call.1} parent=1 // pred_check
      _
    $region71: #{tpu_custom_call.1} parent=1 // pred_check_branch
      %185 = sbr.rel (0) target = $region73
    $region72: #{tpu_custom_call.1} parent=1 // pred_region
      %187 = vsyncadd [#allocation21], 0
      %s188 = sshll.u32 %s17, 4
      %s189 = int_to_ptr.hbm [resolvable:$true] %s188
      %s190 = sshll.u32 [#allocation20], 4
      %s191 = int_to_ptr.vmem [resolvable:$true] %s190
      %196 = dma.hbm_to_vmem [thread:$0]  %s189, 256, %s191, [#allocation21], 128, 128, 8
    $region73: #{tpu_custom_call.1} parent=1 // pred_fallthru
      _
    // Predicated region
    $region74: #{tpu_custom_call.1} parent=1 // pred_check
      _
    $region75: #{tpu_custom_call.1} parent=1 // pred_check_branch
      %198 = sbr.rel (0) target = $region77
    $region76: #{tpu_custom_call.1} parent=1 // pred_region
      %200 = vsyncadd [#allocation21], 0
      %s202 = sshll.u32 %s18, 4
      %s203 = int_to_ptr.hbm [resolvable:$true] %s202
      %s204 = sshll.u32 [#allocation22], 4
      %s205 = int_to_ptr.vmem [resolvable:$true] %s204
      %207 = dma.hbm_to_vmem [thread:$0]  %s203, 16, %s205, [#allocation21]
    $region77: #{tpu_custom_call.1} parent=1 // pred_fallthru
      _
    // Predicated region
    $region78: #{tpu_custom_call.1} parent=1 // pred_check
      _
    $region79: #{tpu_custom_call.1} parent=1 // pred_check_branch
      %209 = sbr.rel (0) target = $region81
    $region80: #{tpu_custom_call.1} parent=1 // pred_region
      _
    $region81: #{tpu_custom_call.1} parent=1 // pred_fallthru
      _
    // Predicated region
    $region82: #{tpu_custom_call.1} parent=1 // pred_check
      _
    $region83: #{tpu_custom_call.1} parent=1 // pred_check_branch
      %211 = sbr.rel (0) target = $region85
    $region84: #{tpu_custom_call.1} parent=1 // pred_region
      %213 = vsyncadd [#allocation24], 0
      %s215 = sshll.u32 %s20, 4
      %s216 = int_to_ptr.hbm [resolvable:$true] %s215
      %s217 = sshll.u32 [#allocation23], 4
      %s218 = int_to_ptr.vmem [resolvable:$true] %s217
      %220 = dma.hbm_to_vmem [thread:$0]  %s216, 16, %s218, [#allocation24]
    $region85: #{tpu_custom_call.1} parent=1 // pred_fallthru
      _
    // Predicated region
    $region86: #{tpu_custom_call.1} parent=1 // pred_check
      _
    $region87: #{tpu_custom_call.1} parent=1 // pred_check_branch
      %222 = sbr.rel (0) target = $region89
    $region88: #{tpu_custom_call.1} parent=1 // pred_region
      _
    $region89: #{tpu_custom_call.1} parent=1 // pred_fallthru
      _
    // Predicated region
    $region90: #{tpu_custom_call.1} parent=1 // pred_check
      _
    $region91: #{tpu_custom_call.1} parent=1 // pred_check_branch
      %224 = sbr.rel (0) target = $region93
    $region92: #{tpu_custom_call.1} parent=1 // pred_region
      _
    $region93: #{tpu_custom_call.1} parent=1 // pred_fallthru
      _
    // Predicated region
    $region94: #{tpu_custom_call.1} parent=1 // pred_check
      _
    $region95: #{tpu_custom_call.1} parent=1 // pred_check_branch
      %226 = sbr.rel (0) target = $region97
    $region96: #{tpu_custom_call.1} parent=1 // pred_region
      _
    $region97: #{tpu_custom_call.1} parent=1 // pred_fallthru
      _
    // Predicated region
    $region98: #{tpu_custom_call.1} parent=1 // pred_check
      _
    $region99: #{tpu_custom_call.1} parent=1 // pred_check_branch
      %228 = sbr.rel (0) target = $region101
    $region100: #{tpu_custom_call.1} parent=1 // pred_region
      _
    $region101: #{tpu_custom_call.1} parent=1 // pred_fallthru
      _
    // Predicated region
    $region102: #{tpu_custom_call.1} parent=1 // pred_check
      _
    $region103: #{tpu_custom_call.1} parent=1 // pred_check_branch
      %230 = sbr.rel (0) target = $region105
    $region104: #{tpu_custom_call.1} parent=1 // pred_region
      %232 = vsyncadd [#allocation24], 0
      %s233 = sshll.u32 %s25, 4
      %s234 = int_to_ptr.hbm [resolvable:$true] %s233
      %s235 = sshll.u32 [#allocation25], 4
      %s236 = int_to_ptr.vmem [resolvable:$true] %s235
      %241 = dma.hbm_to_vmem [thread:$0]  %s234, 512, %s236, [#allocation24], 128, 128, 8
    $region105: #{tpu_custom_call.1} parent=1 // pred_fallthru
      _
    // Predicated region
    $region106: #{tpu_custom_call.1} parent=1 // pred_check
      _
    $region107: #{tpu_custom_call.1} parent=1 // pred_check_branch
      %243 = sbr.rel (0) target = $region109
    $region108: #{tpu_custom_call.1} parent=1 // pred_region
      _
    $region109: #{tpu_custom_call.1} parent=1 // pred_fallthru
      _
    // Predicated region
    $region110: #{tpu_custom_call.1} parent=1 // pred_check
      _
    $region111: #{tpu_custom_call.1} parent=1 // pred_check_branch
      %245 = sbr.rel (0) target = $region113
    $region112: #{tpu_custom_call.1} parent=1 // pred_region
      %247 = dma.done [#allocation3], 256
    $region113: #{tpu_custom_call.1} parent=1 // pred_fallthru
      _
    // Predicated region
    $region114: #{tpu_custom_call.1} parent=1 // pred_check
      _
    $region115: #{tpu_custom_call.1} parent=1 // pred_check_branch
      %249 = sbr.rel (0) target = $region117
    $region116: #{tpu_custom_call.1} parent=1 // pred_region
      %251 = dma.done [#allocation6], 256
    $region117: #{tpu_custom_call.1} parent=1 // pred_fallthru
      _
    // Predicated region
    $region118: #{tpu_custom_call.1} parent=1 // pred_check
      _
    $region119: #{tpu_custom_call.1} parent=1 // pred_check_branch
      %253 = sbr.rel (0) target = $region121
    $region120: #{tpu_custom_call.1} parent=1 // pred_region
      %255 = dma.done [#allocation6], 16
    $region121: #{tpu_custom_call.1} parent=1 // pred_fallthru
      _
    // Predicated region
    $region122: #{tpu_custom_call.1} parent=1 // pred_check
      _
    $region123: #{tpu_custom_call.1} parent=1 // pred_check_branch
      %257 = sbr.rel (0) target = $region125
    $region124: #{tpu_custom_call.1} parent=1 // pred_region
      %259 = dma.done [#allocation9], 256
    $region125: #{tpu_custom_call.1} parent=1 // pred_fallthru
      _
    // Predicated region
    $region126: #{tpu_custom_call.1} parent=1 // pred_check
      _
    $region127: #{tpu_custom_call.1} parent=1 // pred_check_branch
      %261 = sbr.rel (0) target = $region129
    $region128: #{tpu_custom_call.1} parent=1 // pred_region
      %263 = dma.done [#allocation9], 16
    $region129: #{tpu_custom_call.1} parent=1 // pred_fallthru
      _
    // Predicated region
    $region130: #{tpu_custom_call.1} parent=1 // pred_check
      _
    $region131: #{tpu_custom_call.1} parent=1 // pred_check_branch
      %265 = sbr.rel (0) target = $region133
    $region132: #{tpu_custom_call.1} parent=1 // pred_region
      %267 = dma.done [#allocation12], 256
    $region133: #{tpu_custom_call.1} parent=1 // pred_fallthru
      _
    // Predicated region
    $region134: #{tpu_custom_call.1} parent=1 // pred_check
      _
    $region135: #{tpu_custom_call.1} parent=1 // pred_check_branch
      %269 = sbr.rel (0) target = $region137
    $region136: #{tpu_custom_call.1} parent=1 // pred_region
      %271 = dma.done [#allocation12], 16
    $region137: #{tpu_custom_call.1} parent=1 // pred_fallthru
      _
    // Predicated region
    $region138: #{tpu_custom_call.1} parent=1 // pred_check
      _
    $region139: #{tpu_custom_call.1} parent=1 // pred_check_branch
      %273 = sbr.rel (0) target = $region141
    $region140: #{tpu_custom_call.1} parent=1 // pred_region
      %275 = dma.done [#allocation15], 256
    $region141: #{tpu_custom_call.1} parent=1 // pred_fallthru
      _
    // Predicated region
    $region142: #{tpu_custom_call.1} parent=1 // pred_check
      _
    $region143: #{tpu_custom_call.1} parent=1 // pred_check_branch
      %277 = sbr.rel (0) target = $region145
    $region144: #{tpu_custom_call.1} parent=1 // pred_region
      %279 = dma.done [#allocation15], 16
    $region145: #{tpu_custom_call.1} parent=1 // pred_fallthru
      _
    // Predicated region
    $region146: #{tpu_custom_call.1} parent=1 // pred_check
      _
    $region147: #{tpu_custom_call.1} parent=1 // pred_check_branch
      %281 = sbr.rel (0) target = $region149
    $region148: #{tpu_custom_call.1} parent=1 // pred_region
      %283 = dma.done [#allocation18], 16
    $region149: #{tpu_custom_call.1} parent=1 // pred_fallthru
      _
    // Predicated region
    $region150: #{tpu_custom_call.1} parent=1 // pred_check
      _
    $region151: #{tpu_custom_call.1} parent=1 // pred_check_branch
      %285 = sbr.rel (0) target = $region153
    $region152: #{tpu_custom_call.1} parent=1 // pred_region
      %287 = dma.done [#allocation18], 16
    $region153: #{tpu_custom_call.1} parent=1 // pred_fallthru
      _
    // Predicated region
    $region154: #{tpu_custom_call.1} parent=1 // pred_check
      _
    $region155: #{tpu_custom_call.1} parent=1 // pred_check_branch
      %289 = sbr.rel (0) target = $region157
    $region156: #{tpu_custom_call.1} parent=1 // pred_region
      %291 = dma.done [#allocation21], 256
    $region157: #{tpu_custom_call.1} parent=1 // pred_fallthru
      _
    // Predicated region
    $region158: #{tpu_custom_call.1} parent=1 // pred_check
      _
    $region159: #{tpu_custom_call.1} parent=1 // pred_check_branch
      %293 = sbr.rel (0) target = $region161
    $region160: #{tpu_custom_call.1} parent=1 // pred_region
      %295 = dma.done [#allocation21], 16
    $region161: #{tpu_custom_call.1} parent=1 // pred_fallthru
      _
    // Predicated region
    $region162: #{tpu_custom_call.1} parent=1 // pred_check
      _
    $region163: #{tpu_custom_call.1} parent=1 // pred_check_branch
      %297 = sbr.rel (0) target = $region165
    $region164: #{tpu_custom_call.1} parent=1 // pred_region
      %299 = dma.done [#allocation24], 16
    $region165: #{tpu_custom_call.1} parent=1 // pred_fallthru
      _
    // Predicated region
    $region166: #{tpu_custom_call.1} parent=1 // pred_check
      _
    $region167: #{tpu_custom_call.1} parent=1 // pred_check_branch
      %301 = sbr.rel (0) target = $region169
    $region168: #{tpu_custom_call.1} parent=1 // pred_region
      %303 = dma.done [#allocation24], 512
    $region169: #{tpu_custom_call.1} parent=1 // pred_fallthru
      _
    %v304 = vld [vmem:[#allocation2] sm:$0xff]
    %v305 = vld [vmem:[#allocation2 + $0x8] sm:$0xff]
    %v306 = vld [vmem:[%s1] sm:$0xff]
    %v307 = vld [vmem:[%s1 + $0x8] sm:$0xff]
    %v308 = vld [vmem:[%s1 + $0x10] sm:$0xff]
    %v309 = vld [vmem:[%s1 + $0x18] sm:$0xff]
    %v310 = vld [vmem:[%s2] sm:$0xff]
    %v311 = vld [vmem:[%s2 + $0x8] sm:$0xff]
    %v312 = vld [vmem:[%s2 + $0x10] sm:$0xff]
    %v313 = vld [vmem:[%s2 + $0x18] sm:$0xff]
    %v314 = vld [vmem:[%s3] sm:$0x1]
    %v316 = vperm.slane %v314, 0
    %vm318 = vcmask 261120
    %v320 = vsel %vm318, %v304, 0
    %v323 = vsel %vm318, %v305, 0
    %325 = vmatpush.msra.mxu0 0.0
    %326 = vmatpush.msra.mxu0 0.0
    %327 = vmatpush.msra.mxu0 0.0
    %328 = vmatpush.msra.mxu0 0.0
    %329 = vmatpush.msra.mxu0 0.0
    %330 = vmatpush.msra.mxu0 0.0
    %331 = vmatpush.msra.mxu0 0.0
    %332 = vmatpush.msra.mxu0 0.0
    %333 = vmatpush.msra.mxu0 0.0
    %334 = vmatpush.msra.mxu0 0.0
    %335 = vmatpush.msra.mxu0 0.0
    %336 = vmatpush.msra.mxu0 0.0
    %337 = vmatpush.msra.mxu0 %v313
    %338 = vmatpush.msra.mxu0 %v312
    %339 = vmatpush.msra.mxu0 %v311
    %340 = vmatpush.msra.mxu0 %v310
    %341 = vmatmul.f32.gmra.mxu0 %v320
    %v342 = vpop.f32.mrf.mxu0
    %v343 = vadd.f32 %v316, %v342
    %344 = vmatmul.f32.gmra.mxu0 %v323
    %v345 = vpop.f32.mrf.mxu0
    %v346 = vadd.f32 %v316, %v345
    %347 = vdwg.mxu0
    %v348 = vld [vmem:[#allocation5] sm:$0xff]
    %v349 = vld [vmem:[#allocation5 + $0x8] sm:$0xff]
    %v350 = vld [vmem:[#allocation7] sm:$0x1]
    %v352 = vperm.slane %v350, 0
    %vm354 = vcmask 130048
    %v356 = vsel %vm354, %v343, 0
    %v359 = vsel %vm354, %v346, 0
    %361 = vmatpush.msra.mxu0 0.0
    %362 = vmatpush.msra.mxu0 0.0
    %363 = vmatpush.msra.mxu0 0.0
    %364 = vmatpush.msra.mxu0 0.0
    %365 = vmatpush.msra.mxu0 0.0
    %366 = vmatpush.msra.mxu0 0.0
    %367 = vmatpush.msra.mxu0 0.0
    %368 = vmatpush.msra.mxu0 0.0
    %369 = vmatpush.msra.mxu0 0.0
    %370 = vmatpush.msra.mxu0 0.0
    %371 = vmatpush.msra.mxu0 0.0
    %372 = vmatpush.msra.mxu0 0.0
    %373 = vmatpush.msra.mxu0 0.0
    %374 = vmatpush.msra.mxu0 0.0
    %375 = vmatpush.msra.mxu0 %v349
    %376 = vmatpush.msra.mxu0 %v348
    %377 = vmatmul.f32.gmra.mxu0 %v356
    %v378 = vpop.f32.mrf.mxu0
    %v379 = vadd.f32 %v352, %v378
    %380 = vmatmul.f32.gmra.mxu0 %v359
    %v381 = vpop.f32.mrf.mxu0
    %v382 = vadd.f32 %v352, %v381
    %383 = vdwg.mxu0
    %v384 = vld [vmem:[#allocation8] sm:$0xff]
    %v385 = vld [vmem:[#allocation8 + $0x8] sm:$0xff]
    %v386 = vld [vmem:[#allocation10] sm:$0x1]
    %v388 = vperm.slane %v386, 0
    %v391 = vsel %vm354, %v306, 0
    %v394 = vsel %vm354, %v307, 0
    %v397 = vsel %vm354, %v308, 0
    %v400 = vsel %vm354, %v309, 0
    %402 = vmatpush.msra.mxu0 0.0
    %403 = vmatpush.msra.mxu0 0.0
    %404 = vmatpush.msra.mxu0 0.0
    %405 = vmatpush.msra.mxu0 0.0
    %406 = vmatpush.msra.mxu0 0.0
    %407 = vmatpush.msra.mxu0 0.0
    %408 = vmatpush.msra.mxu0 0.0
    %409 = vmatpush.msra.mxu0 0.0
    %410 = vmatpush.msra.mxu0 0.0
    %411 = vmatpush.msra.mxu0 0.0
    %412 = vmatpush.msra.mxu0 0.0
    %413 = vmatpush.msra.mxu0 0.0
    %414 = vmatpush.msra.mxu0 0.0
    %415 = vmatpush.msra.mxu0 0.0
    %416 = vmatpush.msra.mxu0 %v385
    %417 = vmatpush.msra.mxu0 %v384
    %418 = vmatmul.f32.gmra.mxu0 %v391
    %v419 = vpop.f32.mrf.mxu0
    %v420 = vadd.f32 %v388, %v419
    %421 = vmatmul.f32.gmra.mxu0 %v394
    %v422 = vpop.f32.mrf.mxu0
    %v423 = vadd.f32 %v388, %v422
    %424 = vmatmul.f32.gmra.mxu0 %v397
    %v425 = vpop.f32.mrf.mxu0
    %v426 = vadd.f32 %v388, %v425
    %427 = vmatmul.f32.gmra.mxu0 %v400
    %v428 = vpop.f32.mrf.mxu0
    %v429 = vadd.f32 %v388, %v428
    %430 = vdwg.mxu0
    %v431 = vld [vmem:[#allocation11] sm:$0xff]
    %v432 = vld [vmem:[#allocation11 + $0x8] sm:$0xff]
    %v433 = vld [vmem:[#allocation13] sm:$0x1]
    %v435 = vperm.slane %v433, 0
    %437 = vmatpush.msra.mxu0 0.0
    %438 = vmatpush.msra.mxu0 0.0
    %439 = vmatpush.msra.mxu0 0.0
    %440 = vmatpush.msra.mxu0 0.0
    %441 = vmatpush.msra.mxu0 0.0
    %442 = vmatpush.msra.mxu0 0.0
    %443 = vmatpush.msra.mxu0 0.0
    %444 = vmatpush.msra.mxu0 0.0
    %445 = vmatpush.msra.mxu0 0.0
    %446 = vmatpush.msra.mxu0 0.0
    %447 = vmatpush.msra.mxu0 0.0
    %448 = vmatpush.msra.mxu0 0.0
    %449 = vmatpush.msra.mxu0 0.0
    %450 = vmatpush.msra.mxu0 0.0
    %451 = vmatpush.msra.mxu0 %v432
    %452 = vmatpush.msra.mxu0 %v431
    %453 = vmatmul.f32.gmra.mxu0 %v391
    %v454 = vpop.f32.mrf.mxu0
    %v455 = vadd.f32 %v435, %v454
    %456 = vmatmul.f32.gmra.mxu0 %v394
    %v457 = vpop.f32.mrf.mxu0
    %v458 = vadd.f32 %v435, %v457
    %459 = vmatmul.f32.gmra.mxu0 %v397
    %v460 = vpop.f32.mrf.mxu0
    %v461 = vadd.f32 %v435, %v460
    %462 = vmatmul.f32.gmra.mxu0 %v400
    %v463 = vpop.f32.mrf.mxu0
    %v464 = vadd.f32 %v435, %v463
    %465 = vdwg.mxu0
    %468 = vrot.lane.b32.xlu0 %v379, 124
    %v469 = vpop.permute.xlu0 %468
    %470 = vrot.lane.b32.xlu0 %v382, 124
    %v471 = vpop.permute.xlu0 %470
    %474 = vrot.lane.b32.xlu0 %v379, 120
    %v475 = vpop.permute.xlu0 %474
    %476 = vrot.lane.b32.xlu0 %v382, 120
    %v477 = vpop.permute.xlu0 %476
    %480 = vrot.lane.b32.xlu0 %v379, 116
    %v481 = vpop.permute.xlu0 %480
    %482 = vrot.lane.b32.xlu0 %v382, 116
    %v483 = vpop.permute.xlu0 %482
    %v486 = vrot.slane %v475, 4
    %vm487 = vcmask 1047556
    %v488 = vsel %vm487, %v486, %v379
    %v489 = vrot.slane %v379, 4
    %v490 = vsel %vm487, %v475, %v489
    %v492 = vunpack.c.l.s4 1983009808
    %v493 = vunpack.c.0.s8 %v492
    %v494 = vperm.slane %v488, %v493
    %v496 = vunpack.c.l.s4 1983009808
    %v497 = vunpack.c.0.s8 %v496
    %v498 = vperm.slane %v490, %v497
    %v499 = vrot.slane %v481, 4
    %v500 = vsel %vm487, %v499, %v469
    %v501 = vrot.slane %v469, 4
    %v502 = vsel %vm487, %v481, %v501
    %v504 = vunpack.c.l.s4 1983009808
    %v505 = vunpack.c.0.s8 %v504
    %v506 = vperm.slane %v500, %v505
    %v508 = vunpack.c.l.s4 1983009808
    %v509 = vunpack.c.0.s8 %v508
    %v510 = vperm.slane %v502, %v509
    %v511 = vrot.slane %v506, 4
    %v512 = vsel %vm487, %v511, %v494
    %v513 = vrot.slane %v494, 4
    %v514 = vsel %vm487, %v506, %v513
    %v516 = vunpack.c.l.s4 1934713408
    %v517 = vunpack.c.0.s8 %v516
    %v518 = vperm.slane %v512, %v517
    %v520 = vunpack.c.l.s4 1934713408
    %v521 = vunpack.c.0.s8 %v520
    %v522 = vperm.slane %v514, %v521
    %v523 = vrot.slane %v510, 4
    %v524 = vsel %vm487, %v523, %v498
    %v525 = vrot.slane %v498, 4
    %v526 = vsel %vm487, %v510, %v525
    %v528 = vunpack.c.l.s4 1934713408
    %v529 = vunpack.c.0.s8 %v528
    %v530 = vperm.slane %v524, %v529
    %v532 = vunpack.c.l.s4 1934713408
    %v533 = vunpack.c.0.s8 %v532
    %v534 = vperm.slane %v526, %v533
    %v535 = vrot.slane %v518, 4
    %v536 = vsel %vm487, 0.0, %v535
    %v537 = vrot.slane %v522, 4
    %v538 = vsel %vm487, 0.0, %v537
    %v539 = vrot.slane %v530, 4
    %v540 = vsel %vm487, 0.0, %v539
    %v541 = vrot.slane %v534, 4
    %v542 = vsel %vm487, 0.0, %v541
    %v543 = vrot.slane %v477, 4
    %v544 = vsel %vm487, %v543, %v382
    %v545 = vrot.slane %v382, 4
    %v546 = vsel %vm487, %v477, %v545
    %v548 = vunpack.c.l.s4 1983009808
    %v549 = vunpack.c.0.s8 %v548
    %v550 = vperm.slane %v544, %v549
    %v552 = vunpack.c.l.s4 1983009808
    %v553 = vunpack.c.0.s8 %v552
    %v554 = vperm.slane %v546, %v553
    %v555 = vrot.slane %v483, 4
    %v556 = vsel %vm487, %v555, %v471
    %v557 = vrot.slane %v471, 4
    %v558 = vsel %vm487, %v483, %v557
    %v560 = vunpack.c.l.s4 1983009808
    %v561 = vunpack.c.0.s8 %v560
    %v562 = vperm.slane %v556, %v561
    %v564 = vunpack.c.l.s4 1983009808
    %v565 = vunpack.c.0.s8 %v564
    %v566 = vperm.slane %v558, %v565
    %v567 = vrot.slane %v562, 4
    %v568 = vsel %vm487, %v567, %v550
    %v569 = vrot.slane %v550, 4
    %v570 = vsel %vm487, %v562, %v569
    %v572 = vunpack.c.l.s4 1934713408
    %v573 = vunpack.c.0.s8 %v572
    %v574 = vperm.slane %v568, %v573
    %v576 = vunpack.c.l.s4 1934713408
    %v577 = vunpack.c.0.s8 %v576
    %v578 = vperm.slane %v570, %v577
    %v579 = vrot.slane %v566, 4
    %v580 = vsel %vm487, %v579, %v554
    %v581 = vrot.slane %v554, 4
    %v582 = vsel %vm487, %v566, %v581
    %v584 = vunpack.c.l.s4 1934713408
    %v585 = vunpack.c.0.s8 %v584
    %v586 = vperm.slane %v580, %v585
    %v588 = vunpack.c.l.s4 1934713408
    %v589 = vunpack.c.0.s8 %v588
    %v590 = vperm.slane %v582, %v589
    %v591 = vrot.slane %v574, 4
    %v592 = vsel %vm487, 0.0, %v591
    %v593 = vrot.slane %v578, 4
    %v594 = vsel %vm487, 0.0, %v593
    %v595 = vrot.slane %v586, 4
    %v596 = vsel %vm487, 0.0, %v595
    %v597 = vrot.slane %v590, 4
    %v598 = vsel %vm487, 0.0, %v597
    %v599 = vsel %vm487, %v537, %v518
    %v601 = vunpack.c.l.s4 1983009808
    %v602 = vunpack.c.0.s8 %v601
    %v603 = vperm.slane %v599, %v602
    %v604 = vrot.slane %v538, 4
    %v605 = vsel %vm487, %v604, %v536
    %v607 = vunpack.c.l.s4 1983009808
    %v608 = vunpack.c.0.s8 %v607
    %v609 = vperm.slane %v605, %v608
    %v610 = vsel %vm487, %v541, %v530
    %v612 = vunpack.c.l.s4 1983009808
    %v613 = vunpack.c.0.s8 %v612
    %v614 = vperm.slane %v610, %v613
    %v615 = vrot.slane %v542, 4
    %v616 = vsel %vm487, %v615, %v540
    %v618 = vunpack.c.l.s4 1983009808
    %v619 = vunpack.c.0.s8 %v618
    %v620 = vperm.slane %v616, %v619
    %v621 = vrot.slane %v609, 4
    %v622 = vsel %vm487, %v621, %v603
    %v623 = vrot.slane %v603, 4
    %v624 = vsel %vm487, %v609, %v623
    %v626 = vunpack.c.l.s4 1934713408
    %v627 = vunpack.c.0.s8 %v626
    %v628 = vperm.slane %v622, %v627
    %v630 = vunpack.c.l.s4 1934713408
    %v631 = vunpack.c.0.s8 %v630
    %v632 = vperm.slane %v624, %v631
    %v633 = vrot.slane %v620, 4
    %v634 = vsel %vm487, %v633, %v614
    %v635 = vrot.slane %v614, 4
    %v636 = vsel %vm487, %v620, %v635
    %v638 = vunpack.c.l.s4 1934713408
    %v639 = vunpack.c.0.s8 %v638
    %v640 = vperm.slane %v634, %v639
    %v642 = vunpack.c.l.s4 1934713408
    %v643 = vunpack.c.0.s8 %v642
    %v644 = vperm.slane %v636, %v643
    %v645 = vrot.slane %v640, 4
    %v646 = vsel %vm487, %v645, %v628
    %v647 = vrot.slane %v628, 4
    %v648 = vsel %vm487, %v640, %v647
    %v649 = vrot.slane %v644, 4
    %v650 = vsel %vm487, %v649, %v632
    %v651 = vrot.slane %v632, 4
    %v652 = vsel %vm487, %v644, %v651
    %v653 = vsel %vm487, %v593, %v574
    %v655 = vunpack.c.l.s4 1983009808
    %v656 = vunpack.c.0.s8 %v655
    %v657 = vperm.slane %v653, %v656
    %v658 = vrot.slane %v594, 4
    %v659 = vsel %vm487, %v658, %v592
    %v661 = vunpack.c.l.s4 1983009808
    %v662 = vunpack.c.0.s8 %v661
    %v663 = vperm.slane %v659, %v662
    %v664 = vsel %vm487, %v597, %v586
    %v666 = vunpack.c.l.s4 1983009808
    %v667 = vunpack.c.0.s8 %v666
    %v668 = vperm.slane %v664, %v667
    %v669 = vrot.slane %v598, 4
    %v670 = vsel %vm487, %v669, %v596
    %v672 = vunpack.c.l.s4 1983009808
    %v673 = vunpack.c.0.s8 %v672
    %v674 = vperm.slane %v670, %v673
    %v675 = vrot.slane %v663, 4
    %v676 = vsel %vm487, %v675, %v657
    %v677 = vrot.slane %v657, 4
    %v678 = vsel %vm487, %v663, %v677
    %v680 = vunpack.c.l.s4 1934713408
    %v681 = vunpack.c.0.s8 %v680
    %v682 = vperm.slane %v676, %v681
    %v684 = vunpack.c.l.s4 1934713408
    %v685 = vunpack.c.0.s8 %v684
    %v686 = vperm.slane %v678, %v685
    %v687 = vrot.slane %v674, 4
    %v688 = vsel %vm487, %v687, %v668
    %v689 = vrot.slane %v668, 4
    %v690 = vsel %vm487, %v674, %v689
    %v692 = vunpack.c.l.s4 1934713408
    %v693 = vunpack.c.0.s8 %v692
    %v694 = vperm.slane %v688, %v693
    %v696 = vunpack.c.l.s4 1934713408
    %v697 = vunpack.c.0.s8 %v696
    %v698 = vperm.slane %v690, %v697
    %v699 = vrot.slane %v694, 4
    %v700 = vsel %vm487, %v699, %v682
    %v701 = vrot.slane %v682, 4
    %v702 = vsel %vm487, %v694, %v701
    %v703 = vrot.slane %v698, 4
    %v704 = vsel %vm487, %v703, %v686
    %v705 = vrot.slane %v686, 4
    %v706 = vsel %vm487, %v698, %v705
    %711 = vrot.lane.b32.xlu0 %v420, 124
    %v712 = vpop.permute.xlu0 %711
    %713 = vrot.lane.b32.xlu0 %v423, 124
    %v714 = vpop.permute.xlu0 %713
    %715 = vrot.lane.b32.xlu0 %v426, 124
    %v716 = vpop.permute.xlu0 %715
    %717 = vrot.lane.b32.xlu0 %v429, 124
    %v718 = vpop.permute.xlu0 %717
    %723 = vrot.lane.b32.xlu0 %v420, 120
    %v724 = vpop.permute.xlu0 %723
    %725 = vrot.lane.b32.xlu0 %v423, 120
    %v726 = vpop.permute.xlu0 %725
    %727 = vrot.lane.b32.xlu0 %v426, 120
    %v728 = vpop.permute.xlu0 %727
    %729 = vrot.lane.b32.xlu0 %v429, 120
    %v730 = vpop.permute.xlu0 %729
    %735 = vrot.lane.b32.xlu0 %v420, 116
    %v736 = vpop.permute.xlu0 %735
    %737 = vrot.lane.b32.xlu0 %v423, 116
    %v738 = vpop.permute.xlu0 %737
    %739 = vrot.lane.b32.xlu0 %v426, 116
    %v740 = vpop.permute.xlu0 %739
    %741 = vrot.lane.b32.xlu0 %v429, 116
    %v742 = vpop.permute.xlu0 %741
    %v747 = vrot.slane %v724, 4
    %v748 = vsel %vm487, %v747, %v420
    %v749 = vrot.slane %v420, 4
    %v750 = vsel %vm487, %v724, %v749
    %v752 = vunpack.c.l.s4 1983009808
    %v753 = vunpack.c.0.s8 %v752
    %v754 = vperm.slane %v748, %v753
    %v756 = vunpack.c.l.s4 1983009808
    %v757 = vunpack.c.0.s8 %v756
    %v758 = vperm.slane %v750, %v757
    %v759 = vrot.slane %v736, 4
    %v760 = vsel %vm487, %v759, %v712
    %v761 = vrot.slane %v712, 4
    %v762 = vsel %vm487, %v736, %v761
    %v764 = vunpack.c.l.s4 1983009808
    %v765 = vunpack.c.0.s8 %v764
    %v766 = vperm.slane %v760, %v765
    %v768 = vunpack.c.l.s4 1983009808
    %v769 = vunpack.c.0.s8 %v768
    %v770 = vperm.slane %v762, %v769
    %v771 = vrot.slane %v766, 4
    %v772 = vsel %vm487, %v771, %v754
    %v773 = vrot.slane %v754, 4
    %v774 = vsel %vm487, %v766, %v773
    %v776 = vunpack.c.l.s4 1934713408
    %v777 = vunpack.c.0.s8 %v776
    %v778 = vperm.slane %v772, %v777
    %v780 = vunpack.c.l.s4 1934713408
    %v781 = vunpack.c.0.s8 %v780
    %v782 = vperm.slane %v774, %v781
    %v783 = vrot.slane %v770, 4
    %v784 = vsel %vm487, %v783, %v758
    %v785 = vrot.slane %v758, 4
    %v786 = vsel %vm487, %v770, %v785
    %v788 = vunpack.c.l.s4 1934713408
    %v789 = vunpack.c.0.s8 %v788
    %v790 = vperm.slane %v784, %v789
    %v792 = vunpack.c.l.s4 1934713408
    %v793 = vunpack.c.0.s8 %v792
    %v794 = vperm.slane %v786, %v793
    %v795 = vrot.slane %v778, 4
    %v796 = vsel %vm487, 0.0, %v795
    %v797 = vrot.slane %v782, 4
    %v798 = vsel %vm487, 0.0, %v797
    %v799 = vrot.slane %v790, 4
    %v800 = vsel %vm487, 0.0, %v799
    %v801 = vrot.slane %v794, 4
    %v802 = vsel %vm487, 0.0, %v801
    %v803 = vrot.slane %v726, 4
    %v804 = vsel %vm487, %v803, %v423
    %v805 = vrot.slane %v423, 4
    %v806 = vsel %vm487, %v726, %v805
    %v808 = vunpack.c.l.s4 1983009808
    %v809 = vunpack.c.0.s8 %v808
    %v810 = vperm.slane %v804, %v809
    %v812 = vunpack.c.l.s4 1983009808
    %v813 = vunpack.c.0.s8 %v812
    %v814 = vperm.slane %v806, %v813
    %v815 = vrot.slane %v738, 4
    %v816 = vsel %vm487, %v815, %v714
    %v817 = vrot.slane %v714, 4
    %v818 = vsel %vm487, %v738, %v817
    %v820 = vunpack.c.l.s4 1983009808
    %v821 = vunpack.c.0.s8 %v820
    %v822 = vperm.slane %v816, %v821
    %v824 = vunpack.c.l.s4 1983009808
    %v825 = vunpack.c.0.s8 %v824
    %v826 = vperm.slane %v818, %v825
    %v827 = vrot.slane %v822, 4
    %v828 = vsel %vm487, %v827, %v810
    %v829 = vrot.slane %v810, 4
    %v830 = vsel %vm487, %v822, %v829
    %v832 = vunpack.c.l.s4 1934713408
    %v833 = vunpack.c.0.s8 %v832
    %v834 = vperm.slane %v828, %v833
    %v836 = vunpack.c.l.s4 1934713408
    %v837 = vunpack.c.0.s8 %v836
    %v838 = vperm.slane %v830, %v837
    %v839 = vrot.slane %v826, 4
    %v840 = vsel %vm487, %v839, %v814
    %v841 = vrot.slane %v814, 4
    %v842 = vsel %vm487, %v826, %v841
    %v844 = vunpack.c.l.s4 1934713408
    %v845 = vunpack.c.0.s8 %v844
    %v846 = vperm.slane %v840, %v845
    %v848 = vunpack.c.l.s4 1934713408
    %v849 = vunpack.c.0.s8 %v848
    %v850 = vperm.slane %v842, %v849
    %v851 = vrot.slane %v834, 4
    %v852 = vsel %vm487, 0.0, %v851
    %v853 = vrot.slane %v838, 4
    %v854 = vsel %vm487, 0.0, %v853
    %v855 = vrot.slane %v846, 4
    %v856 = vsel %vm487, 0.0, %v855
    %v857 = vrot.slane %v850, 4
    %v858 = vsel %vm487, 0.0, %v857
    %v859 = vrot.slane %v728, 4
    %v860 = vsel %vm487, %v859, %v426
    %v861 = vrot.slane %v426, 4
    %v862 = vsel %vm487, %v728, %v861
    %v864 = vunpack.c.l.s4 1983009808
    %v865 = vunpack.c.0.s8 %v864
    %v866 = vperm.slane %v860, %v865
    %v868 = vunpack.c.l.s4 1983009808
    %v869 = vunpack.c.0.s8 %v868
    %v870 = vperm.slane %v862, %v869
    %v871 = vrot.slane %v740, 4
    %v872 = vsel %vm487, %v871, %v716
    %v873 = vrot.slane %v716, 4
    %v874 = vsel %vm487, %v740, %v873
    %v876 = vunpack.c.l.s4 1983009808
    %v877 = vunpack.c.0.s8 %v876
    %v878 = vperm.slane %v872, %v877
    %v880 = vunpack.c.l.s4 1983009808
    %v881 = vunpack.c.0.s8 %v880
    %v882 = vperm.slane %v874, %v881
    %v883 = vrot.slane %v878, 4
    %v884 = vsel %vm487, %v883, %v866
    %v885 = vrot.slane %v866, 4
    %v886 = vsel %vm487, %v878, %v885
    %v888 = vunpack.c.l.s4 1934713408
    %v889 = vunpack.c.0.s8 %v888
    %v890 = vperm.slane %v884, %v889
    %v892 = vunpack.c.l.s4 1934713408
    %v893 = vunpack.c.0.s8 %v892
    %v894 = vperm.slane %v886, %v893
    %v895 = vrot.slane %v882, 4
    %v896 = vsel %vm487, %v895, %v870
    %v897 = vrot.slane %v870, 4
    %v898 = vsel %vm487, %v882, %v897
    %v900 = vunpack.c.l.s4 1934713408
    %v901 = vunpack.c.0.s8 %v900
    %v902 = vperm.slane %v896, %v901
    %v904 = vunpack.c.l.s4 1934713408
    %v905 = vunpack.c.0.s8 %v904
    %v906 = vperm.slane %v898, %v905
    %v907 = vrot.slane %v890, 4
    %v908 = vsel %vm487, 0.0, %v907
    %v909 = vrot.slane %v894, 4
    %v910 = vsel %vm487, 0.0, %v909
    %v911 = vrot.slane %v902, 4
    %v912 = vsel %vm487, 0.0, %v911
    %v913 = vrot.slane %v906, 4
    %v914 = vsel %vm487, 0.0, %v913
    %v915 = vrot.slane %v730, 4
    %v916 = vsel %vm487, %v915, %v429
    %v917 = vrot.slane %v429, 4
    %v918 = vsel %vm487, %v730, %v917
    %v920 = vunpack.c.l.s4 1983009808
    %v921 = vunpack.c.0.s8 %v920
    %v922 = vperm.slane %v916, %v921
    %v924 = vunpack.c.l.s4 1983009808
    %v925 = vunpack.c.0.s8 %v924
    %v926 = vperm.slane %v918, %v925
    %v927 = vrot.slane %v742, 4
    %v928 = vsel %vm487, %v927, %v718
    %v929 = vrot.slane %v718, 4
    %v930 = vsel %vm487, %v742, %v929
    %v932 = vunpack.c.l.s4 1983009808
    %v933 = vunpack.c.0.s8 %v932
    %v934 = vperm.slane %v928, %v933
    %v936 = vunpack.c.l.s4 1983009808
    %v937 = vunpack.c.0.s8 %v936
    %v938 = vperm.slane %v930, %v937
    %v939 = vrot.slane %v934, 4
    %v940 = vsel %vm487, %v939, %v922
    %v941 = vrot.slane %v922, 4
    %v942 = vsel %vm487, %v934, %v941
    %v944 = vunpack.c.l.s4 1934713408
    %v945 = vunpack.c.0.s8 %v944
    %v946 = vperm.slane %v940, %v945
    %v948 = vunpack.c.l.s4 1934713408
    %v949 = vunpack.c.0.s8 %v948
    %v950 = vperm.slane %v942, %v949
    %v951 = vrot.slane %v938, 4
    %v952 = vsel %vm487, %v951, %v926
    %v953 = vrot.slane %v926, 4
    %v954 = vsel %vm487, %v938, %v953
    %v956 = vunpack.c.l.s4 1934713408
    %v957 = vunpack.c.0.s8 %v956
    %v958 = vperm.slane %v952, %v957
    %v960 = vunpack.c.l.s4 1934713408
    %v961 = vunpack.c.0.s8 %v960
    %v962 = vperm.slane %v954, %v961
    %v963 = vrot.slane %v946, 4
    %v964 = vsel %vm487, 0.0, %v963
    %v965 = vrot.slane %v950, 4
    %v966 = vsel %vm487, 0.0, %v965
    %v967 = vrot.slane %v958, 4
    %v968 = vsel %vm487, 0.0, %v967
    %v969 = vrot.slane %v962, 4
    %v970 = vsel %vm487, 0.0, %v969
    %v971 = vsel %vm487, %v797, %v778
    %v973 = vunpack.c.l.s4 1983009808
    %v974 = vunpack.c.0.s8 %v973
    %v975 = vperm.slane %v971, %v974
    %v976 = vrot.slane %v798, 4
    %v977 = vsel %vm487, %v976, %v796
    %v979 = vunpack.c.l.s4 1983009808
    %v980 = vunpack.c.0.s8 %v979
    %v981 = vperm.slane %v977, %v980
    %v982 = vsel %vm487, %v801, %v790
    %v984 = vunpack.c.l.s4 1983009808
    %v985 = vunpack.c.0.s8 %v984
    %v986 = vperm.slane %v982, %v985
    %v987 = vrot.slane %v802, 4
    %v988 = vsel %vm487, %v987, %v800
    %v990 = vunpack.c.l.s4 1983009808
    %v991 = vunpack.c.0.s8 %v990
    %v992 = vperm.slane %v988, %v991
    %v993 = vrot.slane %v981, 4
    %v994 = vsel %vm487, %v993, %v975
    %v995 = vrot.slane %v975, 4
    %v996 = vsel %vm487, %v981, %v995
    %v998 = vunpack.c.l.s4 1934713408
    %v999 = vunpack.c.0.s8 %v998
    %v1000 = vperm.slane %v994, %v999
    %v1002 = vunpack.c.l.s4 1934713408
    %v1003 = vunpack.c.0.s8 %v1002
    %v1004 = vperm.slane %v996, %v1003
    %v1005 = vrot.slane %v992, 4
    %v1006 = vsel %vm487, %v1005, %v986
    %v1007 = vrot.slane %v986, 4
    %v1008 = vsel %vm487, %v992, %v1007
    %v1010 = vunpack.c.l.s4 1934713408
    %v1011 = vunpack.c.0.s8 %v1010
    %v1012 = vperm.slane %v1006, %v1011
    %v1014 = vunpack.c.l.s4 1934713408
    %v1015 = vunpack.c.0.s8 %v1014
    %v1016 = vperm.slane %v1008, %v1015
    %v1017 = vrot.slane %v1012, 4
    %v1018 = vsel %vm487, %v1017, %v1000
    %v1019 = vrot.slane %v1000, 4
    %v1020 = vsel %vm487, %v1012, %v1019
    %v1021 = vrot.slane %v1016, 4
    %v1022 = vsel %vm487, %v1021, %v1004
    %v1023 = vrot.slane %v1004, 4
    %v1024 = vsel %vm487, %v1016, %v1023
    %v1025 = vsel %vm487, %v853, %v834
    %v1027 = vunpack.c.l.s4 1983009808
    %v1028 = vunpack.c.0.s8 %v1027
    %v1029 = vperm.slane %v1025, %v1028
    %v1030 = vrot.slane %v854, 4
    %v1031 = vsel %vm487, %v1030, %v852
    %v1033 = vunpack.c.l.s4 1983009808
    %v1034 = vunpack.c.0.s8 %v1033
    %v1035 = vperm.slane %v1031, %v1034
    %v1036 = vsel %vm487, %v857, %v846
    %v1038 = vunpack.c.l.s4 1983009808
    %v1039 = vunpack.c.0.s8 %v1038
    %v1040 = vperm.slane %v1036, %v1039
    %v1041 = vrot.slane %v858, 4
    %v1042 = vsel %vm487, %v1041, %v856
    %v1044 = vunpack.c.l.s4 1983009808
    %v1045 = vunpack.c.0.s8 %v1044
    %v1046 = vperm.slane %v1042, %v1045
    %v1047 = vrot.slane %v1035, 4
    %v1048 = vsel %vm487, %v1047, %v1029
    %v1049 = vrot.slane %v1029, 4
    %v1050 = vsel %vm487, %v1035, %v1049
    %v1052 = vunpack.c.l.s4 1934713408
    %v1053 = vunpack.c.0.s8 %v1052
    %v1054 = vperm.slane %v1048, %v1053
    %v1056 = vunpack.c.l.s4 1934713408
    %v1057 = vunpack.c.0.s8 %v1056
    %v1058 = vperm.slane %v1050, %v1057
    %v1059 = vrot.slane %v1046, 4
    %v1060 = vsel %vm487, %v1059, %v1040
    %v1061 = vrot.slane %v1040, 4
    %v1062 = vsel %vm487, %v1046, %v1061
    %v1064 = vunpack.c.l.s4 1934713408
    %v1065 = vunpack.c.0.s8 %v1064
    %v1066 = vperm.slane %v1060, %v1065
    %v1068 = vunpack.c.l.s4 1934713408
    %v1069 = vunpack.c.0.s8 %v1068
    %v1070 = vperm.slane %v1062, %v1069
    %v1071 = vrot.slane %v1066, 4
    %v1072 = vsel %vm487, %v1071, %v1054
    %v1073 = vrot.slane %v1054, 4
    %v1074 = vsel %vm487, %v1066, %v1073
    %v1075 = vrot.slane %v1070, 4
    %v1076 = vsel %vm487, %v1075, %v1058
    %v1077 = vrot.slane %v1058, 4
    %v1078 = vsel %vm487, %v1070, %v1077
    %v1079 = vsel %vm487, %v909, %v890
    %v1081 = vunpack.c.l.s4 1983009808
    %v1082 = vunpack.c.0.s8 %v1081
    %v1083 = vperm.slane %v1079, %v1082
    %v1084 = vrot.slane %v910, 4
    %v1085 = vsel %vm487, %v1084, %v908
    %v1087 = vunpack.c.l.s4 1983009808
    %v1088 = vunpack.c.0.s8 %v1087
    %v1089 = vperm.slane %v1085, %v1088
    %v1090 = vsel %vm487, %v913, %v902
    %v1092 = vunpack.c.l.s4 1983009808
    %v1093 = vunpack.c.0.s8 %v1092
    %v1094 = vperm.slane %v1090, %v1093
    %v1095 = vrot.slane %v914, 4
    %v1096 = vsel %vm487, %v1095, %v912
    %v1098 = vunpack.c.l.s4 1983009808
    %v1099 = vunpack.c.0.s8 %v1098
    %v1100 = vperm.slane %v1096, %v1099
    %v1101 = vrot.slane %v1089, 4
    %v1102 = vsel %vm487, %v1101, %v1083
    %v1103 = vrot.slane %v1083, 4
    %v1104 = vsel %vm487, %v1089, %v1103
    %v1106 = vunpack.c.l.s4 1934713408
    %v1107 = vunpack.c.0.s8 %v1106
    %v1108 = vperm.slane %v1102, %v1107
    %v1110 = vunpack.c.l.s4 1934713408
    %v1111 = vunpack.c.0.s8 %v1110
    %v1112 = vperm.slane %v1104, %v1111
    %v1113 = vrot.slane %v1100, 4
    %v1114 = vsel %vm487, %v1113, %v1094
    %v1115 = vrot.slane %v1094, 4
    %v1116 = vsel %vm487, %v1100, %v1115
    %v1118 = vunpack.c.l.s4 1934713408
    %v1119 = vunpack.c.0.s8 %v1118
    %v1120 = vperm.slane %v1114, %v1119
    %v1122 = vunpack.c.l.s4 1934713408
    %v1123 = vunpack.c.0.s8 %v1122
    %v1124 = vperm.slane %v1116, %v1123
    %v1125 = vrot.slane %v1120, 4
    %v1126 = vsel %vm487, %v1125, %v1108
    %v1127 = vrot.slane %v1108, 4
    %v1128 = vsel %vm487, %v1120, %v1127
    %v1129 = vrot.slane %v1124, 4
    %v1130 = vsel %vm487, %v1129, %v1112
    %v1131 = vrot.slane %v1112, 4
    %v1132 = vsel %vm487, %v1124, %v1131
    %v1133 = vsel %vm487, %v965, %v946
    %v1135 = vunpack.c.l.s4 1983009808
    %v1136 = vunpack.c.0.s8 %v1135
    %v1137 = vperm.slane %v1133, %v1136
    %v1138 = vrot.slane %v966, 4
    %v1139 = vsel %vm487, %v1138, %v964
    %v1141 = vunpack.c.l.s4 1983009808
    %v1142 = vunpack.c.0.s8 %v1141
    %v1143 = vperm.slane %v1139, %v1142
    %v1144 = vsel %vm487, %v969, %v958
    %v1146 = vunpack.c.l.s4 1983009808
    %v1147 = vunpack.c.0.s8 %v1146
    %v1148 = vperm.slane %v1144, %v1147
    %v1149 = vrot.slane %v970, 4
    %v1150 = vsel %vm487, %v1149, %v968
    %v1152 = vunpack.c.l.s4 1983009808
    %v1153 = vunpack.c.0.s8 %v1152
    %v1154 = vperm.slane %v1150, %v1153
    %v1155 = vrot.slane %v1143, 4
    %v1156 = vsel %vm487, %v1155, %v1137
    %v1157 = vrot.slane %v1137, 4
    %v1158 = vsel %vm487, %v1143, %v1157
    %v1160 = vunpack.c.l.s4 1934713408
    %v1161 = vunpack.c.0.s8 %v1160
    %v1162 = vperm.slane %v1156, %v1161
    %v1164 = vunpack.c.l.s4 1934713408
    %v1165 = vunpack.c.0.s8 %v1164
    %v1166 = vperm.slane %v1158, %v1165
    %v1167 = vrot.slane %v1154, 4
    %v1168 = vsel %vm487, %v1167, %v1148
    %v1169 = vrot.slane %v1148, 4
    %v1170 = vsel %vm487, %v1154, %v1169
    %v1172 = vunpack.c.l.s4 1934713408
    %v1173 = vunpack.c.0.s8 %v1172
    %v1174 = vperm.slane %v1168, %v1173
    %v1176 = vunpack.c.l.s4 1934713408
    %v1177 = vunpack.c.0.s8 %v1176
    %v1178 = vperm.slane %v1170, %v1177
    %v1179 = vrot.slane %v1174, 4
    %v1180 = vsel %vm487, %v1179, %v1162
    %v1181 = vrot.slane %v1162, 4
    %v1182 = vsel %vm487, %v1174, %v1181
    %v1183 = vrot.slane %v1178, 4
    %v1184 = vsel %vm487, %v1183, %v1166
    %v1185 = vrot.slane %v1166, 4
    %v1186 = vsel %vm487, %v1178, %v1185
    %1191 = vrot.lane.b32.xlu0 %v455, 124
    %v1192 = vpop.permute.xlu0 %1191
    %1193 = vrot.lane.b32.xlu0 %v458, 124
    %v1194 = vpop.permute.xlu0 %1193
    %1195 = vrot.lane.b32.xlu0 %v461, 124
    %v1196 = vpop.permute.xlu0 %1195
    %1197 = vrot.lane.b32.xlu0 %v464, 124
    %v1198 = vpop.permute.xlu0 %1197
    %1203 = vrot.lane.b32.xlu0 %v455, 120
    %v1204 = vpop.permute.xlu0 %1203
    %1205 = vrot.lane.b32.xlu0 %v458, 120
    %v1206 = vpop.permute.xlu0 %1205
    %1207 = vrot.lane.b32.xlu0 %v461, 120
    %v1208 = vpop.permute.xlu0 %1207
    %1209 = vrot.lane.b32.xlu0 %v464, 120
    %v1210 = vpop.permute.xlu0 %1209
    %1215 = vrot.lane.b32.xlu0 %v455, 116
    %v1216 = vpop.permute.xlu0 %1215
    %1217 = vrot.lane.b32.xlu0 %v458, 116
    %v1218 = vpop.permute.xlu0 %1217
    %1219 = vrot.lane.b32.xlu0 %v461, 116
    %v1220 = vpop.permute.xlu0 %1219
    %1221 = vrot.lane.b32.xlu0 %v464, 116
    %v1222 = vpop.permute.xlu0 %1221
    %v1227 = vrot.slane %v1204, 4
    %v1228 = vsel %vm487, %v1227, %v455
    %v1229 = vrot.slane %v455, 4
    %v1230 = vsel %vm487, %v1204, %v1229
    %v1232 = vunpack.c.l.s4 1983009808
    %v1233 = vunpack.c.0.s8 %v1232
    %v1234 = vperm.slane %v1228, %v1233
    %v1236 = vunpack.c.l.s4 1983009808
    %v1237 = vunpack.c.0.s8 %v1236
    %v1238 = vperm.slane %v1230, %v1237
    %v1239 = vrot.slane %v1216, 4
    %v1240 = vsel %vm487, %v1239, %v1192
    %v1241 = vrot.slane %v1192, 4
    %v1242 = vsel %vm487, %v1216, %v1241
    %v1244 = vunpack.c.l.s4 1983009808
    %v1245 = vunpack.c.0.s8 %v1244
    %v1246 = vperm.slane %v1240, %v1245
    %v1248 = vunpack.c.l.s4 1983009808
    %v1249 = vunpack.c.0.s8 %v1248
    %v1250 = vperm.slane %v1242, %v1249
    %v1251 = vrot.slane %v1246, 4
    %v1252 = vsel %vm487, %v1251, %v1234
    %v1253 = vrot.slane %v1234, 4
    %v1254 = vsel %vm487, %v1246, %v1253
    %v1256 = vunpack.c.l.s4 1934713408
    %v1257 = vunpack.c.0.s8 %v1256
    %v1258 = vperm.slane %v1252, %v1257
    %v1260 = vunpack.c.l.s4 1934713408
    %v1261 = vunpack.c.0.s8 %v1260
    %v1262 = vperm.slane %v1254, %v1261
    %v1263 = vrot.slane %v1250, 4
    %v1264 = vsel %vm487, %v1263, %v1238
    %v1265 = vrot.slane %v1238, 4
    %v1266 = vsel %vm487, %v1250, %v1265
    %v1268 = vunpack.c.l.s4 1934713408
    %v1269 = vunpack.c.0.s8 %v1268
    %v1270 = vperm.slane %v1264, %v1269
    %v1272 = vunpack.c.l.s4 1934713408
    %v1273 = vunpack.c.0.s8 %v1272
    %v1274 = vperm.slane %v1266, %v1273
    %v1275 = vrot.slane %v1258, 4
    %v1276 = vsel %vm487, 0.0, %v1275
    %v1277 = vrot.slane %v1262, 4
    %v1278 = vsel %vm487, 0.0, %v1277
    %v1279 = vrot.slane %v1270, 4
    %v1280 = vsel %vm487, 0.0, %v1279
    %v1281 = vrot.slane %v1274, 4
    %v1282 = vsel %vm487, 0.0, %v1281
    %v1283 = vrot.slane %v1206, 4
    %v1284 = vsel %vm487, %v1283, %v458
    %v1285 = vrot.slane %v458, 4
    %v1286 = vsel %vm487, %v1206, %v1285
    %v1288 = vunpack.c.l.s4 1983009808
    %v1289 = vunpack.c.0.s8 %v1288
    %v1290 = vperm.slane %v1284, %v1289
    %v1292 = vunpack.c.l.s4 1983009808
    %v1293 = vunpack.c.0.s8 %v1292
    %v1294 = vperm.slane %v1286, %v1293
    %v1295 = vrot.slane %v1218, 4
    %v1296 = vsel %vm487, %v1295, %v1194
    %v1297 = vrot.slane %v1194, 4
    %v1298 = vsel %vm487, %v1218, %v1297
    %v1300 = vunpack.c.l.s4 1983009808
    %v1301 = vunpack.c.0.s8 %v1300
    %v1302 = vperm.slane %v1296, %v1301
    %v1304 = vunpack.c.l.s4 1983009808
    %v1305 = vunpack.c.0.s8 %v1304
    %v1306 = vperm.slane %v1298, %v1305
    %v1307 = vrot.slane %v1302, 4
    %v1308 = vsel %vm487, %v1307, %v1290
    %v1309 = vrot.slane %v1290, 4
    %v1310 = vsel %vm487, %v1302, %v1309
    %v1312 = vunpack.c.l.s4 1934713408
    %v1313 = vunpack.c.0.s8 %v1312
    %v1314 = vperm.slane %v1308, %v1313
    %v1316 = vunpack.c.l.s4 1934713408
    %v1317 = vunpack.c.0.s8 %v1316
    %v1318 = vperm.slane %v1310, %v1317
    %v1319 = vrot.slane %v1306, 4
    %v1320 = vsel %vm487, %v1319, %v1294
    %v1321 = vrot.slane %v1294, 4
    %v1322 = vsel %vm487, %v1306, %v1321
    %v1324 = vunpack.c.l.s4 1934713408
    %v1325 = vunpack.c.0.s8 %v1324
    %v1326 = vperm.slane %v1320, %v1325
    %v1328 = vunpack.c.l.s4 1934713408
    %v1329 = vunpack.c.0.s8 %v1328
    %v1330 = vperm.slane %v1322, %v1329
    %v1331 = vrot.slane %v1314, 4
    %v1332 = vsel %vm487, 0.0, %v1331
    %v1333 = vrot.slane %v1318, 4
    %v1334 = vsel %vm487, 0.0, %v1333
    %v1335 = vrot.slane %v1326, 4
    %v1336 = vsel %vm487, 0.0, %v1335
    %v1337 = vrot.slane %v1330, 4
    %v1338 = vsel %vm487, 0.0, %v1337
    %v1339 = vrot.slane %v1208, 4
    %v1340 = vsel %vm487, %v1339, %v461
    %v1341 = vrot.slane %v461, 4
    %v1342 = vsel %vm487, %v1208, %v1341
    %v1344 = vunpack.c.l.s4 1983009808
    %v1345 = vunpack.c.0.s8 %v1344
    %v1346 = vperm.slane %v1340, %v1345
    %v1348 = vunpack.c.l.s4 1983009808
    %v1349 = vunpack.c.0.s8 %v1348
    %v1350 = vperm.slane %v1342, %v1349
    %v1351 = vrot.slane %v1220, 4
    %v1352 = vsel %vm487, %v1351, %v1196
    %v1353 = vrot.slane %v1196, 4
    %v1354 = vsel %vm487, %v1220, %v1353
    %v1356 = vunpack.c.l.s4 1983009808
    %v1357 = vunpack.c.0.s8 %v1356
    %v1358 = vperm.slane %v1352, %v1357
    %v1360 = vunpack.c.l.s4 1983009808
    %v1361 = vunpack.c.0.s8 %v1360
    %v1362 = vperm.slane %v1354, %v1361
    %v1363 = vrot.slane %v1358, 4
    %v1364 = vsel %vm487, %v1363, %v1346
    %v1365 = vrot.slane %v1346, 4
    %v1366 = vsel %vm487, %v1358, %v1365
    %v1368 = vunpack.c.l.s4 1934713408
    %v1369 = vunpack.c.0.s8 %v1368
    %v1370 = vperm.slane %v1364, %v1369
    %v1372 = vunpack.c.l.s4 1934713408
    %v1373 = vunpack.c.0.s8 %v1372
    %v1374 = vperm.slane %v1366, %v1373
    %v1375 = vrot.slane %v1362, 4
    %v1376 = vsel %vm487, %v1375, %v1350
    %v1377 = vrot.slane %v1350, 4
    %v1378 = vsel %vm487, %v1362, %v1377
    %v1380 = vunpack.c.l.s4 1934713408
    %v1381 = vunpack.c.0.s8 %v1380
    %v1382 = vperm.slane %v1376, %v1381
    %v1384 = vunpack.c.l.s4 1934713408
    %v1385 = vunpack.c.0.s8 %v1384
    %v1386 = vperm.slane %v1378, %v1385
    %v1387 = vrot.slane %v1370, 4
    %v1388 = vsel %vm487, 0.0, %v1387
    %v1389 = vrot.slane %v1374, 4
    %v1390 = vsel %vm487, 0.0, %v1389
    %v1391 = vrot.slane %v1382, 4
    %v1392 = vsel %vm487, 0.0, %v1391
    %v1393 = vrot.slane %v1386, 4
    %v1394 = vsel %vm487, 0.0, %v1393
    %v1395 = vrot.slane %v1210, 4
    %v1396 = vsel %vm487, %v1395, %v464
    %v1397 = vrot.slane %v464, 4
    %v1398 = vsel %vm487, %v1210, %v1397
    %v1400 = vunpack.c.l.s4 1983009808
    %v1401 = vunpack.c.0.s8 %v1400
    %v1402 = vperm.slane %v1396, %v1401
    %v1404 = vunpack.c.l.s4 1983009808
    %v1405 = vunpack.c.0.s8 %v1404
    %v1406 = vperm.slane %v1398, %v1405
    %v1407 = vrot.slane %v1222, 4
    %v1408 = vsel %vm487, %v1407, %v1198
    %v1409 = vrot.slane %v1198, 4
    %v1410 = vsel %vm487, %v1222, %v1409
    %v1412 = vunpack.c.l.s4 1983009808
    %v1413 = vunpack.c.0.s8 %v1412
    %v1414 = vperm.slane %v1408, %v1413
    %v1416 = vunpack.c.l.s4 1983009808
    %v1417 = vunpack.c.0.s8 %v1416
    %v1418 = vperm.slane %v1410, %v1417
    %v1419 = vrot.slane %v1414, 4
    %v1420 = vsel %vm487, %v1419, %v1402
    %v1421 = vrot.slane %v1402, 4
    %v1422 = vsel %vm487, %v1414, %v1421
    %v1424 = vunpack.c.l.s4 1934713408
    %v1425 = vunpack.c.0.s8 %v1424
    %v1426 = vperm.slane %v1420, %v1425
    %v1428 = vunpack.c.l.s4 1934713408
    %v1429 = vunpack.c.0.s8 %v1428
    %v1430 = vperm.slane %v1422, %v1429
    %v1431 = vrot.slane %v1418, 4
    %v1432 = vsel %vm487, %v1431, %v1406
    %v1433 = vrot.slane %v1406, 4
    %v1434 = vsel %vm487, %v1418, %v1433
    %v1436 = vunpack.c.l.s4 1934713408
    %v1437 = vunpack.c.0.s8 %v1436
    %v1438 = vperm.slane %v1432, %v1437
    %v1440 = vunpack.c.l.s4 1934713408
    %v1441 = vunpack.c.0.s8 %v1440
    %v1442 = vperm.slane %v1434, %v1441
    %v1443 = vrot.slane %v1426, 4
    %v1444 = vsel %vm487, 0.0, %v1443
    %v1445 = vrot.slane %v1430, 4
    %v1446 = vsel %vm487, 0.0, %v1445
    %v1447 = vrot.slane %v1438, 4
    %v1448 = vsel %vm487, 0.0, %v1447
    %v1449 = vrot.slane %v1442, 4
    %v1450 = vsel %vm487, 0.0, %v1449
    %v1451 = vsel %vm487, %v1277, %v1258
    %v1453 = vunpack.c.l.s4 1983009808
    %v1454 = vunpack.c.0.s8 %v1453
    %v1455 = vperm.slane %v1451, %v1454
    %v1456 = vrot.slane %v1278, 4
    %v1457 = vsel %vm487, %v1456, %v1276
    %v1459 = vunpack.c.l.s4 1983009808
    %v1460 = vunpack.c.0.s8 %v1459
    %v1461 = vperm.slane %v1457, %v1460
    %v1462 = vsel %vm487, %v1281, %v1270
    %v1464 = vunpack.c.l.s4 1983009808
    %v1465 = vunpack.c.0.s8 %v1464
    %v1466 = vperm.slane %v1462, %v1465
    %v1467 = vrot.slane %v1282, 4
    %v1468 = vsel %vm487, %v1467, %v1280
    %v1470 = vunpack.c.l.s4 1983009808
    %v1471 = vunpack.c.0.s8 %v1470
    %v1472 = vperm.slane %v1468, %v1471
    %v1473 = vrot.slane %v1461, 4
    %v1474 = vsel %vm487, %v1473, %v1455
    %v1475 = vrot.slane %v1455, 4
    %v1476 = vsel %vm487, %v1461, %v1475
    %v1478 = vunpack.c.l.s4 1934713408
    %v1479 = vunpack.c.0.s8 %v1478
    %v1480 = vperm.slane %v1474, %v1479
    %v1482 = vunpack.c.l.s4 1934713408
    %v1483 = vunpack.c.0.s8 %v1482
    %v1484 = vperm.slane %v1476, %v1483
    %v1485 = vrot.slane %v1472, 4
    %v1486 = vsel %vm487, %v1485, %v1466
    %v1487 = vrot.slane %v1466, 4
    %v1488 = vsel %vm487, %v1472, %v1487
    %v1490 = vunpack.c.l.s4 1934713408
    %v1491 = vunpack.c.0.s8 %v1490
    %v1492 = vperm.slane %v1486, %v1491
    %v1494 = vunpack.c.l.s4 1934713408
    %v1495 = vunpack.c.0.s8 %v1494
    %v1496 = vperm.slane %v1488, %v1495
    %v1497 = vrot.slane %v1492, 4
    %v1498 = vsel %vm487, %v1497, %v1480
    %v1499 = vrot.slane %v1480, 4
    %v1500 = vsel %vm487, %v1492, %v1499
    %v1501 = vrot.slane %v1496, 4
    %v1502 = vsel %vm487, %v1501, %v1484
    %v1503 = vrot.slane %v1484, 4
    %v1504 = vsel %vm487, %v1496, %v1503
    %v1505 = vsel %vm487, %v1333, %v1314
    %v1507 = vunpack.c.l.s4 1983009808
    %v1508 = vunpack.c.0.s8 %v1507
    %v1509 = vperm.slane %v1505, %v1508
    %v1510 = vrot.slane %v1334, 4
    %v1511 = vsel %vm487, %v1510, %v1332
    %v1513 = vunpack.c.l.s4 1983009808
    %v1514 = vunpack.c.0.s8 %v1513
    %v1515 = vperm.slane %v1511, %v1514
    %v1516 = vsel %vm487, %v1337, %v1326
    %v1518 = vunpack.c.l.s4 1983009808
    %v1519 = vunpack.c.0.s8 %v1518
    %v1520 = vperm.slane %v1516, %v1519
    %v1521 = vrot.slane %v1338, 4
    %v1522 = vsel %vm487, %v1521, %v1336
    %v1524 = vunpack.c.l.s4 1983009808
    %v1525 = vunpack.c.0.s8 %v1524
    %v1526 = vperm.slane %v1522, %v1525
    %v1527 = vrot.slane %v1515, 4
    %v1528 = vsel %vm487, %v1527, %v1509
    %v1529 = vrot.slane %v1509, 4
    %v1530 = vsel %vm487, %v1515, %v1529
    %v1532 = vunpack.c.l.s4 1934713408
    %v1533 = vunpack.c.0.s8 %v1532
    %v1534 = vperm.slane %v1528, %v1533
    %v1536 = vunpack.c.l.s4 1934713408
    %v1537 = vunpack.c.0.s8 %v1536
    %v1538 = vperm.slane %v1530, %v1537
    %v1539 = vrot.slane %v1526, 4
    %v1540 = vsel %vm487, %v1539, %v1520
    %v1541 = vrot.slane %v1520, 4
    %v1542 = vsel %vm487, %v1526, %v1541
    %v1544 = vunpack.c.l.s4 1934713408
    %v1545 = vunpack.c.0.s8 %v1544
    %v1546 = vperm.slane %v1540, %v1545
    %v1548 = vunpack.c.l.s4 1934713408
    %v1549 = vunpack.c.0.s8 %v1548
    %v1550 = vperm.slane %v1542, %v1549
    %v1551 = vrot.slane %v1546, 4
    %v1552 = vsel %vm487, %v1551, %v1534
    %v1553 = vrot.slane %v1534, 4
    %v1554 = vsel %vm487, %v1546, %v1553
    %v1555 = vrot.slane %v1550, 4
    %v1556 = vsel %vm487, %v1555, %v1538
    %v1557 = vrot.slane %v1538, 4
    %v1558 = vsel %vm487, %v1550, %v1557
    %v1559 = vsel %vm487, %v1389, %v1370
    %v1561 = vunpack.c.l.s4 1983009808
    %v1562 = vunpack.c.0.s8 %v1561
    %v1563 = vperm.slane %v1559, %v1562
    %v1564 = vrot.slane %v1390, 4
    %v1565 = vsel %vm487, %v1564, %v1388
    %v1567 = vunpack.c.l.s4 1983009808
    %v1568 = vunpack.c.0.s8 %v1567
    %v1569 = vperm.slane %v1565, %v1568
    %v1570 = vsel %vm487, %v1393, %v1382
    %v1572 = vunpack.c.l.s4 1983009808
    %v1573 = vunpack.c.0.s8 %v1572
    %v1574 = vperm.slane %v1570, %v1573
    %v1575 = vrot.slane %v1394, 4
    %v1576 = vsel %vm487, %v1575, %v1392
    %v1578 = vunpack.c.l.s4 1983009808
    %v1579 = vunpack.c.0.s8 %v1578
    %v1580 = vperm.slane %v1576, %v1579
    %v1581 = vrot.slane %v1569, 4
    %v1582 = vsel %vm487, %v1581, %v1563
    %v1583 = vrot.slane %v1563, 4
    %v1584 = vsel %vm487, %v1569, %v1583
    %v1586 = vunpack.c.l.s4 1934713408
    %v1587 = vunpack.c.0.s8 %v1586
    %v1588 = vperm.slane %v1582, %v1587
    %v1590 = vunpack.c.l.s4 1934713408
    %v1591 = vunpack.c.0.s8 %v1590
    %v1592 = vperm.slane %v1584, %v1591
    %v1593 = vrot.slane %v1580, 4
    %v1594 = vsel %vm487, %v1593, %v1574
    %v1595 = vrot.slane %v1574, 4
    %v1596 = vsel %vm487, %v1580, %v1595
    %v1598 = vunpack.c.l.s4 1934713408
    %v1599 = vunpack.c.0.s8 %v1598
    %v1600 = vperm.slane %v1594, %v1599
    %v1602 = vunpack.c.l.s4 1934713408
    %v1603 = vunpack.c.0.s8 %v1602
    %v1604 = vperm.slane %v1596, %v1603
    %v1605 = vrot.slane %v1600, 4
    %v1606 = vsel %vm487, %v1605, %v1588
    %v1607 = vrot.slane %v1588, 4
    %v1608 = vsel %vm487, %v1600, %v1607
    %v1609 = vrot.slane %v1604, 4
    %v1610 = vsel %vm487, %v1609, %v1592
    %v1611 = vrot.slane %v1592, 4
    %v1612 = vsel %vm487, %v1604, %v1611
    %v1613 = vsel %vm487, %v1445, %v1426
    %v1615 = vunpack.c.l.s4 1983009808
    %v1616 = vunpack.c.0.s8 %v1615
    %v1617 = vperm.slane %v1613, %v1616
    %v1618 = vrot.slane %v1446, 4
    %v1619 = vsel %vm487, %v1618, %v1444
    %v1621 = vunpack.c.l.s4 1983009808
    %v1622 = vunpack.c.0.s8 %v1621
    %v1623 = vperm.slane %v1619, %v1622
    %v1624 = vsel %vm487, %v1449, %v1438
    %v1626 = vunpack.c.l.s4 1983009808
    %v1627 = vunpack.c.0.s8 %v1626
    %v1628 = vperm.slane %v1624, %v1627
    %v1629 = vrot.slane %v1450, 4
    %v1630 = vsel %vm487, %v1629, %v1448
    %v1632 = vunpack.c.l.s4 1983009808
    %v1633 = vunpack.c.0.s8 %v1632
    %v1634 = vperm.slane %v1630, %v1633
    %v1635 = vrot.slane %v1623, 4
    %v1636 = vsel %vm487, %v1635, %v1617
    %v1637 = vrot.slane %v1617, 4
    %v1638 = vsel %vm487, %v1623, %v1637
    %v1640 = vunpack.c.l.s4 1934713408
    %v1641 = vunpack.c.0.s8 %v1640
    %v1642 = vperm.slane %v1636, %v1641
    %v1644 = vunpack.c.l.s4 1934713408
    %v1645 = vunpack.c.0.s8 %v1644
    %v1646 = vperm.slane %v1638, %v1645
    %v1647 = vrot.slane %v1634, 4
    %v1648 = vsel %vm487, %v1647, %v1628
    %v1649 = vrot.slane %v1628, 4
    %v1650 = vsel %vm487, %v1634, %v1649
    %v1652 = vunpack.c.l.s4 1934713408
    %v1653 = vunpack.c.0.s8 %v1652
    %v1654 = vperm.slane %v1648, %v1653
    %v1656 = vunpack.c.l.s4 1934713408
    %v1657 = vunpack.c.0.s8 %v1656
    %v1658 = vperm.slane %v1650, %v1657
    %v1659 = vrot.slane %v1654, 4
    %v1660 = vsel %vm487, %v1659, %v1642
    %v1661 = vrot.slane %v1642, 4
    %v1662 = vsel %vm487, %v1654, %v1661
    %v1663 = vrot.slane %v1658, 4
    %v1664 = vsel %vm487, %v1663, %v1646
    %v1665 = vrot.slane %v1646, 4
    %v1666 = vsel %vm487, %v1658, %v1665
    %vm1667 = vcmask 31744
    %v1669 = vsel %vm1667, %v646, 0
    %v1672 = vsel %vm1667, %v1018, 0
    %1674 = vmatpush.xpose.msra.mxu0 0.0
    %1675 = vmatpush.xpose.msra.mxu0 0.0
    %1676 = vmatpush.xpose.msra.mxu0 0.0
    %1677 = vmatpush.xpose.msra.mxu0 0.0
    %1678 = vmatpush.xpose.msra.mxu0 0.0
    %1679 = vmatpush.xpose.msra.mxu0 0.0
    %1680 = vmatpush.xpose.msra.mxu0 0.0
    %1681 = vmatpush.xpose.msra.mxu0 0.0
    %1682 = vmatpush.xpose.msra.mxu0 0.0
    %1683 = vmatpush.xpose.msra.mxu0 0.0
    %1684 = vmatpush.xpose.msra.mxu0 0.0
    %1685 = vmatpush.xpose.msra.mxu0 0.0
    %1686 = vmatpush.xpose.msra.mxu0 0.0
    %1687 = vmatpush.xpose.msra.mxu0 0.0
    %1688 = vmatpush.xpose.msra.mxu0 0.0
    %1689 = vmatpush.xpose.msra.mxu0 %v1672
    %1690 = vmatmul.f32.gmra.mxu0 %v1669
    %v1691 = vpop.f32.mrf.mxu0
    %v1692 = vadd.f32 0.0, %v1691
    %1693 = vdwg.mxu0
    %v1695 = vsel %vm1667, %v648, 0
    %v1698 = vsel %vm1667, %v1020, 0
    %1700 = vmatpush.xpose.msra.mxu0 0.0
    %1701 = vmatpush.xpose.msra.mxu0 0.0
    %1702 = vmatpush.xpose.msra.mxu0 0.0
    %1703 = vmatpush.xpose.msra.mxu0 0.0
    %1704 = vmatpush.xpose.msra.mxu0 0.0
    %1705 = vmatpush.xpose.msra.mxu0 0.0
    %1706 = vmatpush.xpose.msra.mxu0 0.0
    %1707 = vmatpush.xpose.msra.mxu0 0.0
    %1708 = vmatpush.xpose.msra.mxu0 0.0
    %1709 = vmatpush.xpose.msra.mxu0 0.0
    %1710 = vmatpush.xpose.msra.mxu0 0.0
    %1711 = vmatpush.xpose.msra.mxu0 0.0
    %1712 = vmatpush.xpose.msra.mxu0 0.0
    %1713 = vmatpush.xpose.msra.mxu0 0.0
    %1714 = vmatpush.xpose.msra.mxu0 0.0
    %1715 = vmatpush.xpose.msra.mxu0 %v1698
    %1716 = vmatmul.f32.gmra.mxu0 %v1695
    %v1717 = vpop.f32.mrf.mxu0
    %v1718 = vadd.f32 0.0, %v1717
    %1719 = vdwg.mxu0
    %v1721 = vsel %vm1667, %v650, 0
    %v1724 = vsel %vm1667, %v1022, 0
    %1726 = vmatpush.xpose.msra.mxu0 0.0
    %1727 = vmatpush.xpose.msra.mxu0 0.0
    %1728 = vmatpush.xpose.msra.mxu0 0.0
    %1729 = vmatpush.xpose.msra.mxu0 0.0
    %1730 = vmatpush.xpose.msra.mxu0 0.0
    %1731 = vmatpush.xpose.msra.mxu0 0.0
    %1732 = vmatpush.xpose.msra.mxu0 0.0
    %1733 = vmatpush.xpose.msra.mxu0 0.0
    %1734 = vmatpush.xpose.msra.mxu0 0.0
    %1735 = vmatpush.xpose.msra.mxu0 0.0
    %1736 = vmatpush.xpose.msra.mxu0 0.0
    %1737 = vmatpush.xpose.msra.mxu0 0.0
    %1738 = vmatpush.xpose.msra.mxu0 0.0
    %1739 = vmatpush.xpose.msra.mxu0 0.0
    %1740 = vmatpush.xpose.msra.mxu0 0.0
    %1741 = vmatpush.xpose.msra.mxu0 %v1724
    %1742 = vmatmul.f32.gmra.mxu0 %v1721
    %v1743 = vpop.f32.mrf.mxu0
    %v1744 = vadd.f32 0.0, %v1743
    %1745 = vdwg.mxu0
    %v1747 = vsel %vm1667, %v652, 0
    %v1750 = vsel %vm1667, %v1024, 0
    %1752 = vmatpush.xpose.msra.mxu0 0.0
    %1753 = vmatpush.xpose.msra.mxu0 0.0
    %1754 = vmatpush.xpose.msra.mxu0 0.0
    %1755 = vmatpush.xpose.msra.mxu0 0.0
    %1756 = vmatpush.xpose.msra.mxu0 0.0
    %1757 = vmatpush.xpose.msra.mxu0 0.0
    %1758 = vmatpush.xpose.msra.mxu0 0.0
    %1759 = vmatpush.xpose.msra.mxu0 0.0
    %1760 = vmatpush.xpose.msra.mxu0 0.0
    %1761 = vmatpush.xpose.msra.mxu0 0.0
    %1762 = vmatpush.xpose.msra.mxu0 0.0
    %1763 = vmatpush.xpose.msra.mxu0 0.0
    %1764 = vmatpush.xpose.msra.mxu0 0.0
    %1765 = vmatpush.xpose.msra.mxu0 0.0
    %1766 = vmatpush.xpose.msra.mxu0 0.0
    %1767 = vmatpush.xpose.msra.mxu0 %v1750
    %1768 = vmatmul.f32.gmra.mxu0 %v1747
    %v1769 = vpop.f32.mrf.mxu0
    %v1770 = vadd.f32 0.0, %v1769
    %1771 = vdwg.mxu0
    %v1773 = vsel %vm1667, %v1072, 0
    %1775 = vmatpush.xpose.msra.mxu0 0.0
    %1776 = vmatpush.xpose.msra.mxu0 0.0
    %1777 = vmatpush.xpose.msra.mxu0 0.0
    %1778 = vmatpush.xpose.msra.mxu0 0.0
    %1779 = vmatpush.xpose.msra.mxu0 0.0
    %1780 = vmatpush.xpose.msra.mxu0 0.0
    %1781 = vmatpush.xpose.msra.mxu0 0.0
    %1782 = vmatpush.xpose.msra.mxu0 0.0
    %1783 = vmatpush.xpose.msra.mxu0 0.0
    %1784 = vmatpush.xpose.msra.mxu0 0.0
    %1785 = vmatpush.xpose.msra.mxu0 0.0
    %1786 = vmatpush.xpose.msra.mxu0 0.0
    %1787 = vmatpush.xpose.msra.mxu0 0.0
    %1788 = vmatpush.xpose.msra.mxu0 0.0
    %1789 = vmatpush.xpose.msra.mxu0 0.0
    %1790 = vmatpush.xpose.msra.mxu0 %v1773
    %1791 = vmatmul.f32.gmra.mxu0 %v1669
    %v1792 = vpop.f32.mrf.mxu0
    %v1793 = vadd.f32 0.0, %v1792
    %1794 = vdwg.mxu0
    %v1796 = vsel %vm1667, %v1074, 0
    %1798 = vmatpush.xpose.msra.mxu0 0.0
    %1799 = vmatpush.xpose.msra.mxu0 0.0
    %1800 = vmatpush.xpose.msra.mxu0 0.0
    %1801 = vmatpush.xpose.msra.mxu0 0.0
    %1802 = vmatpush.xpose.msra.mxu0 0.0
    %1803 = vmatpush.xpose.msra.mxu0 0.0
    %1804 = vmatpush.xpose.msra.mxu0 0.0
    %1805 = vmatpush.xpose.msra.mxu0 0.0
    %1806 = vmatpush.xpose.msra.mxu0 0.0
    %1807 = vmatpush.xpose.msra.mxu0 0.0
    %1808 = vmatpush.xpose.msra.mxu0 0.0
    %1809 = vmatpush.xpose.msra.mxu0 0.0
    %1810 = vmatpush.xpose.msra.mxu0 0.0
    %1811 = vmatpush.xpose.msra.mxu0 0.0
    %1812 = vmatpush.xpose.msra.mxu0 0.0
    %1813 = vmatpush.xpose.msra.mxu0 %v1796
    %1814 = vmatmul.f32.gmra.mxu0 %v1695
    %v1815 = vpop.f32.mrf.mxu0
    %v1816 = vadd.f32 0.0, %v1815
    %1817 = vdwg.mxu0
    %v1819 = vsel %vm1667, %v1076, 0
    %1821 = vmatpush.xpose.msra.mxu0 0.0
    %1822 = vmatpush.xpose.msra.mxu0 0.0
    %1823 = vmatpush.xpose.msra.mxu0 0.0
    %1824 = vmatpush.xpose.msra.mxu0 0.0
    %1825 = vmatpush.xpose.msra.mxu0 0.0
    %1826 = vmatpush.xpose.msra.mxu0 0.0
    %1827 = vmatpush.xpose.msra.mxu0 0.0
    %1828 = vmatpush.xpose.msra.mxu0 0.0
    %1829 = vmatpush.xpose.msra.mxu0 0.0
    %1830 = vmatpush.xpose.msra.mxu0 0.0
    %1831 = vmatpush.xpose.msra.mxu0 0.0
    %1832 = vmatpush.xpose.msra.mxu0 0.0
    %1833 = vmatpush.xpose.msra.mxu0 0.0
    %1834 = vmatpush.xpose.msra.mxu0 0.0
    %1835 = vmatpush.xpose.msra.mxu0 0.0
    %1836 = vmatpush.xpose.msra.mxu0 %v1819
    %1837 = vmatmul.f32.gmra.mxu0 %v1721
    %v1838 = vpop.f32.mrf.mxu0
    %v1839 = vadd.f32 0.0, %v1838
    %1840 = vdwg.mxu0
    %v1842 = vsel %vm1667, %v1078, 0
    %1844 = vmatpush.xpose.msra.mxu0 0.0
    %1845 = vmatpush.xpose.msra.mxu0 0.0
    %1846 = vmatpush.xpose.msra.mxu0 0.0
    %1847 = vmatpush.xpose.msra.mxu0 0.0
    %1848 = vmatpush.xpose.msra.mxu0 0.0
    %1849 = vmatpush.xpose.msra.mxu0 0.0
    %1850 = vmatpush.xpose.msra.mxu0 0.0
    %1851 = vmatpush.xpose.msra.mxu0 0.0
    %1852 = vmatpush.xpose.msra.mxu0 0.0
    %1853 = vmatpush.xpose.msra.mxu0 0.0
    %1854 = vmatpush.xpose.msra.mxu0 0.0
    %1855 = vmatpush.xpose.msra.mxu0 0.0
    %1856 = vmatpush.xpose.msra.mxu0 0.0
    %1857 = vmatpush.xpose.msra.mxu0 0.0
    %1858 = vmatpush.xpose.msra.mxu0 0.0
    %1859 = vmatpush.xpose.msra.mxu0 %v1842
    %1860 = vmatmul.f32.gmra.mxu0 %v1747
    %v1861 = vpop.f32.mrf.mxu0
    %v1862 = vadd.f32 0.0, %v1861
    %1863 = vdwg.mxu0
    %v1865 = vsel %vm1667, %v700, 0
    %v1868 = vsel %vm1667, %v1126, 0
    %1870 = vmatpush.xpose.msra.mxu0 0.0
    %1871 = vmatpush.xpose.msra.mxu0 0.0
    %1872 = vmatpush.xpose.msra.mxu0 0.0
    %1873 = vmatpush.xpose.msra.mxu0 0.0
    %1874 = vmatpush.xpose.msra.mxu0 0.0
    %1875 = vmatpush.xpose.msra.mxu0 0.0
    %1876 = vmatpush.xpose.msra.mxu0 0.0
    %1877 = vmatpush.xpose.msra.mxu0 0.0
    %1878 = vmatpush.xpose.msra.mxu0 0.0
    %1879 = vmatpush.xpose.msra.mxu0 0.0
    %1880 = vmatpush.xpose.msra.mxu0 0.0
    %1881 = vmatpush.xpose.msra.mxu0 0.0
    %1882 = vmatpush.xpose.msra.mxu0 0.0
    %1883 = vmatpush.xpose.msra.mxu0 0.0
    %1884 = vmatpush.xpose.msra.mxu0 0.0
    %1885 = vmatpush.xpose.msra.mxu0 %v1868
    %1886 = vmatmul.f32.gmra.mxu0 %v1865
    %v1887 = vpop.f32.mrf.mxu0
    %v1888 = vadd.f32 0.0, %v1887
    %1889 = vdwg.mxu0
    %v1891 = vsel %vm1667, %v702, 0
    %v1894 = vsel %vm1667, %v1128, 0
    %1896 = vmatpush.xpose.msra.mxu0 0.0
    %1897 = vmatpush.xpose.msra.mxu0 0.0
    %1898 = vmatpush.xpose.msra.mxu0 0.0
    %1899 = vmatpush.xpose.msra.mxu0 0.0
    %1900 = vmatpush.xpose.msra.mxu0 0.0
    %1901 = vmatpush.xpose.msra.mxu0 0.0
    %1902 = vmatpush.xpose.msra.mxu0 0.0
    %1903 = vmatpush.xpose.msra.mxu0 0.0
    %1904 = vmatpush.xpose.msra.mxu0 0.0
    %1905 = vmatpush.xpose.msra.mxu0 0.0
    %1906 = vmatpush.xpose.msra.mxu0 0.0
    %1907 = vmatpush.xpose.msra.mxu0 0.0
    %1908 = vmatpush.xpose.msra.mxu0 0.0
    %1909 = vmatpush.xpose.msra.mxu0 0.0
    %1910 = vmatpush.xpose.msra.mxu0 0.0
    %1911 = vmatpush.xpose.msra.mxu0 %v1894
    %1912 = vmatmul.f32.gmra.mxu0 %v1891
    %v1913 = vpop.f32.mrf.mxu0
    %v1914 = vadd.f32 0.0, %v1913
    %1915 = vdwg.mxu0
    %v1917 = vsel %vm1667, %v704, 0
    %v1920 = vsel %vm1667, %v1130, 0
    %1922 = vmatpush.xpose.msra.mxu0 0.0
    %1923 = vmatpush.xpose.msra.mxu0 0.0
    %1924 = vmatpush.xpose.msra.mxu0 0.0
    %1925 = vmatpush.xpose.msra.mxu0 0.0
    %1926 = vmatpush.xpose.msra.mxu0 0.0
    %1927 = vmatpush.xpose.msra.mxu0 0.0
    %1928 = vmatpush.xpose.msra.mxu0 0.0
    %1929 = vmatpush.xpose.msra.mxu0 0.0
    %1930 = vmatpush.xpose.msra.mxu0 0.0
    %1931 = vmatpush.xpose.msra.mxu0 0.0
    %1932 = vmatpush.xpose.msra.mxu0 0.0
    %1933 = vmatpush.xpose.msra.mxu0 0.0
    %1934 = vmatpush.xpose.msra.mxu0 0.0
    %1935 = vmatpush.xpose.msra.mxu0 0.0
    %1936 = vmatpush.xpose.msra.mxu0 0.0
    %1937 = vmatpush.xpose.msra.mxu0 %v1920
    %1938 = vmatmul.f32.gmra.mxu0 %v1917
    %v1939 = vpop.f32.mrf.mxu0
    %v1940 = vadd.f32 0.0, %v1939
    %1941 = vdwg.mxu0
    %v1943 = vsel %vm1667, %v706, 0
    %v1946 = vsel %vm1667, %v1132, 0
    %1948 = vmatpush.xpose.msra.mxu0 0.0
    %1949 = vmatpush.xpose.msra.mxu0 0.0
    %1950 = vmatpush.xpose.msra.mxu0 0.0
    %1951 = vmatpush.xpose.msra.mxu0 0.0
    %1952 = vmatpush.xpose.msra.mxu0 0.0
    %1953 = vmatpush.xpose.msra.mxu0 0.0
    %1954 = vmatpush.xpose.msra.mxu0 0.0
    %1955 = vmatpush.xpose.msra.mxu0 0.0
    %1956 = vmatpush.xpose.msra.mxu0 0.0
    %1957 = vmatpush.xpose.msra.mxu0 0.0
    %1958 = vmatpush.xpose.msra.mxu0 0.0
    %1959 = vmatpush.xpose.msra.mxu0 0.0
    %1960 = vmatpush.xpose.msra.mxu0 0.0
    %1961 = vmatpush.xpose.msra.mxu0 0.0
    %1962 = vmatpush.xpose.msra.mxu0 0.0
    %1963 = vmatpush.xpose.msra.mxu0 %v1946
    %1964 = vmatmul.f32.gmra.mxu0 %v1943
    %v1965 = vpop.f32.mrf.mxu0
    %v1966 = vadd.f32 0.0, %v1965
    %1967 = vdwg.mxu0
    %v1969 = vsel %vm1667, %v1180, 0
    %1971 = vmatpush.xpose.msra.mxu0 0.0
    %1972 = vmatpush.xpose.msra.mxu0 0.0
    %1973 = vmatpush.xpose.msra.mxu0 0.0
    %1974 = vmatpush.xpose.msra.mxu0 0.0
    %1975 = vmatpush.xpose.msra.mxu0 0.0
    %1976 = vmatpush.xpose.msra.mxu0 0.0
    %1977 = vmatpush.xpose.msra.mxu0 0.0
    %1978 = vmatpush.xpose.msra.mxu0 0.0
    %1979 = vmatpush.xpose.msra.mxu0 0.0
    %1980 = vmatpush.xpose.msra.mxu0 0.0
    %1981 = vmatpush.xpose.msra.mxu0 0.0
    %1982 = vmatpush.xpose.msra.mxu0 0.0
    %1983 = vmatpush.xpose.msra.mxu0 0.0
    %1984 = vmatpush.xpose.msra.mxu0 0.0
    %1985 = vmatpush.xpose.msra.mxu0 0.0
    %1986 = vmatpush.xpose.msra.mxu0 %v1969
    %1987 = vmatmul.f32.gmra.mxu0 %v1865
    %v1988 = vpop.f32.mrf.mxu0
    %v1989 = vadd.f32 0.0, %v1988
    %1990 = vdwg.mxu0
    %v1992 = vsel %vm1667, %v1182, 0
    %1994 = vmatpush.xpose.msra.mxu0 0.0
    %1995 = vmatpush.xpose.msra.mxu0 0.0
    %1996 = vmatpush.xpose.msra.mxu0 0.0
    %1997 = vmatpush.xpose.msra.mxu0 0.0
    %1998 = vmatpush.xpose.msra.mxu0 0.0
    %1999 = vmatpush.xpose.msra.mxu0 0.0
    %2000 = vmatpush.xpose.msra.mxu0 0.0
    %2001 = vmatpush.xpose.msra.mxu0 0.0
    %2002 = vmatpush.xpose.msra.mxu0 0.0
    %2003 = vmatpush.xpose.msra.mxu0 0.0
    %2004 = vmatpush.xpose.msra.mxu0 0.0
    %2005 = vmatpush.xpose.msra.mxu0 0.0
    %2006 = vmatpush.xpose.msra.mxu0 0.0
    %2007 = vmatpush.xpose.msra.mxu0 0.0
    %2008 = vmatpush.xpose.msra.mxu0 0.0
    %2009 = vmatpush.xpose.msra.mxu0 %v1992
    %2010 = vmatmul.f32.gmra.mxu0 %v1891
    %v2011 = vpop.f32.mrf.mxu0
    %v2012 = vadd.f32 0.0, %v2011
    %2013 = vdwg.mxu0
    %v2015 = vsel %vm1667, %v1184, 0
    %2017 = vmatpush.xpose.msra.mxu0 0.0
    %2018 = vmatpush.xpose.msra.mxu0 0.0
    %2019 = vmatpush.xpose.msra.mxu0 0.0
    %2020 = vmatpush.xpose.msra.mxu0 0.0
    %2021 = vmatpush.xpose.msra.mxu0 0.0
    %2022 = vmatpush.xpose.msra.mxu0 0.0
    %2023 = vmatpush.xpose.msra.mxu0 0.0
    %2024 = vmatpush.xpose.msra.mxu0 0.0
    %2025 = vmatpush.xpose.msra.mxu0 0.0
    %2026 = vmatpush.xpose.msra.mxu0 0.0
    %2027 = vmatpush.xpose.msra.mxu0 0.0
    %2028 = vmatpush.xpose.msra.mxu0 0.0
    %2029 = vmatpush.xpose.msra.mxu0 0.0
    %2030 = vmatpush.xpose.msra.mxu0 0.0
    %2031 = vmatpush.xpose.msra.mxu0 0.0
    %2032 = vmatpush.xpose.msra.mxu0 %v2015
    %2033 = vmatmul.f32.gmra.mxu0 %v1917
    %v2034 = vpop.f32.mrf.mxu0
    %v2035 = vadd.f32 0.0, %v2034
    %2036 = vdwg.mxu0
    %v2038 = vsel %vm1667, %v1186, 0
    %2040 = vmatpush.xpose.msra.mxu0 0.0
    %2041 = vmatpush.xpose.msra.mxu0 0.0
    %2042 = vmatpush.xpose.msra.mxu0 0.0
    %2043 = vmatpush.xpose.msra.mxu0 0.0
    %2044 = vmatpush.xpose.msra.mxu0 0.0
    %2045 = vmatpush.xpose.msra.mxu0 0.0
    %2046 = vmatpush.xpose.msra.mxu0 0.0
    %2047 = vmatpush.xpose.msra.mxu0 0.0
    %2048 = vmatpush.xpose.msra.mxu0 0.0
    %2049 = vmatpush.xpose.msra.mxu0 0.0
    %2050 = vmatpush.xpose.msra.mxu0 0.0
    %2051 = vmatpush.xpose.msra.mxu0 0.0
    %2052 = vmatpush.xpose.msra.mxu0 0.0
    %2053 = vmatpush.xpose.msra.mxu0 0.0
    %2054 = vmatpush.xpose.msra.mxu0 0.0
    %2055 = vmatpush.xpose.msra.mxu0 %v2038
    %2056 = vmatmul.f32.gmra.mxu0 %v1943
    %v2057 = vpop.f32.mrf.mxu0
    %v2058 = vadd.f32 0.0, %v2057
    %2059 = vdwg.mxu0
    %v2060 = vmul.f32 %v1692, 0.5
    %v2061 = vmul.f32 %v1718, 0.5
    %v2062 = vmul.f32 %v1744, 0.5
    %v2063 = vmul.f32 %v1770, 0.5
    %v2064 = vmul.f32 %v1793, 0.5
    %v2065 = vmul.f32 %v1816, 0.5
    %v2066 = vmul.f32 %v1839, 0.5
    %v2067 = vmul.f32 %v1862, 0.5
    %v2068 = vmul.f32 %v1888, 0.5
    %v2069 = vmul.f32 %v1914, 0.5
    %v2070 = vmul.f32 %v1940, 0.5
    %v2071 = vmul.f32 %v1966, 0.5
    %v2072 = vmul.f32 %v1989, 0.5
    %v2073 = vmul.f32 %v2012, 0.5
    %v2074 = vmul.f32 %v2035, 0.5
    %v2075 = vmul.f32 %v2058, 0.5
    %vm2076 = vcmask 64512
    %v2077 = vsel %vm2076, %v2060, -inf
    %2078 = vmax.xlane.f32.xlu0 %v2077
    %v2079 = vpop.xlane.xlu0 %2078
    %v2080 = vsel %vm2076, %v2061, -inf
    %2081 = vmax.xlane.f32.xlu0 %v2080
    %v2082 = vpop.xlane.xlu0 %2081
    %v2083 = vsel %vm2076, %v2062, -inf
    %2084 = vmax.xlane.f32.xlu0 %v2083
    %v2085 = vpop.xlane.xlu0 %2084
    %v2086 = vsel %vm2076, %v2063, -inf
    %2087 = vmax.xlane.f32.xlu0 %v2086
    %v2088 = vpop.xlane.xlu0 %2087
    %v2089 = vsel %vm2076, %v2064, -inf
    %2090 = vmax.xlane.f32.xlu0 %v2089
    %v2091 = vpop.xlane.xlu0 %2090
    %v2092 = vsel %vm2076, %v2065, -inf
    %2093 = vmax.xlane.f32.xlu0 %v2092
    %v2094 = vpop.xlane.xlu0 %2093
    %v2095 = vsel %vm2076, %v2066, -inf
    %2096 = vmax.xlane.f32.xlu0 %v2095
    %v2097 = vpop.xlane.xlu0 %2096
    %v2098 = vsel %vm2076, %v2067, -inf
    %2099 = vmax.xlane.f32.xlu0 %v2098
    %v2100 = vpop.xlane.xlu0 %2099
    %v2101 = vsel %vm2076, %v2068, -inf
    %2102 = vmax.xlane.f32.xlu0 %v2101
    %v2103 = vpop.xlane.xlu0 %2102
    %v2104 = vsel %vm2076, %v2069, -inf
    %2105 = vmax.xlane.f32.xlu0 %v2104
    %v2106 = vpop.xlane.xlu0 %2105
    %v2107 = vsel %vm2076, %v2070, -inf
    %2108 = vmax.xlane.f32.xlu0 %v2107
    %v2109 = vpop.xlane.xlu0 %2108
    %v2110 = vsel %vm2076, %v2071, -inf
    %2111 = vmax.xlane.f32.xlu0 %v2110
    %v2112 = vpop.xlane.xlu0 %2111
    %v2113 = vsel %vm2076, %v2072, -inf
    %2114 = vmax.xlane.f32.xlu0 %v2113
    %v2115 = vpop.xlane.xlu0 %2114
    %v2116 = vsel %vm2076, %v2073, -inf
    %2117 = vmax.xlane.f32.xlu0 %v2116
    %v2118 = vpop.xlane.xlu0 %2117
    %v2119 = vsel %vm2076, %v2074, -inf
    %2120 = vmax.xlane.f32.xlu0 %v2119
    %v2121 = vpop.xlane.xlu0 %2120
    %v2122 = vsel %vm2076, %v2075, -inf
    %2123 = vmax.xlane.f32.xlu0 %v2122
    %v2124 = vpop.xlane.xlu0 %2123
    %v2125 = vsub.f32 %v2060, %v2079
    %v2126 = vsub.f32 %v2061, %v2082
    %v2127 = vsub.f32 %v2062, %v2085
    %v2128 = vsub.f32 %v2063, %v2088
    %v2129 = vsub.f32 %v2064, %v2091
    %v2130 = vsub.f32 %v2065, %v2094
    %v2131 = vsub.f32 %v2066, %v2097
    %v2132 = vsub.f32 %v2067, %v2100
    %v2133 = vsub.f32 %v2068, %v2103
    %v2134 = vsub.f32 %v2069, %v2106
    %v2135 = vsub.f32 %v2070, %v2109
    %v2136 = vsub.f32 %v2071, %v2112
    %v2137 = vsub.f32 %v2072, %v2115
    %v2138 = vsub.f32 %v2073, %v2118
    %v2139 = vsub.f32 %v2074, %v2121
    %v2140 = vsub.f32 %v2075, %v2124
    %v2141 = vmul.f32 %v2125, 1.442695
    %v2142 = vpow.pop %v2141
    %v2143 = vmul.f32 %v2126, 1.442695
    %v2144 = vpow.pop %v2143
    %v2145 = vmul.f32 %v2127, 1.442695
    %v2146 = vpow.pop %v2145
    %v2147 = vmul.f32 %v2128, 1.442695
    %v2148 = vpow.pop %v2147
    %v2149 = vmul.f32 %v2129, 1.442695
    %v2150 = vpow.pop %v2149
    %v2151 = vmul.f32 %v2130, 1.442695
    %v2152 = vpow.pop %v2151
    %v2153 = vmul.f32 %v2131, 1.442695
    %v2154 = vpow.pop %v2153
    %v2155 = vmul.f32 %v2132, 1.442695
    %v2156 = vpow.pop %v2155
    %v2157 = vmul.f32 %v2133, 1.442695
    %v2158 = vpow.pop %v2157
    %v2159 = vmul.f32 %v2134, 1.442695
    %v2160 = vpow.pop %v2159
    %v2161 = vmul.f32 %v2135, 1.442695
    %v2162 = vpow.pop %v2161
    %v2163 = vmul.f32 %v2136, 1.442695
    %v2164 = vpow.pop %v2163
    %v2165 = vmul.f32 %v2137, 1.442695
    %v2166 = vpow.pop %v2165
    %v2167 = vmul.f32 %v2138, 1.442695
    %v2168 = vpow.pop %v2167
    %v2169 = vmul.f32 %v2139, 1.442695
    %v2170 = vpow.pop %v2169
    %v2171 = vmul.f32 %v2140, 1.442695
    %v2172 = vpow.pop %v2171
    %v2173 = vsel %vm2076, %v2142, 0.0
    %2174 = vadd.xlane.f32.xlu0 %v2173
    %v2175 = vpop.xlane.xlu0 %2174
    %v2176 = vsel %vm2076, %v2144, 0.0
    %2177 = vadd.xlane.f32.xlu0 %v2176
    %v2178 = vpop.xlane.xlu0 %2177
    %v2179 = vsel %vm2076, %v2146, 0.0
    %2180 = vadd.xlane.f32.xlu0 %v2179
    %v2181 = vpop.xlane.xlu0 %2180
    %v2182 = vsel %vm2076, %v2148, 0.0
    %2183 = vadd.xlane.f32.xlu0 %v2182
    %v2184 = vpop.xlane.xlu0 %2183
    %v2185 = vsel %vm2076, %v2150, 0.0
    %2186 = vadd.xlane.f32.xlu0 %v2185
    %v2187 = vpop.xlane.xlu0 %2186
    %v2188 = vsel %vm2076, %v2152, 0.0
    %2189 = vadd.xlane.f32.xlu0 %v2188
    %v2190 = vpop.xlane.xlu0 %2189
    %v2191 = vsel %vm2076, %v2154, 0.0
    %2192 = vadd.xlane.f32.xlu0 %v2191
    %v2193 = vpop.xlane.xlu0 %2192
    %v2194 = vsel %vm2076, %v2156, 0.0
    %2195 = vadd.xlane.f32.xlu0 %v2194
    %v2196 = vpop.xlane.xlu0 %2195
    %v2197 = vsel %vm2076, %v2158, 0.0
    %2198 = vadd.xlane.f32.xlu0 %v2197
    %v2199 = vpop.xlane.xlu0 %2198
    %v2200 = vsel %vm2076, %v2160, 0.0
    %2201 = vadd.xlane.f32.xlu0 %v2200
    %v2202 = vpop.xlane.xlu0 %2201
    %v2203 = vsel %vm2076, %v2162, 0.0
    %2204 = vadd.xlane.f32.xlu0 %v2203
    %v2205 = vpop.xlane.xlu0 %2204
    %v2206 = vsel %vm2076, %v2164, 0.0
    %2207 = vadd.xlane.f32.xlu0 %v2206
    %v2208 = vpop.xlane.xlu0 %2207
    %v2209 = vsel %vm2076, %v2166, 0.0
    %2210 = vadd.xlane.f32.xlu0 %v2209
    %v2211 = vpop.xlane.xlu0 %2210
    %v2212 = vsel %vm2076, %v2168, 0.0
    %2213 = vadd.xlane.f32.xlu0 %v2212
    %v2214 = vpop.xlane.xlu0 %2213
    %v2215 = vsel %vm2076, %v2170, 0.0
    %2216 = vadd.xlane.f32.xlu0 %v2215
    %v2217 = vpop.xlane.xlu0 %2216
    %v2218 = vsel %vm2076, %v2172, 0.0
    %2219 = vadd.xlane.f32.xlu0 %v2218
    %v2220 = vpop.xlane.xlu0 %2219
    %v2221 = vrcp.pop %v2175
    %v2222 = vrcp.pop %v2178
    %v2223 = vrcp.pop %v2181
    %v2224 = vrcp.pop %v2184
    %v2225 = vrcp.pop %v2187
    %v2226 = vrcp.pop %v2190
    %v2227 = vrcp.pop %v2193
    %v2228 = vrcp.pop %v2196
    %v2229 = vrcp.pop %v2199
    %v2230 = vrcp.pop %v2202
    %v2231 = vrcp.pop %v2205
    %v2232 = vrcp.pop %v2208
    %v2233 = vrcp.pop %v2211
    %v2234 = vrcp.pop %v2214
    %v2235 = vrcp.pop %v2217
    %v2236 = vrcp.pop %v2220
    %v2237 = vmul.f32 %v2142, %v2221
    %v2238 = vmul.f32 %v2144, %v2222
    %v2239 = vmul.f32 %v2146, %v2223
    %v2240 = vmul.f32 %v2148, %v2224
    %v2241 = vmul.f32 %v2150, %v2225
    %v2242 = vmul.f32 %v2152, %v2226
    %v2243 = vmul.f32 %v2154, %v2227
    %v2244 = vmul.f32 %v2156, %v2228
    %v2245 = vmul.f32 %v2158, %v2229
    %v2246 = vmul.f32 %v2160, %v2230
    %v2247 = vmul.f32 %v2162, %v2231
    %v2248 = vmul.f32 %v2164, %v2232
    %v2249 = vmul.f32 %v2166, %v2233
    %v2250 = vmul.f32 %v2168, %v2234
    %v2251 = vmul.f32 %v2170, %v2235
    %v2252 = vmul.f32 %v2172, %v2236
    %v2254 = vsel %vm2076, %v2237, 0
    %2256 = vmatpush.msra.mxu0 0.0
    %2257 = vmatpush.msra.mxu0 0.0
    %2258 = vmatpush.msra.mxu0 0.0
    %2259 = vmatpush.msra.mxu0 0.0
    %2260 = vmatpush.msra.mxu0 0.0
    %2261 = vmatpush.msra.mxu0 0.0
    %2262 = vmatpush.msra.mxu0 0.0
    %2263 = vmatpush.msra.mxu0 0.0
    %2264 = vmatpush.msra.mxu0 0.0
    %2265 = vmatpush.msra.mxu0 0.0
    %2266 = vmatpush.msra.mxu0 0.0
    %2267 = vmatpush.msra.mxu0 0.0
    %2268 = vmatpush.msra.mxu0 0.0
    %2269 = vmatpush.msra.mxu0 0.0
    %2270 = vmatpush.msra.mxu0 0.0
    %2271 = vmatpush.msra.mxu0 %v1498
    %2272 = vmatmul.f32.gmra.mxu0 %v2254
    %v2273 = vpop.f32.mrf.mxu0
    %v2274 = vadd.f32 0.0, %v2273
    %2275 = vdwg.mxu0
    %v2277 = vsel %vm2076, %v2238, 0
    %2279 = vmatpush.msra.mxu0 0.0
    %2280 = vmatpush.msra.mxu0 0.0
    %2281 = vmatpush.msra.mxu0 0.0
    %2282 = vmatpush.msra.mxu0 0.0
    %2283 = vmatpush.msra.mxu0 0.0
    %2284 = vmatpush.msra.mxu0 0.0
    %2285 = vmatpush.msra.mxu0 0.0
    %2286 = vmatpush.msra.mxu0 0.0
    %2287 = vmatpush.msra.mxu0 0.0
    %2288 = vmatpush.msra.mxu0 0.0
    %2289 = vmatpush.msra.mxu0 0.0
    %2290 = vmatpush.msra.mxu0 0.0
    %2291 = vmatpush.msra.mxu0 0.0
    %2292 = vmatpush.msra.mxu0 0.0
    %2293 = vmatpush.msra.mxu0 0.0
    %2294 = vmatpush.msra.mxu0 %v1500
    %2295 = vmatmul.f32.gmra.mxu0 %v2277
    %v2296 = vpop.f32.mrf.mxu0
    %v2297 = vadd.f32 0.0, %v2296
    %2298 = vdwg.mxu0
    %v2300 = vsel %vm2076, %v2239, 0
    %2302 = vmatpush.msra.mxu0 0.0
    %2303 = vmatpush.msra.mxu0 0.0
    %2304 = vmatpush.msra.mxu0 0.0
    %2305 = vmatpush.msra.mxu0 0.0
    %2306 = vmatpush.msra.mxu0 0.0
    %2307 = vmatpush.msra.mxu0 0.0
    %2308 = vmatpush.msra.mxu0 0.0
    %2309 = vmatpush.msra.mxu0 0.0
    %2310 = vmatpush.msra.mxu0 0.0
    %2311 = vmatpush.msra.mxu0 0.0
    %2312 = vmatpush.msra.mxu0 0.0
    %2313 = vmatpush.msra.mxu0 0.0
    %2314 = vmatpush.msra.mxu0 0.0
    %2315 = vmatpush.msra.mxu0 0.0
    %2316 = vmatpush.msra.mxu0 0.0
    %2317 = vmatpush.msra.mxu0 %v1502
    %2318 = vmatmul.f32.gmra.mxu0 %v2300
    %v2319 = vpop.f32.mrf.mxu0
    %v2320 = vadd.f32 0.0, %v2319
    %2321 = vdwg.mxu0
    %v2323 = vsel %vm2076, %v2240, 0
    %2325 = vmatpush.msra.mxu0 0.0
    %2326 = vmatpush.msra.mxu0 0.0
    %2327 = vmatpush.msra.mxu0 0.0
    %2328 = vmatpush.msra.mxu0 0.0
    %2329 = vmatpush.msra.mxu0 0.0
    %2330 = vmatpush.msra.mxu0 0.0
    %2331 = vmatpush.msra.mxu0 0.0
    %2332 = vmatpush.msra.mxu0 0.0
    %2333 = vmatpush.msra.mxu0 0.0
    %2334 = vmatpush.msra.mxu0 0.0
    %2335 = vmatpush.msra.mxu0 0.0
    %2336 = vmatpush.msra.mxu0 0.0
    %2337 = vmatpush.msra.mxu0 0.0
    %2338 = vmatpush.msra.mxu0 0.0
    %2339 = vmatpush.msra.mxu0 0.0
    %2340 = vmatpush.msra.mxu0 %v1504
    %2341 = vmatmul.f32.gmra.mxu0 %v2323
    %v2342 = vpop.f32.mrf.mxu0
    %v2343 = vadd.f32 0.0, %v2342
    %2344 = vdwg.mxu0
    %v2346 = vsel %vm2076, %v2241, 0
    %2348 = vmatpush.msra.mxu0 0.0
    %2349 = vmatpush.msra.mxu0 0.0
    %2350 = vmatpush.msra.mxu0 0.0
    %2351 = vmatpush.msra.mxu0 0.0
    %2352 = vmatpush.msra.mxu0 0.0
    %2353 = vmatpush.msra.mxu0 0.0
    %2354 = vmatpush.msra.mxu0 0.0
    %2355 = vmatpush.msra.mxu0 0.0
    %2356 = vmatpush.msra.mxu0 0.0
    %2357 = vmatpush.msra.mxu0 0.0
    %2358 = vmatpush.msra.mxu0 0.0
    %2359 = vmatpush.msra.mxu0 0.0
    %2360 = vmatpush.msra.mxu0 0.0
    %2361 = vmatpush.msra.mxu0 0.0
    %2362 = vmatpush.msra.mxu0 0.0
    %2363 = vmatpush.msra.mxu0 %v1552
    %2364 = vmatmul.f32.gmra.mxu0 %v2346
    %v2365 = vpop.f32.mrf.mxu0
    %v2366 = vadd.f32 0.0, %v2365
    %2367 = vdwg.mxu0
    %v2369 = vsel %vm2076, %v2242, 0
    %2371 = vmatpush.msra.mxu0 0.0
    %2372 = vmatpush.msra.mxu0 0.0
    %2373 = vmatpush.msra.mxu0 0.0
    %2374 = vmatpush.msra.mxu0 0.0
    %2375 = vmatpush.msra.mxu0 0.0
    %2376 = vmatpush.msra.mxu0 0.0
    %2377 = vmatpush.msra.mxu0 0.0
    %2378 = vmatpush.msra.mxu0 0.0
    %2379 = vmatpush.msra.mxu0 0.0
    %2380 = vmatpush.msra.mxu0 0.0
    %2381 = vmatpush.msra.mxu0 0.0
    %2382 = vmatpush.msra.mxu0 0.0
    %2383 = vmatpush.msra.mxu0 0.0
    %2384 = vmatpush.msra.mxu0 0.0
    %2385 = vmatpush.msra.mxu0 0.0
    %2386 = vmatpush.msra.mxu0 %v1554
    %2387 = vmatmul.f32.gmra.mxu0 %v2369
    %v2388 = vpop.f32.mrf.mxu0
    %v2389 = vadd.f32 0.0, %v2388
    %2390 = vdwg.mxu0
    %v2392 = vsel %vm2076, %v2243, 0
    %2394 = vmatpush.msra.mxu0 0.0
    %2395 = vmatpush.msra.mxu0 0.0
    %2396 = vmatpush.msra.mxu0 0.0
    %2397 = vmatpush.msra.mxu0 0.0
    %2398 = vmatpush.msra.mxu0 0.0
    %2399 = vmatpush.msra.mxu0 0.0
    %2400 = vmatpush.msra.mxu0 0.0
    %2401 = vmatpush.msra.mxu0 0.0
    %2402 = vmatpush.msra.mxu0 0.0
    %2403 = vmatpush.msra.mxu0 0.0
    %2404 = vmatpush.msra.mxu0 0.0
    %2405 = vmatpush.msra.mxu0 0.0
    %2406 = vmatpush.msra.mxu0 0.0
    %2407 = vmatpush.msra.mxu0 0.0
    %2408 = vmatpush.msra.mxu0 0.0
    %2409 = vmatpush.msra.mxu0 %v1556
    %2410 = vmatmul.f32.gmra.mxu0 %v2392
    %v2411 = vpop.f32.mrf.mxu0
    %v2412 = vadd.f32 0.0, %v2411
    %2413 = vdwg.mxu0
    %v2415 = vsel %vm2076, %v2244, 0
    %2417 = vmatpush.msra.mxu0 0.0
    %2418 = vmatpush.msra.mxu0 0.0
    %2419 = vmatpush.msra.mxu0 0.0
    %2420 = vmatpush.msra.mxu0 0.0
    %2421 = vmatpush.msra.mxu0 0.0
    %2422 = vmatpush.msra.mxu0 0.0
    %2423 = vmatpush.msra.mxu0 0.0
    %2424 = vmatpush.msra.mxu0 0.0
    %2425 = vmatpush.msra.mxu0 0.0
    %2426 = vmatpush.msra.mxu0 0.0
    %2427 = vmatpush.msra.mxu0 0.0
    %2428 = vmatpush.msra.mxu0 0.0
    %2429 = vmatpush.msra.mxu0 0.0
    %2430 = vmatpush.msra.mxu0 0.0
    %2431 = vmatpush.msra.mxu0 0.0
    %2432 = vmatpush.msra.mxu0 %v1558
    %2433 = vmatmul.f32.gmra.mxu0 %v2415
    %v2434 = vpop.f32.mrf.mxu0
    %v2435 = vadd.f32 0.0, %v2434
    %2436 = vdwg.mxu0
    %v2438 = vsel %vm2076, %v2245, 0
    %2440 = vmatpush.msra.mxu0 0.0
    %2441 = vmatpush.msra.mxu0 0.0
    %2442 = vmatpush.msra.mxu0 0.0
    %2443 = vmatpush.msra.mxu0 0.0
    %2444 = vmatpush.msra.mxu0 0.0
    %2445 = vmatpush.msra.mxu0 0.0
    %2446 = vmatpush.msra.mxu0 0.0
    %2447 = vmatpush.msra.mxu0 0.0
    %2448 = vmatpush.msra.mxu0 0.0
    %2449 = vmatpush.msra.mxu0 0.0
    %2450 = vmatpush.msra.mxu0 0.0
    %2451 = vmatpush.msra.mxu0 0.0
    %2452 = vmatpush.msra.mxu0 0.0
    %2453 = vmatpush.msra.mxu0 0.0
    %2454 = vmatpush.msra.mxu0 0.0
    %2455 = vmatpush.msra.mxu0 %v1606
    %2456 = vmatmul.f32.gmra.mxu0 %v2438
    %v2457 = vpop.f32.mrf.mxu0
    %v2458 = vadd.f32 0.0, %v2457
    %2459 = vdwg.mxu0
    %v2461 = vsel %vm2076, %v2246, 0
    %2463 = vmatpush.msra.mxu0 0.0
    %2464 = vmatpush.msra.mxu0 0.0
    %2465 = vmatpush.msra.mxu0 0.0
    %2466 = vmatpush.msra.mxu0 0.0
    %2467 = vmatpush.msra.mxu0 0.0
    %2468 = vmatpush.msra.mxu0 0.0
    %2469 = vmatpush.msra.mxu0 0.0
    %2470 = vmatpush.msra.mxu0 0.0
    %2471 = vmatpush.msra.mxu0 0.0
    %2472 = vmatpush.msra.mxu0 0.0
    %2473 = vmatpush.msra.mxu0 0.0
    %2474 = vmatpush.msra.mxu0 0.0
    %2475 = vmatpush.msra.mxu0 0.0
    %2476 = vmatpush.msra.mxu0 0.0
    %2477 = vmatpush.msra.mxu0 0.0
    %2478 = vmatpush.msra.mxu0 %v1608
    %2479 = vmatmul.f32.gmra.mxu0 %v2461
    %v2480 = vpop.f32.mrf.mxu0
    %v2481 = vadd.f32 0.0, %v2480
    %2482 = vdwg.mxu0
    %v2484 = vsel %vm2076, %v2247, 0
    %2486 = vmatpush.msra.mxu0 0.0
    %2487 = vmatpush.msra.mxu0 0.0
    %2488 = vmatpush.msra.mxu0 0.0
    %2489 = vmatpush.msra.mxu0 0.0
    %2490 = vmatpush.msra.mxu0 0.0
    %2491 = vmatpush.msra.mxu0 0.0
    %2492 = vmatpush.msra.mxu0 0.0
    %2493 = vmatpush.msra.mxu0 0.0
    %2494 = vmatpush.msra.mxu0 0.0
    %2495 = vmatpush.msra.mxu0 0.0
    %2496 = vmatpush.msra.mxu0 0.0
    %2497 = vmatpush.msra.mxu0 0.0
    %2498 = vmatpush.msra.mxu0 0.0
    %2499 = vmatpush.msra.mxu0 0.0
    %2500 = vmatpush.msra.mxu0 0.0
    %2501 = vmatpush.msra.mxu0 %v1610
    %2502 = vmatmul.f32.gmra.mxu0 %v2484
    %v2503 = vpop.f32.mrf.mxu0
    %v2504 = vadd.f32 0.0, %v2503
    %2505 = vdwg.mxu0
    %v2507 = vsel %vm2076, %v2248, 0
    %2509 = vmatpush.msra.mxu0 0.0
    %2510 = vmatpush.msra.mxu0 0.0
    %2511 = vmatpush.msra.mxu0 0.0
    %2512 = vmatpush.msra.mxu0 0.0
    %2513 = vmatpush.msra.mxu0 0.0
    %2514 = vmatpush.msra.mxu0 0.0
    %2515 = vmatpush.msra.mxu0 0.0
    %2516 = vmatpush.msra.mxu0 0.0
    %2517 = vmatpush.msra.mxu0 0.0
    %2518 = vmatpush.msra.mxu0 0.0
    %2519 = vmatpush.msra.mxu0 0.0
    %2520 = vmatpush.msra.mxu0 0.0
    %2521 = vmatpush.msra.mxu0 0.0
    %2522 = vmatpush.msra.mxu0 0.0
    %2523 = vmatpush.msra.mxu0 0.0
    %2524 = vmatpush.msra.mxu0 %v1612
    %2525 = vmatmul.f32.gmra.mxu0 %v2507
    %v2526 = vpop.f32.mrf.mxu0
    %v2527 = vadd.f32 0.0, %v2526
    %2528 = vdwg.mxu0
    %v2530 = vsel %vm2076, %v2249, 0
    %2532 = vmatpush.msra.mxu0 0.0
    %2533 = vmatpush.msra.mxu0 0.0
    %2534 = vmatpush.msra.mxu0 0.0
    %2535 = vmatpush.msra.mxu0 0.0
    %2536 = vmatpush.msra.mxu0 0.0
    %2537 = vmatpush.msra.mxu0 0.0
    %2538 = vmatpush.msra.mxu0 0.0
    %2539 = vmatpush.msra.mxu0 0.0
    %2540 = vmatpush.msra.mxu0 0.0
    %2541 = vmatpush.msra.mxu0 0.0
    %2542 = vmatpush.msra.mxu0 0.0
    %2543 = vmatpush.msra.mxu0 0.0
    %2544 = vmatpush.msra.mxu0 0.0
    %2545 = vmatpush.msra.mxu0 0.0
    %2546 = vmatpush.msra.mxu0 0.0
    %2547 = vmatpush.msra.mxu0 %v1660
    %2548 = vmatmul.f32.gmra.mxu0 %v2530
    %v2549 = vpop.f32.mrf.mxu0
    %v2550 = vadd.f32 0.0, %v2549
    %2551 = vdwg.mxu0
    %v2553 = vsel %vm2076, %v2250, 0
    %2555 = vmatpush.msra.mxu0 0.0
    %2556 = vmatpush.msra.mxu0 0.0
    %2557 = vmatpush.msra.mxu0 0.0
    %2558 = vmatpush.msra.mxu0 0.0
    %2559 = vmatpush.msra.mxu0 0.0
    %2560 = vmatpush.msra.mxu0 0.0
    %2561 = vmatpush.msra.mxu0 0.0
    %2562 = vmatpush.msra.mxu0 0.0
    %2563 = vmatpush.msra.mxu0 0.0
    %2564 = vmatpush.msra.mxu0 0.0
    %2565 = vmatpush.msra.mxu0 0.0
    %2566 = vmatpush.msra.mxu0 0.0
    %2567 = vmatpush.msra.mxu0 0.0
    %2568 = vmatpush.msra.mxu0 0.0
    %2569 = vmatpush.msra.mxu0 0.0
    %2570 = vmatpush.msra.mxu0 %v1662
    %2571 = vmatmul.f32.gmra.mxu0 %v2553
    %v2572 = vpop.f32.mrf.mxu0
    %v2573 = vadd.f32 0.0, %v2572
    %2574 = vdwg.mxu0
    %v2576 = vsel %vm2076, %v2251, 0
    %2578 = vmatpush.msra.mxu0 0.0
    %2579 = vmatpush.msra.mxu0 0.0
    %2580 = vmatpush.msra.mxu0 0.0
    %2581 = vmatpush.msra.mxu0 0.0
    %2582 = vmatpush.msra.mxu0 0.0
    %2583 = vmatpush.msra.mxu0 0.0
    %2584 = vmatpush.msra.mxu0 0.0
    %2585 = vmatpush.msra.mxu0 0.0
    %2586 = vmatpush.msra.mxu0 0.0
    %2587 = vmatpush.msra.mxu0 0.0
    %2588 = vmatpush.msra.mxu0 0.0
    %2589 = vmatpush.msra.mxu0 0.0
    %2590 = vmatpush.msra.mxu0 0.0
    %2591 = vmatpush.msra.mxu0 0.0
    %2592 = vmatpush.msra.mxu0 0.0
    %2593 = vmatpush.msra.mxu0 %v1664
    %2594 = vmatmul.f32.gmra.mxu0 %v2576
    %v2595 = vpop.f32.mrf.mxu0
    %v2596 = vadd.f32 0.0, %v2595
    %2597 = vdwg.mxu0
    %v2599 = vsel %vm2076, %v2252, 0
    %2601 = vmatpush.msra.mxu0 0.0
    %2602 = vmatpush.msra.mxu0 0.0
    %2603 = vmatpush.msra.mxu0 0.0
    %2604 = vmatpush.msra.mxu0 0.0
    %2605 = vmatpush.msra.mxu0 0.0
    %2606 = vmatpush.msra.mxu0 0.0
    %2607 = vmatpush.msra.mxu0 0.0
    %2608 = vmatpush.msra.mxu0 0.0
    %2609 = vmatpush.msra.mxu0 0.0
    %2610 = vmatpush.msra.mxu0 0.0
    %2611 = vmatpush.msra.mxu0 0.0
    %2612 = vmatpush.msra.mxu0 0.0
    %2613 = vmatpush.msra.mxu0 0.0
    %2614 = vmatpush.msra.mxu0 0.0
    %2615 = vmatpush.msra.mxu0 0.0
    %2616 = vmatpush.msra.mxu0 %v1666
    %2617 = vmatmul.f32.gmra.mxu0 %v2599
    %v2618 = vpop.f32.mrf.mxu0
    %v2619 = vadd.f32 0.0, %v2618
    %2620 = vdwg.mxu0
    %v2621 = vrot.slane %v2320, 4
    %v2622 = vsel %vm487, %v2621, %v2274
    %v2623 = vrot.slane %v2274, 4
    %v2624 = vsel %vm487, %v2320, %v2623
    %v2626 = vunpack.c.l.s4 1983009808
    %v2627 = vunpack.c.0.s8 %v2626
    %v2628 = vperm.slane %v2622, %v2627
    %v2630 = vunpack.c.l.s4 1983009808
    %v2631 = vunpack.c.0.s8 %v2630
    %v2632 = vperm.slane %v2624, %v2631
    %v2633 = vrot.slane %v2343, 4
    %v2634 = vsel %vm487, %v2633, %v2297
    %v2635 = vrot.slane %v2297, 4
    %v2636 = vsel %vm487, %v2343, %v2635
    %v2638 = vunpack.c.l.s4 1983009808
    %v2639 = vunpack.c.0.s8 %v2638
    %v2640 = vperm.slane %v2634, %v2639
    %v2642 = vunpack.c.l.s4 1983009808
    %v2643 = vunpack.c.0.s8 %v2642
    %v2644 = vperm.slane %v2636, %v2643
    %v2645 = vrot.slane %v2640, 4
    %v2646 = vsel %vm487, %v2645, %v2628
    %v2647 = vrot.slane %v2628, 4
    %v2648 = vsel %vm487, %v2640, %v2647
    %v2650 = vunpack.c.l.s4 1934713408
    %v2651 = vunpack.c.0.s8 %v2650
    %v2652 = vperm.slane %v2646, %v2651
    %v2654 = vunpack.c.l.s4 1934713408
    %v2655 = vunpack.c.0.s8 %v2654
    %v2656 = vperm.slane %v2648, %v2655
    %v2657 = vrot.slane %v2644, 4
    %v2658 = vsel %vm487, %v2657, %v2632
    %v2659 = vrot.slane %v2632, 4
    %v2660 = vsel %vm487, %v2644, %v2659
    %v2662 = vunpack.c.l.s4 1934713408
    %v2663 = vunpack.c.0.s8 %v2662
    %v2664 = vperm.slane %v2658, %v2663
    %v2666 = vunpack.c.l.s4 1934713408
    %v2667 = vunpack.c.0.s8 %v2666
    %v2668 = vperm.slane %v2660, %v2667
    %v2669 = vrot.slane %v2652, 4
    %v2670 = vsel %vm487, 0.0, %v2669
    %v2671 = vrot.slane %v2656, 4
    %v2672 = vsel %vm487, 0.0, %v2671
    %v2673 = vrot.slane %v2664, 4
    %v2674 = vsel %vm487, 0.0, %v2673
    %v2675 = vrot.slane %v2668, 4
    %v2676 = vsel %vm487, 0.0, %v2675
    %v2677 = vrot.slane %v2412, 4
    %v2678 = vsel %vm487, %v2677, %v2366
    %v2679 = vrot.slane %v2366, 4
    %v2680 = vsel %vm487, %v2412, %v2679
    %v2682 = vunpack.c.l.s4 1983009808
    %v2683 = vunpack.c.0.s8 %v2682
    %v2684 = vperm.slane %v2678, %v2683
    %v2686 = vunpack.c.l.s4 1983009808
    %v2687 = vunpack.c.0.s8 %v2686
    %v2688 = vperm.slane %v2680, %v2687
    %v2689 = vrot.slane %v2435, 4
    %v2690 = vsel %vm487, %v2689, %v2389
    %v2691 = vrot.slane %v2389, 4
    %v2692 = vsel %vm487, %v2435, %v2691
    %v2694 = vunpack.c.l.s4 1983009808
    %v2695 = vunpack.c.0.s8 %v2694
    %v2696 = vperm.slane %v2690, %v2695
    %v2698 = vunpack.c.l.s4 1983009808
    %v2699 = vunpack.c.0.s8 %v2698
    %v2700 = vperm.slane %v2692, %v2699
    %v2701 = vrot.slane %v2696, 4
    %v2702 = vsel %vm487, %v2701, %v2684
    %v2703 = vrot.slane %v2684, 4
    %v2704 = vsel %vm487, %v2696, %v2703
    %v2706 = vunpack.c.l.s4 1934713408
    %v2707 = vunpack.c.0.s8 %v2706
    %v2708 = vperm.slane %v2702, %v2707
    %v2710 = vunpack.c.l.s4 1934713408
    %v2711 = vunpack.c.0.s8 %v2710
    %v2712 = vperm.slane %v2704, %v2711
    %v2713 = vrot.slane %v2700, 4
    %v2714 = vsel %vm487, %v2713, %v2688
    %v2715 = vrot.slane %v2688, 4
    %v2716 = vsel %vm487, %v2700, %v2715
    %v2718 = vunpack.c.l.s4 1934713408
    %v2719 = vunpack.c.0.s8 %v2718
    %v2720 = vperm.slane %v2714, %v2719
    %v2722 = vunpack.c.l.s4 1934713408
    %v2723 = vunpack.c.0.s8 %v2722
    %v2724 = vperm.slane %v2716, %v2723
    %v2725 = vrot.slane %v2708, 4
    %v2726 = vsel %vm487, 0.0, %v2725
    %v2727 = vrot.slane %v2712, 4
    %v2728 = vsel %vm487, 0.0, %v2727
    %v2729 = vrot.slane %v2720, 4
    %v2730 = vsel %vm487, 0.0, %v2729
    %v2731 = vrot.slane %v2724, 4
    %v2732 = vsel %vm487, 0.0, %v2731
    %v2733 = vrot.slane %v2504, 4
    %v2734 = vsel %vm487, %v2733, %v2458
    %v2735 = vrot.slane %v2458, 4
    %v2736 = vsel %vm487, %v2504, %v2735
    %v2738 = vunpack.c.l.s4 1983009808
    %v2739 = vunpack.c.0.s8 %v2738
    %v2740 = vperm.slane %v2734, %v2739
    %v2742 = vunpack.c.l.s4 1983009808
    %v2743 = vunpack.c.0.s8 %v2742
    %v2744 = vperm.slane %v2736, %v2743
    %v2745 = vrot.slane %v2527, 4
    %v2746 = vsel %vm487, %v2745, %v2481
    %v2747 = vrot.slane %v2481, 4
    %v2748 = vsel %vm487, %v2527, %v2747
    %v2750 = vunpack.c.l.s4 1983009808
    %v2751 = vunpack.c.0.s8 %v2750
    %v2752 = vperm.slane %v2746, %v2751
    %v2754 = vunpack.c.l.s4 1983009808
    %v2755 = vunpack.c.0.s8 %v2754
    %v2756 = vperm.slane %v2748, %v2755
    %v2757 = vrot.slane %v2752, 4
    %v2758 = vsel %vm487, %v2757, %v2740
    %v2759 = vrot.slane %v2740, 4
    %v2760 = vsel %vm487, %v2752, %v2759
    %v2762 = vunpack.c.l.s4 1934713408
    %v2763 = vunpack.c.0.s8 %v2762
    %v2764 = vperm.slane %v2758, %v2763
    %v2766 = vunpack.c.l.s4 1934713408
    %v2767 = vunpack.c.0.s8 %v2766
    %v2768 = vperm.slane %v2760, %v2767
    %v2769 = vrot.slane %v2756, 4
    %v2770 = vsel %vm487, %v2769, %v2744
    %v2771 = vrot.slane %v2744, 4
    %v2772 = vsel %vm487, %v2756, %v2771
    %v2774 = vunpack.c.l.s4 1934713408
    %v2775 = vunpack.c.0.s8 %v2774
    %v2776 = vperm.slane %v2770, %v2775
    %v2778 = vunpack.c.l.s4 1934713408
    %v2779 = vunpack.c.0.s8 %v2778
    %v2780 = vperm.slane %v2772, %v2779
    %v2781 = vrot.slane %v2764, 4
    %v2782 = vsel %vm487, 0.0, %v2781
    %v2783 = vrot.slane %v2768, 4
    %v2784 = vsel %vm487, 0.0, %v2783
    %v2785 = vrot.slane %v2776, 4
    %v2786 = vsel %vm487, 0.0, %v2785
    %v2787 = vrot.slane %v2780, 4
    %v2788 = vsel %vm487, 0.0, %v2787
    %v2789 = vrot.slane %v2596, 4
    %v2790 = vsel %vm487, %v2789, %v2550
    %v2791 = vrot.slane %v2550, 4
    %v2792 = vsel %vm487, %v2596, %v2791
    %v2794 = vunpack.c.l.s4 1983009808
    %v2795 = vunpack.c.0.s8 %v2794
    %v2796 = vperm.slane %v2790, %v2795
    %v2798 = vunpack.c.l.s4 1983009808
    %v2799 = vunpack.c.0.s8 %v2798
    %v2800 = vperm.slane %v2792, %v2799
    %v2801 = vrot.slane %v2619, 4
    %v2802 = vsel %vm487, %v2801, %v2573
    %v2803 = vrot.slane %v2573, 4
    %v2804 = vsel %vm487, %v2619, %v2803
    %v2806 = vunpack.c.l.s4 1983009808
    %v2807 = vunpack.c.0.s8 %v2806
    %v2808 = vperm.slane %v2802, %v2807
    %v2810 = vunpack.c.l.s4 1983009808
    %v2811 = vunpack.c.0.s8 %v2810
    %v2812 = vperm.slane %v2804, %v2811
    %v2813 = vrot.slane %v2808, 4
    %v2814 = vsel %vm487, %v2813, %v2796
    %v2815 = vrot.slane %v2796, 4
    %v2816 = vsel %vm487, %v2808, %v2815
    %v2818 = vunpack.c.l.s4 1934713408
    %v2819 = vunpack.c.0.s8 %v2818
    %v2820 = vperm.slane %v2814, %v2819
    %v2822 = vunpack.c.l.s4 1934713408
    %v2823 = vunpack.c.0.s8 %v2822
    %v2824 = vperm.slane %v2816, %v2823
    %v2825 = vrot.slane %v2812, 4
    %v2826 = vsel %vm487, %v2825, %v2800
    %v2827 = vrot.slane %v2800, 4
    %v2828 = vsel %vm487, %v2812, %v2827
    %v2830 = vunpack.c.l.s4 1934713408
    %v2831 = vunpack.c.0.s8 %v2830
    %v2832 = vperm.slane %v2826, %v2831
    %v2834 = vunpack.c.l.s4 1934713408
    %v2835 = vunpack.c.0.s8 %v2834
    %v2836 = vperm.slane %v2828, %v2835
    %v2837 = vrot.slane %v2820, 4
    %v2838 = vsel %vm487, 0.0, %v2837
    %v2839 = vrot.slane %v2824, 4
    %v2840 = vsel %vm487, 0.0, %v2839
    %v2841 = vrot.slane %v2832, 4
    %v2842 = vsel %vm487, 0.0, %v2841
    %v2843 = vrot.slane %v2836, 4
    %v2844 = vsel %vm487, 0.0, %v2843
    %v2845 = vsel %vm487, %v2671, %v2652
    %v2847 = vunpack.c.l.s4 1983009808
    %v2848 = vunpack.c.0.s8 %v2847
    %v2849 = vperm.slane %v2845, %v2848
    %v2850 = vrot.slane %v2672, 4
    %v2851 = vsel %vm487, %v2850, %v2670
    %v2853 = vunpack.c.l.s4 1983009808
    %v2854 = vunpack.c.0.s8 %v2853
    %v2855 = vperm.slane %v2851, %v2854
    %v2856 = vsel %vm487, %v2675, %v2664
    %v2858 = vunpack.c.l.s4 1983009808
    %v2859 = vunpack.c.0.s8 %v2858
    %v2860 = vperm.slane %v2856, %v2859
    %v2861 = vrot.slane %v2676, 4
    %v2862 = vsel %vm487, %v2861, %v2674
    %v2864 = vunpack.c.l.s4 1983009808
    %v2865 = vunpack.c.0.s8 %v2864
    %v2866 = vperm.slane %v2862, %v2865
    %v2867 = vrot.slane %v2855, 4
    %v2868 = vsel %vm487, %v2867, %v2849
    %v2869 = vrot.slane %v2849, 4
    %v2870 = vsel %vm487, %v2855, %v2869
    %v2872 = vunpack.c.l.s4 1934713408
    %v2873 = vunpack.c.0.s8 %v2872
    %v2874 = vperm.slane %v2868, %v2873
    %v2876 = vunpack.c.l.s4 1934713408
    %v2877 = vunpack.c.0.s8 %v2876
    %v2878 = vperm.slane %v2870, %v2877
    %v2879 = vrot.slane %v2866, 4
    %v2880 = vsel %vm487, %v2879, %v2860
    %v2881 = vrot.slane %v2860, 4
    %v2882 = vsel %vm487, %v2866, %v2881
    %v2884 = vunpack.c.l.s4 1934713408
    %v2885 = vunpack.c.0.s8 %v2884
    %v2886 = vperm.slane %v2880, %v2885
    %v2888 = vunpack.c.l.s4 1934713408
    %v2889 = vunpack.c.0.s8 %v2888
    %v2890 = vperm.slane %v2882, %v2889
    %v2891 = vrot.slane %v2886, 4
    %v2892 = vsel %vm487, %v2891, %v2874
    %v2893 = vrot.slane %v2874, 4
    %v2894 = vsel %vm487, %v2886, %v2893
    %v2895 = vrot.slane %v2890, 4
    %v2896 = vsel %vm487, %v2895, %v2878
    %v2897 = vrot.slane %v2878, 4
    %v2898 = vsel %vm487, %v2890, %v2897
    %v2899 = vsel %vm487, %v2727, %v2708
    %v2901 = vunpack.c.l.s4 1983009808
    %v2902 = vunpack.c.0.s8 %v2901
    %v2903 = vperm.slane %v2899, %v2902
    %v2904 = vrot.slane %v2728, 4
    %v2905 = vsel %vm487, %v2904, %v2726
    %v2907 = vunpack.c.l.s4 1983009808
    %v2908 = vunpack.c.0.s8 %v2907
    %v2909 = vperm.slane %v2905, %v2908
    %v2910 = vsel %vm487, %v2731, %v2720
    %v2912 = vunpack.c.l.s4 1983009808
    %v2913 = vunpack.c.0.s8 %v2912
    %v2914 = vperm.slane %v2910, %v2913
    %v2915 = vrot.slane %v2732, 4
    %v2916 = vsel %vm487, %v2915, %v2730
    %v2918 = vunpack.c.l.s4 1983009808
    %v2919 = vunpack.c.0.s8 %v2918
    %v2920 = vperm.slane %v2916, %v2919
    %v2921 = vrot.slane %v2909, 4
    %v2922 = vsel %vm487, %v2921, %v2903
    %v2923 = vrot.slane %v2903, 4
    %v2924 = vsel %vm487, %v2909, %v2923
    %v2926 = vunpack.c.l.s4 1934713408
    %v2927 = vunpack.c.0.s8 %v2926
    %v2928 = vperm.slane %v2922, %v2927
    %v2930 = vunpack.c.l.s4 1934713408
    %v2931 = vunpack.c.0.s8 %v2930
    %v2932 = vperm.slane %v2924, %v2931
    %v2933 = vrot.slane %v2920, 4
    %v2934 = vsel %vm487, %v2933, %v2914
    %v2935 = vrot.slane %v2914, 4
    %v2936 = vsel %vm487, %v2920, %v2935
    %v2938 = vunpack.c.l.s4 1934713408
    %v2939 = vunpack.c.0.s8 %v2938
    %v2940 = vperm.slane %v2934, %v2939
    %v2942 = vunpack.c.l.s4 1934713408
    %v2943 = vunpack.c.0.s8 %v2942
    %v2944 = vperm.slane %v2936, %v2943
    %v2945 = vrot.slane %v2940, 4
    %v2946 = vsel %vm487, %v2945, %v2928
    %v2947 = vrot.slane %v2928, 4
    %v2948 = vsel %vm487, %v2940, %v2947
    %v2949 = vrot.slane %v2944, 4
    %v2950 = vsel %vm487, %v2949, %v2932
    %v2951 = vrot.slane %v2932, 4
    %v2952 = vsel %vm487, %v2944, %v2951
    %v2953 = vsel %vm487, %v2783, %v2764
    %v2955 = vunpack.c.l.s4 1983009808
    %v2956 = vunpack.c.0.s8 %v2955
    %v2957 = vperm.slane %v2953, %v2956
    %v2958 = vrot.slane %v2784, 4
    %v2959 = vsel %vm487, %v2958, %v2782
    %v2961 = vunpack.c.l.s4 1983009808
    %v2962 = vunpack.c.0.s8 %v2961
    %v2963 = vperm.slane %v2959, %v2962
    %v2964 = vsel %vm487, %v2787, %v2776
    %v2966 = vunpack.c.l.s4 1983009808
    %v2967 = vunpack.c.0.s8 %v2966
    %v2968 = vperm.slane %v2964, %v2967
    %v2969 = vrot.slane %v2788, 4
    %v2970 = vsel %vm487, %v2969, %v2786
    %v2972 = vunpack.c.l.s4 1983009808
    %v2973 = vunpack.c.0.s8 %v2972
    %v2974 = vperm.slane %v2970, %v2973
    %v2975 = vrot.slane %v2963, 4
    %v2976 = vsel %vm487, %v2975, %v2957
    %v2977 = vrot.slane %v2957, 4
    %v2978 = vsel %vm487, %v2963, %v2977
    %v2980 = vunpack.c.l.s4 1934713408
    %v2981 = vunpack.c.0.s8 %v2980
    %v2982 = vperm.slane %v2976, %v2981
    %v2984 = vunpack.c.l.s4 1934713408
    %v2985 = vunpack.c.0.s8 %v2984
    %v2986 = vperm.slane %v2978, %v2985
    %v2987 = vrot.slane %v2974, 4
    %v2988 = vsel %vm487, %v2987, %v2968
    %v2989 = vrot.slane %v2968, 4
    %v2990 = vsel %vm487, %v2974, %v2989
    %v2992 = vunpack.c.l.s4 1934713408
    %v2993 = vunpack.c.0.s8 %v2992
    %v2994 = vperm.slane %v2988, %v2993
    %v2996 = vunpack.c.l.s4 1934713408
    %v2997 = vunpack.c.0.s8 %v2996
    %v2998 = vperm.slane %v2990, %v2997
    %v2999 = vrot.slane %v2994, 4
    %v3000 = vsel %vm487, %v2999, %v2982
    %v3001 = vrot.slane %v2982, 4
    %v3002 = vsel %vm487, %v2994, %v3001
    %v3003 = vrot.slane %v2998, 4
    %v3004 = vsel %vm487, %v3003, %v2986
    %v3005 = vrot.slane %v2986, 4
    %v3006 = vsel %vm487, %v2998, %v3005
    %v3007 = vsel %vm487, %v2839, %v2820
    %v3009 = vunpack.c.l.s4 1983009808
    %v3010 = vunpack.c.0.s8 %v3009
    %v3011 = vperm.slane %v3007, %v3010
    %v3012 = vrot.slane %v2840, 4
    %v3013 = vsel %vm487, %v3012, %v2838
    %v3015 = vunpack.c.l.s4 1983009808
    %v3016 = vunpack.c.0.s8 %v3015
    %v3017 = vperm.slane %v3013, %v3016
    %v3018 = vsel %vm487, %v2843, %v2832
    %v3020 = vunpack.c.l.s4 1983009808
    %v3021 = vunpack.c.0.s8 %v3020
    %v3022 = vperm.slane %v3018, %v3021
    %v3023 = vrot.slane %v2844, 4
    %v3024 = vsel %vm487, %v3023, %v2842
    %v3026 = vunpack.c.l.s4 1983009808
    %v3027 = vunpack.c.0.s8 %v3026
    %v3028 = vperm.slane %v3024, %v3027
    %v3029 = vrot.slane %v3017, 4
    %v3030 = vsel %vm487, %v3029, %v3011
    %v3031 = vrot.slane %v3011, 4
    %v3032 = vsel %vm487, %v3017, %v3031
    %v3034 = vunpack.c.l.s4 1934713408
    %v3035 = vunpack.c.0.s8 %v3034
    %v3036 = vperm.slane %v3030, %v3035
    %v3038 = vunpack.c.l.s4 1934713408
    %v3039 = vunpack.c.0.s8 %v3038
    %v3040 = vperm.slane %v3032, %v3039
    %v3041 = vrot.slane %v3028, 4
    %v3042 = vsel %vm487, %v3041, %v3022
    %v3043 = vrot.slane %v3022, 4
    %v3044 = vsel %vm487, %v3028, %v3043
    %v3046 = vunpack.c.l.s4 1934713408
    %v3047 = vunpack.c.0.s8 %v3046
    %v3048 = vperm.slane %v3042, %v3047
    %v3050 = vunpack.c.l.s4 1934713408
    %v3051 = vunpack.c.0.s8 %v3050
    %v3052 = vperm.slane %v3044, %v3051
    %v3053 = vrot.slane %v3048, 4
    %v3054 = vsel %vm487, %v3053, %v3036
    %v3055 = vrot.slane %v3036, 4
    %v3056 = vsel %vm487, %v3048, %v3055
    %v3057 = vrot.slane %v3052, 4
    %v3058 = vsel %vm487, %v3057, %v3040
    %v3059 = vrot.slane %v3040, 4
    %v3060 = vsel %vm487, %v3052, %v3059
    %3065 = vrot.lane.b32.xlu0 %v2894, 4
    %v3066 = vpop.permute.xlu0 %3065
    %3067 = vrot.lane.b32.xlu0 %v2948, 4
    %v3068 = vpop.permute.xlu0 %3067
    %3069 = vrot.lane.b32.xlu0 %v3002, 4
    %v3070 = vpop.permute.xlu0 %3069
    %3071 = vrot.lane.b32.xlu0 %v3056, 4
    %v3072 = vpop.permute.xlu0 %3071
    %3081 = vrot.lane.b32.xlu0 %v2896, 8
    %v3082 = vpop.permute.xlu0 %3081
    %3083 = vrot.lane.b32.xlu0 %v2950, 8
    %v3084 = vpop.permute.xlu0 %3083
    %3085 = vrot.lane.b32.xlu0 %v3004, 8
    %v3086 = vpop.permute.xlu0 %3085
    %3087 = vrot.lane.b32.xlu0 %v3058, 8
    %v3088 = vpop.permute.xlu0 %3087
    %3097 = vrot.lane.b32.xlu0 %v2898, 12
    %v3098 = vpop.permute.xlu0 %3097
    %3099 = vrot.lane.b32.xlu0 %v2952, 12
    %v3100 = vpop.permute.xlu0 %3099
    %3101 = vrot.lane.b32.xlu0 %v3006, 12
    %v3102 = vpop.permute.xlu0 %3101
    %3103 = vrot.lane.b32.xlu0 %v3060, 12
    %v3104 = vpop.permute.xlu0 %3103
    %v3109 = vsel %vm1667, %v2892, %v3066
    %v3110 = vsel %vm1667, %v2946, %v3068
    %v3111 = vsel %vm1667, %v3000, %v3070
    %v3112 = vsel %vm1667, %v3054, %v3072
    %v3113 = vsel %vm2076, %v3109, %v3082
    %v3114 = vsel %vm2076, %v3110, %v3084
    %v3115 = vsel %vm2076, %v3111, %v3086
    %v3116 = vsel %vm2076, %v3112, %v3088
    %vm3117 = vcmask 97280
    %v3118 = vsel %vm3117, %v3113, %v3098
    %v3119 = vsel %vm3117, %v3114, %v3100
    %v3120 = vsel %vm3117, %v3115, %v3102
    %v3121 = vsel %vm3117, %v3116, %v3104
    %v3122 = vld [vmem:[#allocation14] sm:$0xff]
    %v3123 = vld [vmem:[#allocation14 + $0x8] sm:$0xff]
    %v3124 = vld [vmem:[#allocation16] sm:$0x1]
    %v3126 = vperm.slane %v3124, 0
    %v3129 = vsel %vm354, %v3118, 0
    %v3132 = vsel %vm354, %v3119, 0
    %v3135 = vsel %vm354, %v3120, 0
    %v3138 = vsel %vm354, %v3121, 0
    %3140 = vmatpush.msra.mxu0 0.0
    %3141 = vmatpush.msra.mxu0 0.0
    %3142 = vmatpush.msra.mxu0 0.0
    %3143 = vmatpush.msra.mxu0 0.0
    %3144 = vmatpush.msra.mxu0 0.0
    %3145 = vmatpush.msra.mxu0 0.0
    %3146 = vmatpush.msra.mxu0 0.0
    %3147 = vmatpush.msra.mxu0 0.0
    %3148 = vmatpush.msra.mxu0 0.0
    %3149 = vmatpush.msra.mxu0 0.0
    %3150 = vmatpush.msra.mxu0 0.0
    %3151 = vmatpush.msra.mxu0 0.0
    %3152 = vmatpush.msra.mxu0 0.0
    %3153 = vmatpush.msra.mxu0 0.0
    %3154 = vmatpush.msra.mxu0 %v3123
    %3155 = vmatpush.msra.mxu0 %v3122
    %3156 = vmatmul.f32.gmra.mxu0 %v3129
    %v3157 = vpop.f32.mrf.mxu0
    %v3158 = vadd.f32 %v3126, %v3157
    %3159 = vmatmul.f32.gmra.mxu0 %v3132
    %v3160 = vpop.f32.mrf.mxu0
    %v3161 = vadd.f32 %v3126, %v3160
    %3162 = vmatmul.f32.gmra.mxu0 %v3135
    %v3163 = vpop.f32.mrf.mxu0
    %v3164 = vadd.f32 %v3126, %v3163
    %3165 = vmatmul.f32.gmra.mxu0 %v3138
    %v3166 = vpop.f32.mrf.mxu0
    %v3167 = vadd.f32 %v3126, %v3166
    %3168 = vdwg.mxu0
    %v3169 = vsel %vm318, %v304, 0.0
    %v3170 = vrot.slane %v3169, 4
    %v3171 = vadd.f32 %v3169, %v3170
    %v3172 = vrot.slane %v3171, 2
    %v3173 = vadd.f32 %v3171, %v3172
    %v3174 = vrot.slane %v3173, 1
    %v3175 = vadd.f32 %v3173, %v3174
    %v3176 = vsel %vm318, %v305, 0.0
    %v3177 = vrot.slane %v3176, 4
    %v3178 = vadd.f32 %v3176, %v3177
    %v3179 = vrot.slane %v3178, 2
    %v3180 = vadd.f32 %v3178, %v3179
    %v3181 = vrot.slane %v3180, 1
    %v3182 = vadd.f32 %v3180, %v3181
    %v3183 = vrcp.pop 8.0
    %v3184 = vmul.f32 8.0, %v3183
    %v3185 = vsub.f32 1.0, %v3184
    %v3186 = vmul.f32 %v3183, %v3185
    %v3187 = vadd.f32 %v3183, %v3186
    %vm3188 = vweird.f32 %v3183
    %v3189 = vsel %vm3188, %v3183, %v3187
    %v3190 = vmul.f32 %v3175, %v3189
    %v3191 = vmul.f32 %v3182, %v3189
    %v3192 = vsel %vm354, %v3158, 0.0
    %v3193 = vrot.slane %v3192, 4
    %v3194 = vadd.f32 %v3192, %v3193
    %v3195 = vrot.slane %v3194, 2
    %v3196 = vadd.f32 %v3194, %v3195
    %v3197 = vrot.slane %v3196, 1
    %v3198 = vadd.f32 %v3196, %v3197
    %v3199 = vsel %vm354, %v3161, 0.0
    %v3200 = vrot.slane %v3199, 4
    %v3201 = vadd.f32 %v3199, %v3200
    %v3202 = vrot.slane %v3201, 2
    %v3203 = vadd.f32 %v3201, %v3202
    %v3204 = vrot.slane %v3203, 1
    %v3205 = vadd.f32 %v3203, %v3204
    %v3206 = vsel %vm354, %v3164, 0.0
    %v3207 = vrot.slane %v3206, 4
    %v3208 = vadd.f32 %v3206, %v3207
    %v3209 = vrot.slane %v3208, 2
    %v3210 = vadd.f32 %v3208, %v3209
    %v3211 = vrot.slane %v3210, 1
    %v3212 = vadd.f32 %v3210, %v3211
    %v3213 = vsel %vm354, %v3167, 0.0
    %v3214 = vrot.slane %v3213, 4
    %v3215 = vadd.f32 %v3213, %v3214
    %v3216 = vrot.slane %v3215, 2
    %v3217 = vadd.f32 %v3215, %v3216
    %v3218 = vrot.slane %v3217, 1
    %v3219 = vadd.f32 %v3217, %v3218
    %v3220 = vmul.f32 %v3198, %v3189
    %v3221 = vmul.f32 %v3205, %v3189
    %v3222 = vmul.f32 %v3212, %v3189
    %v3223 = vmul.f32 %v3219, %v3189
    %vm3228 = vcmask 1041409
    %v3229 = vsel %vm3228, %v3221, %v3220
    %v3230 = vsel %vm3228, %v3223, %v3222
    %v3233 = vrot.slane %v3230, 4
    %v3234 = vsel %vm487, %v3233, %v3229
    %v3236 = vunpack.c.l.s4 1934713408
    %v3237 = vunpack.c.0.s8 %v3236
    %v3238 = vperm.slane %v3234, %v3237
    %v3239 = vrot.slane %v3238, 4
    %v3240 = vsel %vm487, 0.0, %v3239
    %3242 = vrot.lane.b32.xlu0 %v3240, 16
    %v3243 = vpop.permute.xlu0 %3242
    %v3245 = vsel %vm354, %v3238, %v3243
    %v3246 = vld [vmem:[%s12] sm:$0xff]
    %v3247 = vld [vmem:[%s12 + $0x8] sm:$0xff]
    %v3248 = vld [vmem:[%s12 + $0x10] sm:$0xff]
    %v3249 = vld [vmem:[%s12 + $0x18] sm:$0xff]
    %v3250 = vld [vmem:[%s13] sm:$0xff]
    %v3251 = vld [vmem:[%s13 + $0x8] sm:$0xff]
    %v3252 = vld [vmem:[%s13 + $0x10] sm:$0xff]
    %v3253 = vld [vmem:[%s13 + $0x18] sm:$0xff]
    %v3255 = vsel %vm318, %v3245, 0
    %3257 = vmatpush.msra.mxu0 0.0
    %3258 = vmatpush.msra.mxu0 0.0
    %3259 = vmatpush.msra.mxu0 0.0
    %3260 = vmatpush.msra.mxu0 0.0
    %3261 = vmatpush.msra.mxu0 0.0
    %3262 = vmatpush.msra.mxu0 0.0
    %3263 = vmatpush.msra.mxu0 0.0
    %3264 = vmatpush.msra.mxu0 0.0
    %3265 = vmatpush.msra.mxu0 0.0
    %3266 = vmatpush.msra.mxu0 0.0
    %3267 = vmatpush.msra.mxu0 0.0
    %3268 = vmatpush.msra.mxu0 0.0
    %3269 = vmatpush.msra.mxu0 %v3253
    %3270 = vmatpush.msra.mxu0 %v3252
    %3271 = vmatpush.msra.mxu0 %v3251
    %3272 = vmatpush.msra.mxu0 %v3250
    %3273 = vmatmul.f32.gmra.mxu0 %v3255
    %v3274 = vpop.f32.mrf.mxu0
    %v3275 = vadd.f32 0.0, %v3274
    %3276 = vdwg.mxu0
    %v3279 = vsel %vm3228, %v3191, %v3190
    %v3280 = vsel %vm318, %v3279, 0
    %3282 = vmatpush.msra.mxu0 0.0
    %3283 = vmatpush.msra.mxu0 0.0
    %3284 = vmatpush.msra.mxu0 0.0
    %3285 = vmatpush.msra.mxu0 0.0
    %3286 = vmatpush.msra.mxu0 0.0
    %3287 = vmatpush.msra.mxu0 0.0
    %3288 = vmatpush.msra.mxu0 0.0
    %3289 = vmatpush.msra.mxu0 0.0
    %3290 = vmatpush.msra.mxu0 0.0
    %3291 = vmatpush.msra.mxu0 0.0
    %3292 = vmatpush.msra.mxu0 0.0
    %3293 = vmatpush.msra.mxu0 0.0
    %3294 = vmatpush.msra.mxu0 %v3249
    %3295 = vmatpush.msra.mxu0 %v3248
    %3296 = vmatpush.msra.mxu0 %v3247
    %3297 = vmatpush.msra.mxu0 %v3246
    %3298 = vmatmul.f32.gmra.mxu0 %v3280
    %v3299 = vpop.f32.mrf.mxu0
    %v3300 = vadd.f32 %v3275, %v3299
    %3301 = vdwg.mxu0
    %v3302 = vld [vmem:[#allocation17] sm:$0x1]
    %v3304 = vperm.slane %v3302, 0
    %v3306 = vadd.f32 %v3300, %v3304
    %v3307 = vmax.f32 %v3306, 0.0
    %v3308 = vld [vmem:[%s15] sm:$0xff]
    %v3309 = vld [vmem:[%s15 + $0x8] sm:$0xff]
    %v3310 = vld [vmem:[%s15 + $0x10] sm:$0xff]
    %v3311 = vld [vmem:[%s15 + $0x18] sm:$0xff]
    %v3312 = vld [vmem:[%s15 + $0x20] sm:$0xff]
    %v3313 = vld [vmem:[%s15 + $0x28] sm:$0xff]
    %v3314 = vld [vmem:[%s15 + $0x30] sm:$0xff]
    %v3315 = vld [vmem:[%s15 + $0x38] sm:$0xff]
    %v3316 = vld [vmem:[%s15 + $0x40] sm:$0xff]
    %v3317 = vld [vmem:[%s15 + $0x48] sm:$0xff]
    %v3318 = vld [vmem:[%s15 + $0x50] sm:$0xff]
    %v3319 = vld [vmem:[%s15 + $0x58] sm:$0xff]
    %v3320 = vld [vmem:[%s15 + $0x60] sm:$0xff]
    %v3321 = vld [vmem:[%s15 + $0x68] sm:$0xff]
    %v3322 = vld [vmem:[%s15 + $0x70] sm:$0xff]
    %v3323 = vld [vmem:[%s15 + $0x78] sm:$0xff]
    %v3324 = vld [vmem:[#allocation19] sm:$0x1]
    %v3326 = vperm.slane %v3324, 0
    %3328 = vmatpush.msra.mxu0 %v3323
    %3329 = vmatpush.msra.mxu0 %v3322
    %3330 = vmatpush.msra.mxu0 %v3321
    %3331 = vmatpush.msra.mxu0 %v3320
    %3332 = vmatpush.msra.mxu0 %v3319
    %3333 = vmatpush.msra.mxu0 %v3318
    %3334 = vmatpush.msra.mxu0 %v3317
    %3335 = vmatpush.msra.mxu0 %v3316
    %3336 = vmatpush.msra.mxu0 %v3315
    %3337 = vmatpush.msra.mxu0 %v3314
    %3338 = vmatpush.msra.mxu0 %v3313
    %3339 = vmatpush.msra.mxu0 %v3312
    %3340 = vmatpush.msra.mxu0 %v3311
    %3341 = vmatpush.msra.mxu0 %v3310
    %3342 = vmatpush.msra.mxu0 %v3309
    %3343 = vmatpush.msra.mxu0 %v3308
    %3344 = vmatmul.f32.gmra.mxu0 %v3307
    %v3345 = vpop.f32.mrf.mxu0
    %v3346 = vadd.f32 %v3326, %v3345
    %3347 = vdwg.mxu0
    %v3348 = vxor.u32 %v3346, 2147483648
    %v3349 = vmul.f32 %v3348, 1.442695
    %v3350 = vpow.pop %v3349
    %v3351 = vadd.f32 %v3350, 1.0
    %v3352 = vrcp.pop %v3351
    %v3353 = vmul.f32 %v3351, %v3352
    %v3354 = vsub.f32 1.0, %v3353
    %v3355 = vmul.f32 %v3352, %v3354
    %v3356 = vadd.f32 %v3352, %v3355
    %vm3357 = vweird.f32 %v3351
    %vm3358 = vweird.f32 %v3352
    %vm3359 = vmor %vm3357, %vm3358
    %v3360 = vsel %vm3359, %v3352, %v3356
    %v3361 = vand.u32 2147483647, %v3351
    %vm3362 = vcmp.eq.f32.partialorder %v3361, 8.507059e+37
    %v3363 = vand.u32 %v3351, 2147483648
    %v3364 = vor.u32 1.1754944e-38, %v3363
    %v3365 = vsel %vm3362, %v3364, %v3360
    %v3366 = vmul.f32 1.0, %v3365
    %v3367 = vperm.slane %v3366, 0
    %v3368 = vlaneseq
    %v3369 = vshrl.u32 %v3368, 7
    %3371 = vset.pattern.permute.xlu0 %v3369
    %3372 = vperm.xlu0 %3371, %v3367
    %v3373 = vpop.permute.xlu0 %3372
    %v3374 = vperm.slane %v3366, 1
    %v3375 = vlaneseq
    %v3376 = vshrl.u32 %v3375, 7
    %3378 = vset.pattern.permute.xlu0 %v3376
    %3379 = vperm.xlu0 %3378, %v3374
    %v3380 = vpop.permute.xlu0 %3379
    %v3381 = vperm.slane %v3373, 0
    %v3382 = vperm.slane %v3373, 1
    %v3383 = vperm.slane %v3380, 0
    %v3384 = vperm.slane %v3380, 1
    %v3385 = vmul.f32 %v3158, %v3381
    %v3386 = vmul.f32 %v3161, %v3382
    %v3387 = vmul.f32 %v3164, %v3383
    %v3388 = vmul.f32 %v3167, %v3384
    %v3389 = vsel %vm354, %v3385, 0.0
    %v3390 = vsel %vm354, %v3386, 0.0
    %v3391 = vadd.f32 %v3389, %v3390
    %v3392 = vsel %vm354, %v3387, 0.0
    %v3393 = vsel %vm354, %v3388, 0.0
    %v3394 = vadd.f32 %v3392, %v3393
    %v3395 = vrcp.pop 2.0
    %v3396 = vmul.f32 2.0, %v3395
    %v3397 = vsub.f32 1.0, %v3396
    %v3398 = vmul.f32 %v3395, %v3397
    %v3399 = vadd.f32 %v3395, %v3398
    %vm3400 = vweird.f32 %v3395
    %v3401 = vsel %vm3400, %v3395, %v3399
    %v3402 = vmul.f32 %v3391, %v3401
    %v3403 = vmul.f32 %v3394, %v3401
    %v3404 = vld [vmem:[#allocation20] sm:$0xff]
    %v3405 = vld [vmem:[#allocation20 + $0x8] sm:$0xff]
    %v3406 = vld [vmem:[#allocation22] sm:$0x1]
    %v3408 = vperm.slane %v3406, 0
    %v3411 = vsel %vm354, %v3402, 0
    %v3414 = vsel %vm354, %v3403, 0
    %3416 = vmatpush.msra.mxu0 0.0
    %3417 = vmatpush.msra.mxu0 0.0
    %3418 = vmatpush.msra.mxu0 0.0
    %3419 = vmatpush.msra.mxu0 0.0
    %3420 = vmatpush.msra.mxu0 0.0
    %3421 = vmatpush.msra.mxu0 0.0
    %3422 = vmatpush.msra.mxu0 0.0
    %3423 = vmatpush.msra.mxu0 0.0
    %3424 = vmatpush.msra.mxu0 0.0
    %3425 = vmatpush.msra.mxu0 0.0
    %3426 = vmatpush.msra.mxu0 0.0
    %3427 = vmatpush.msra.mxu0 0.0
    %3428 = vmatpush.msra.mxu0 0.0
    %3429 = vmatpush.msra.mxu0 0.0
    %3430 = vmatpush.msra.mxu0 %v3405
    %3431 = vmatpush.msra.mxu0 %v3404
    %3432 = vmatmul.f32.gmra.mxu0 %v3411
    %v3433 = vpop.f32.mrf.mxu0
    %v3434 = vadd.f32 %v3408, %v3433
    %3435 = vmatmul.f32.gmra.mxu0 %v3414
    %v3436 = vpop.f32.mrf.mxu0
    %v3437 = vadd.f32 %v3408, %v3436
    %3438 = vdwg.mxu0
    %v3439 = vld [vmem:[%s19] sm:$0xff]
    %v3440 = vld [vmem:[%s19 + $0x8] sm:$0xff]
    %v3441 = vld [vmem:[%s19 + $0x10] sm:$0xff]
    %v3442 = vld [vmem:[%s19 + $0x18] sm:$0xff]
    %v3443 = vld [vmem:[#allocation23] sm:$0x1]
    %v3445 = vperm.slane %v3443, 0
    %3447 = vmatpush.msra.mxu0 0.0
    %3448 = vmatpush.msra.mxu0 0.0
    %3449 = vmatpush.msra.mxu0 0.0
    %3450 = vmatpush.msra.mxu0 0.0
    %3451 = vmatpush.msra.mxu0 0.0
    %3452 = vmatpush.msra.mxu0 0.0
    %3453 = vmatpush.msra.mxu0 0.0
    %3454 = vmatpush.msra.mxu0 0.0
    %3455 = vmatpush.msra.mxu0 0.0
    %3456 = vmatpush.msra.mxu0 0.0
    %3457 = vmatpush.msra.mxu0 0.0
    %3458 = vmatpush.msra.mxu0 0.0
    %3459 = vmatpush.msra.mxu0 %v3442
    %3460 = vmatpush.msra.mxu0 %v3441
    %3461 = vmatpush.msra.mxu0 %v3440
    %3462 = vmatpush.msra.mxu0 %v3439
    %3463 = vmatmul.f32.gmra.mxu0 %v320
    %v3464 = vpop.f32.mrf.mxu0
    %v3465 = vadd.f32 %v3445, %v3464
    %3466 = vmatmul.f32.gmra.mxu0 %v323
    %v3467 = vpop.f32.mrf.mxu0
    %v3468 = vadd.f32 %v3445, %v3467
    %3469 = vdwg.mxu0
    %v3470 = vld [vmem:[%s21] sm:$0xff]
    %v3471 = vld [vmem:[%s21 + $0x8] sm:$0xff]
    %v3472 = vld [vmem:[%s21 + $0x10] sm:$0xff]
    %v3473 = vld [vmem:[%s21 + $0x18] sm:$0xff]
    %v3474 = vld [vmem:[%s22] sm:$0x1]
    %v3476 = vperm.slane %v3474, 0
    %v3479 = vsel %vm318, %v3434, 0
    %v3482 = vsel %vm318, %v3437, 0
    %3484 = vmatpush.msra.mxu0 0.0
    %3485 = vmatpush.msra.mxu0 0.0
    %3486 = vmatpush.msra.mxu0 0.0
    %3487 = vmatpush.msra.mxu0 0.0
    %3488 = vmatpush.msra.mxu0 0.0
    %3489 = vmatpush.msra.mxu0 0.0
    %3490 = vmatpush.msra.mxu0 0.0
    %3491 = vmatpush.msra.mxu0 0.0
    %3492 = vmatpush.msra.mxu0 0.0
    %3493 = vmatpush.msra.mxu0 0.0
    %3494 = vmatpush.msra.mxu0 0.0
    %3495 = vmatpush.msra.mxu0 0.0
    %3496 = vmatpush.msra.mxu0 %v3473
    %3497 = vmatpush.msra.mxu0 %v3472
    %3498 = vmatpush.msra.mxu0 %v3471
    %3499 = vmatpush.msra.mxu0 %v3470
    %3500 = vmatmul.f32.gmra.mxu0 %v3479
    %v3501 = vpop.f32.mrf.mxu0
    %v3502 = vadd.f32 %v3476, %v3501
    %3503 = vmatmul.f32.gmra.mxu0 %v3482
    %v3504 = vpop.f32.mrf.mxu0
    %v3505 = vadd.f32 %v3476, %v3504
    %3506 = vdwg.mxu0
    %v3507 = vld [vmem:[%s23] sm:$0xff]
    %v3508 = vld [vmem:[%s23 + $0x8] sm:$0xff]
    %v3509 = vld [vmem:[%s23 + $0x10] sm:$0xff]
    %v3510 = vld [vmem:[%s23 + $0x18] sm:$0xff]
    %v3511 = vld [vmem:[%s24] sm:$0x1]
    %v3513 = vperm.slane %v3511, 0
    %3515 = vmatpush.msra.mxu0 0.0
    %3516 = vmatpush.msra.mxu0 0.0
    %3517 = vmatpush.msra.mxu0 0.0
    %3518 = vmatpush.msra.mxu0 0.0
    %3519 = vmatpush.msra.mxu0 0.0
    %3520 = vmatpush.msra.mxu0 0.0
    %3521 = vmatpush.msra.mxu0 0.0
    %3522 = vmatpush.msra.mxu0 0.0
    %3523 = vmatpush.msra.mxu0 0.0
    %3524 = vmatpush.msra.mxu0 0.0
    %3525 = vmatpush.msra.mxu0 0.0
    %3526 = vmatpush.msra.mxu0 0.0
    %3527 = vmatpush.msra.mxu0 %v3510
    %3528 = vmatpush.msra.mxu0 %v3509
    %3529 = vmatpush.msra.mxu0 %v3508
    %3530 = vmatpush.msra.mxu0 %v3507
    %3531 = vmatmul.f32.gmra.mxu0 %v3479
    %v3532 = vpop.f32.mrf.mxu0
    %v3533 = vadd.f32 %v3513, %v3532
    %3534 = vmatmul.f32.gmra.mxu0 %v3482
    %v3535 = vpop.f32.mrf.mxu0
    %v3536 = vadd.f32 %v3513, %v3535
    %3537 = vdwg.mxu0
    %3540 = vrot.lane.b32.xlu0 %v3465, 120
    %v3541 = vpop.permute.xlu0 %3540
    %3542 = vrot.lane.b32.xlu0 %v3468, 120
    %v3543 = vpop.permute.xlu0 %3542
    %3546 = vrot.lane.b32.xlu0 %v3465, 112
    %v3547 = vpop.permute.xlu0 %3546
    %3548 = vrot.lane.b32.xlu0 %v3468, 112
    %v3549 = vpop.permute.xlu0 %3548
    %3552 = vrot.lane.b32.xlu0 %v3465, 104
    %v3553 = vpop.permute.xlu0 %3552
    %3554 = vrot.lane.b32.xlu0 %v3468, 104
    %v3555 = vpop.permute.xlu0 %3554
    %v3558 = vrot.slane %v3547, 4
    %v3559 = vsel %vm487, %v3558, %v3465
    %v3560 = vrot.slane %v3465, 4
    %v3561 = vsel %vm487, %v3547, %v3560
    %v3563 = vunpack.c.l.s4 1983009808
    %v3564 = vunpack.c.0.s8 %v3563
    %v3565 = vperm.slane %v3559, %v3564
    %v3567 = vunpack.c.l.s4 1983009808
    %v3568 = vunpack.c.0.s8 %v3567
    %v3569 = vperm.slane %v3561, %v3568
    %v3570 = vrot.slane %v3553, 4
    %v3571 = vsel %vm487, %v3570, %v3541
    %v3572 = vrot.slane %v3541, 4
    %v3573 = vsel %vm487, %v3553, %v3572
    %v3575 = vunpack.c.l.s4 1983009808
    %v3576 = vunpack.c.0.s8 %v3575
    %v3577 = vperm.slane %v3571, %v3576
    %v3579 = vunpack.c.l.s4 1983009808
    %v3580 = vunpack.c.0.s8 %v3579
    %v3581 = vperm.slane %v3573, %v3580
    %v3582 = vrot.slane %v3577, 4
    %v3583 = vsel %vm487, %v3582, %v3565
    %v3584 = vrot.slane %v3565, 4
    %v3585 = vsel %vm487, %v3577, %v3584
    %v3587 = vunpack.c.l.s4 1934713408
    %v3588 = vunpack.c.0.s8 %v3587
    %v3589 = vperm.slane %v3583, %v3588
    %v3591 = vunpack.c.l.s4 1934713408
    %v3592 = vunpack.c.0.s8 %v3591
    %v3593 = vperm.slane %v3585, %v3592
    %v3594 = vrot.slane %v3581, 4
    %v3595 = vsel %vm487, %v3594, %v3569
    %v3596 = vrot.slane %v3569, 4
    %v3597 = vsel %vm487, %v3581, %v3596
    %v3599 = vunpack.c.l.s4 1934713408
    %v3600 = vunpack.c.0.s8 %v3599
    %v3601 = vperm.slane %v3595, %v3600
    %v3603 = vunpack.c.l.s4 1934713408
    %v3604 = vunpack.c.0.s8 %v3603
    %v3605 = vperm.slane %v3597, %v3604
    %v3606 = vrot.slane %v3589, 4
    %v3607 = vsel %vm487, 0.0, %v3606
    %v3608 = vrot.slane %v3593, 4
    %v3609 = vsel %vm487, 0.0, %v3608
    %v3610 = vrot.slane %v3601, 4
    %v3611 = vsel %vm487, 0.0, %v3610
    %v3612 = vrot.slane %v3605, 4
    %v3613 = vsel %vm487, 0.0, %v3612
    %v3614 = vrot.slane %v3549, 4
    %v3615 = vsel %vm487, %v3614, %v3468
    %v3616 = vrot.slane %v3468, 4
    %v3617 = vsel %vm487, %v3549, %v3616
    %v3619 = vunpack.c.l.s4 1983009808
    %v3620 = vunpack.c.0.s8 %v3619
    %v3621 = vperm.slane %v3615, %v3620
    %v3623 = vunpack.c.l.s4 1983009808
    %v3624 = vunpack.c.0.s8 %v3623
    %v3625 = vperm.slane %v3617, %v3624
    %v3626 = vrot.slane %v3555, 4
    %v3627 = vsel %vm487, %v3626, %v3543
    %v3628 = vrot.slane %v3543, 4
    %v3629 = vsel %vm487, %v3555, %v3628
    %v3631 = vunpack.c.l.s4 1983009808
    %v3632 = vunpack.c.0.s8 %v3631
    %v3633 = vperm.slane %v3627, %v3632
    %v3635 = vunpack.c.l.s4 1983009808
    %v3636 = vunpack.c.0.s8 %v3635
    %v3637 = vperm.slane %v3629, %v3636
    %v3638 = vrot.slane %v3633, 4
    %v3639 = vsel %vm487, %v3638, %v3621
    %v3640 = vrot.slane %v3621, 4
    %v3641 = vsel %vm487, %v3633, %v3640
    %v3643 = vunpack.c.l.s4 1934713408
    %v3644 = vunpack.c.0.s8 %v3643
    %v3645 = vperm.slane %v3639, %v3644
    %v3647 = vunpack.c.l.s4 1934713408
    %v3648 = vunpack.c.0.s8 %v3647
    %v3649 = vperm.slane %v3641, %v3648
    %v3650 = vrot.slane %v3637, 4
    %v3651 = vsel %vm487, %v3650, %v3625
    %v3652 = vrot.slane %v3625, 4
    %v3653 = vsel %vm487, %v3637, %v3652
    %v3655 = vunpack.c.l.s4 1934713408
    %v3656 = vunpack.c.0.s8 %v3655
    %v3657 = vperm.slane %v3651, %v3656
    %v3659 = vunpack.c.l.s4 1934713408
    %v3660 = vunpack.c.0.s8 %v3659
    %v3661 = vperm.slane %v3653, %v3660
    %v3662 = vrot.slane %v3645, 4
    %v3663 = vsel %vm487, 0.0, %v3662
    %v3664 = vrot.slane %v3649, 4
    %v3665 = vsel %vm487, 0.0, %v3664
    %v3666 = vrot.slane %v3657, 4
    %v3667 = vsel %vm487, 0.0, %v3666
    %v3668 = vrot.slane %v3661, 4
    %v3669 = vsel %vm487, 0.0, %v3668
    %v3670 = vsel %vm487, %v3608, %v3589
    %v3672 = vunpack.c.l.s4 1983009808
    %v3673 = vunpack.c.0.s8 %v3672
    %v3674 = vperm.slane %v3670, %v3673
    %v3675 = vrot.slane %v3609, 4
    %v3676 = vsel %vm487, %v3675, %v3607
    %v3678 = vunpack.c.l.s4 1983009808
    %v3679 = vunpack.c.0.s8 %v3678
    %v3680 = vperm.slane %v3676, %v3679
    %v3681 = vsel %vm487, %v3612, %v3601
    %v3683 = vunpack.c.l.s4 1983009808
    %v3684 = vunpack.c.0.s8 %v3683
    %v3685 = vperm.slane %v3681, %v3684
    %v3686 = vrot.slane %v3613, 4
    %v3687 = vsel %vm487, %v3686, %v3611
    %v3689 = vunpack.c.l.s4 1983009808
    %v3690 = vunpack.c.0.s8 %v3689
    %v3691 = vperm.slane %v3687, %v3690
    %v3692 = vrot.slane %v3680, 4
    %v3693 = vsel %vm487, %v3692, %v3674
    %v3694 = vrot.slane %v3674, 4
    %v3695 = vsel %vm487, %v3680, %v3694
    %v3697 = vunpack.c.l.s4 1934713408
    %v3698 = vunpack.c.0.s8 %v3697
    %v3699 = vperm.slane %v3693, %v3698
    %v3701 = vunpack.c.l.s4 1934713408
    %v3702 = vunpack.c.0.s8 %v3701
    %v3703 = vperm.slane %v3695, %v3702
    %v3704 = vrot.slane %v3691, 4
    %v3705 = vsel %vm487, %v3704, %v3685
    %v3706 = vrot.slane %v3685, 4
    %v3707 = vsel %vm487, %v3691, %v3706
    %v3709 = vunpack.c.l.s4 1934713408
    %v3710 = vunpack.c.0.s8 %v3709
    %v3711 = vperm.slane %v3705, %v3710
    %v3713 = vunpack.c.l.s4 1934713408
    %v3714 = vunpack.c.0.s8 %v3713
    %v3715 = vperm.slane %v3707, %v3714
    %v3716 = vrot.slane %v3711, 4
    %v3717 = vsel %vm487, %v3716, %v3699
    %v3718 = vrot.slane %v3699, 4
    %v3719 = vsel %vm487, %v3711, %v3718
    %v3720 = vrot.slane %v3715, 4
    %v3721 = vsel %vm487, %v3720, %v3703
    %v3722 = vrot.slane %v3703, 4
    %v3723 = vsel %vm487, %v3715, %v3722
    %v3724 = vsel %vm487, %v3664, %v3645
    %v3726 = vunpack.c.l.s4 1983009808
    %v3727 = vunpack.c.0.s8 %v3726
    %v3728 = vperm.slane %v3724, %v3727
    %v3729 = vrot.slane %v3665, 4
    %v3730 = vsel %vm487, %v3729, %v3663
    %v3732 = vunpack.c.l.s4 1983009808
    %v3733 = vunpack.c.0.s8 %v3732
    %v3734 = vperm.slane %v3730, %v3733
    %v3735 = vsel %vm487, %v3668, %v3657
    %v3737 = vunpack.c.l.s4 1983009808
    %v3738 = vunpack.c.0.s8 %v3737
    %v3739 = vperm.slane %v3735, %v3738
    %v3740 = vrot.slane %v3669, 4
    %v3741 = vsel %vm487, %v3740, %v3667
    %v3743 = vunpack.c.l.s4 1983009808
    %v3744 = vunpack.c.0.s8 %v3743
    %v3745 = vperm.slane %v3741, %v3744
    %v3746 = vrot.slane %v3734, 4
    %v3747 = vsel %vm487, %v3746, %v3728
    %v3748 = vrot.slane %v3728, 4
    %v3749 = vsel %vm487, %v3734, %v3748
    %v3751 = vunpack.c.l.s4 1934713408
    %v3752 = vunpack.c.0.s8 %v3751
    %v3753 = vperm.slane %v3747, %v3752
    %v3755 = vunpack.c.l.s4 1934713408
    %v3756 = vunpack.c.0.s8 %v3755
    %v3757 = vperm.slane %v3749, %v3756
    %v3758 = vrot.slane %v3745, 4
    %v3759 = vsel %vm487, %v3758, %v3739
    %v3760 = vrot.slane %v3739, 4
    %v3761 = vsel %vm487, %v3745, %v3760
    %v3763 = vunpack.c.l.s4 1934713408
    %v3764 = vunpack.c.0.s8 %v3763
    %v3765 = vperm.slane %v3759, %v3764
    %v3767 = vunpack.c.l.s4 1934713408
    %v3768 = vunpack.c.0.s8 %v3767
    %v3769 = vperm.slane %v3761, %v3768
    %v3770 = vrot.slane %v3765, 4
    %v3771 = vsel %vm487, %v3770, %v3753
    %v3772 = vrot.slane %v3753, 4
    %v3773 = vsel %vm487, %v3765, %v3772
    %v3774 = vrot.slane %v3769, 4
    %v3775 = vsel %vm487, %v3774, %v3757
    %v3776 = vrot.slane %v3757, 4
    %v3777 = vsel %vm487, %v3769, %v3776
    %3780 = vrot.lane.b32.xlu0 %v3502, 120
    %v3781 = vpop.permute.xlu0 %3780
    %3782 = vrot.lane.b32.xlu0 %v3505, 120
    %v3783 = vpop.permute.xlu0 %3782
    %3786 = vrot.lane.b32.xlu0 %v3502, 112
    %v3787 = vpop.permute.xlu0 %3786
    %3788 = vrot.lane.b32.xlu0 %v3505, 112
    %v3789 = vpop.permute.xlu0 %3788
    %3792 = vrot.lane.b32.xlu0 %v3502, 104
    %v3793 = vpop.permute.xlu0 %3792
    %3794 = vrot.lane.b32.xlu0 %v3505, 104
    %v3795 = vpop.permute.xlu0 %3794
    %v3798 = vrot.slane %v3787, 4
    %v3799 = vsel %vm487, %v3798, %v3502
    %v3800 = vrot.slane %v3502, 4
    %v3801 = vsel %vm487, %v3787, %v3800
    %v3803 = vunpack.c.l.s4 1983009808
    %v3804 = vunpack.c.0.s8 %v3803
    %v3805 = vperm.slane %v3799, %v3804
    %v3807 = vunpack.c.l.s4 1983009808
    %v3808 = vunpack.c.0.s8 %v3807
    %v3809 = vperm.slane %v3801, %v3808
    %v3810 = vrot.slane %v3793, 4
    %v3811 = vsel %vm487, %v3810, %v3781
    %v3812 = vrot.slane %v3781, 4
    %v3813 = vsel %vm487, %v3793, %v3812
    %v3815 = vunpack.c.l.s4 1983009808
    %v3816 = vunpack.c.0.s8 %v3815
    %v3817 = vperm.slane %v3811, %v3816
    %v3819 = vunpack.c.l.s4 1983009808
    %v3820 = vunpack.c.0.s8 %v3819
    %v3821 = vperm.slane %v3813, %v3820
    %v3822 = vrot.slane %v3817, 4
    %v3823 = vsel %vm487, %v3822, %v3805
    %v3824 = vrot.slane %v3805, 4
    %v3825 = vsel %vm487, %v3817, %v3824
    %v3827 = vunpack.c.l.s4 1934713408
    %v3828 = vunpack.c.0.s8 %v3827
    %v3829 = vperm.slane %v3823, %v3828
    %v3831 = vunpack.c.l.s4 1934713408
    %v3832 = vunpack.c.0.s8 %v3831
    %v3833 = vperm.slane %v3825, %v3832
    %v3834 = vrot.slane %v3821, 4
    %v3835 = vsel %vm487, %v3834, %v3809
    %v3836 = vrot.slane %v3809, 4
    %v3837 = vsel %vm487, %v3821, %v3836
    %v3839 = vunpack.c.l.s4 1934713408
    %v3840 = vunpack.c.0.s8 %v3839
    %v3841 = vperm.slane %v3835, %v3840
    %v3843 = vunpack.c.l.s4 1934713408
    %v3844 = vunpack.c.0.s8 %v3843
    %v3845 = vperm.slane %v3837, %v3844
    %v3846 = vrot.slane %v3829, 4
    %v3847 = vsel %vm487, 0.0, %v3846
    %v3848 = vrot.slane %v3833, 4
    %v3849 = vsel %vm487, 0.0, %v3848
    %v3850 = vrot.slane %v3841, 4
    %v3851 = vsel %vm487, 0.0, %v3850
    %v3852 = vrot.slane %v3845, 4
    %v3853 = vsel %vm487, 0.0, %v3852
    %v3854 = vrot.slane %v3789, 4
    %v3855 = vsel %vm487, %v3854, %v3505
    %v3856 = vrot.slane %v3505, 4
    %v3857 = vsel %vm487, %v3789, %v3856
    %v3859 = vunpack.c.l.s4 1983009808
    %v3860 = vunpack.c.0.s8 %v3859
    %v3861 = vperm.slane %v3855, %v3860
    %v3863 = vunpack.c.l.s4 1983009808
    %v3864 = vunpack.c.0.s8 %v3863
    %v3865 = vperm.slane %v3857, %v3864
    %v3866 = vrot.slane %v3795, 4
    %v3867 = vsel %vm487, %v3866, %v3783
    %v3868 = vrot.slane %v3783, 4
    %v3869 = vsel %vm487, %v3795, %v3868
    %v3871 = vunpack.c.l.s4 1983009808
    %v3872 = vunpack.c.0.s8 %v3871
    %v3873 = vperm.slane %v3867, %v3872
    %v3875 = vunpack.c.l.s4 1983009808
    %v3876 = vunpack.c.0.s8 %v3875
    %v3877 = vperm.slane %v3869, %v3876
    %v3878 = vrot.slane %v3873, 4
    %v3879 = vsel %vm487, %v3878, %v3861
    %v3880 = vrot.slane %v3861, 4
    %v3881 = vsel %vm487, %v3873, %v3880
    %v3883 = vunpack.c.l.s4 1934713408
    %v3884 = vunpack.c.0.s8 %v3883
    %v3885 = vperm.slane %v3879, %v3884
    %v3887 = vunpack.c.l.s4 1934713408
    %v3888 = vunpack.c.0.s8 %v3887
    %v3889 = vperm.slane %v3881, %v3888
    %v3890 = vrot.slane %v3877, 4
    %v3891 = vsel %vm487, %v3890, %v3865
    %v3892 = vrot.slane %v3865, 4
    %v3893 = vsel %vm487, %v3877, %v3892
    %v3895 = vunpack.c.l.s4 1934713408
    %v3896 = vunpack.c.0.s8 %v3895
    %v3897 = vperm.slane %v3891, %v3896
    %v3899 = vunpack.c.l.s4 1934713408
    %v3900 = vunpack.c.0.s8 %v3899
    %v3901 = vperm.slane %v3893, %v3900
    %v3902 = vrot.slane %v3885, 4
    %v3903 = vsel %vm487, 0.0, %v3902
    %v3904 = vrot.slane %v3889, 4
    %v3905 = vsel %vm487, 0.0, %v3904
    %v3906 = vrot.slane %v3897, 4
    %v3907 = vsel %vm487, 0.0, %v3906
    %v3908 = vrot.slane %v3901, 4
    %v3909 = vsel %vm487, 0.0, %v3908
    %v3910 = vsel %vm487, %v3848, %v3829
    %v3912 = vunpack.c.l.s4 1983009808
    %v3913 = vunpack.c.0.s8 %v3912
    %v3914 = vperm.slane %v3910, %v3913
    %v3915 = vrot.slane %v3849, 4
    %v3916 = vsel %vm487, %v3915, %v3847
    %v3918 = vunpack.c.l.s4 1983009808
    %v3919 = vunpack.c.0.s8 %v3918
    %v3920 = vperm.slane %v3916, %v3919
    %v3921 = vsel %vm487, %v3852, %v3841
    %v3923 = vunpack.c.l.s4 1983009808
    %v3924 = vunpack.c.0.s8 %v3923
    %v3925 = vperm.slane %v3921, %v3924
    %v3926 = vrot.slane %v3853, 4
    %v3927 = vsel %vm487, %v3926, %v3851
    %v3929 = vunpack.c.l.s4 1983009808
    %v3930 = vunpack.c.0.s8 %v3929
    %v3931 = vperm.slane %v3927, %v3930
    %v3932 = vrot.slane %v3920, 4
    %v3933 = vsel %vm487, %v3932, %v3914
    %v3934 = vrot.slane %v3914, 4
    %v3935 = vsel %vm487, %v3920, %v3934
    %v3937 = vunpack.c.l.s4 1934713408
    %v3938 = vunpack.c.0.s8 %v3937
    %v3939 = vperm.slane %v3933, %v3938
    %v3941 = vunpack.c.l.s4 1934713408
    %v3942 = vunpack.c.0.s8 %v3941
    %v3943 = vperm.slane %v3935, %v3942
    %v3944 = vrot.slane %v3931, 4
    %v3945 = vsel %vm487, %v3944, %v3925
    %v3946 = vrot.slane %v3925, 4
    %v3947 = vsel %vm487, %v3931, %v3946
    %v3949 = vunpack.c.l.s4 1934713408
    %v3950 = vunpack.c.0.s8 %v3949
    %v3951 = vperm.slane %v3945, %v3950
    %v3953 = vunpack.c.l.s4 1934713408
    %v3954 = vunpack.c.0.s8 %v3953
    %v3955 = vperm.slane %v3947, %v3954
    %v3956 = vrot.slane %v3951, 4
    %v3957 = vsel %vm487, %v3956, %v3939
    %v3958 = vrot.slane %v3939, 4
    %v3959 = vsel %vm487, %v3951, %v3958
    %v3960 = vrot.slane %v3955, 4
    %v3961 = vsel %vm487, %v3960, %v3943
    %v3962 = vrot.slane %v3943, 4
    %v3963 = vsel %vm487, %v3955, %v3962
    %v3964 = vsel %vm487, %v3904, %v3885
    %v3966 = vunpack.c.l.s4 1983009808
    %v3967 = vunpack.c.0.s8 %v3966
    %v3968 = vperm.slane %v3964, %v3967
    %v3969 = vrot.slane %v3905, 4
    %v3970 = vsel %vm487, %v3969, %v3903
    %v3972 = vunpack.c.l.s4 1983009808
    %v3973 = vunpack.c.0.s8 %v3972
    %v3974 = vperm.slane %v3970, %v3973
    %v3975 = vsel %vm487, %v3908, %v3897
    %v3977 = vunpack.c.l.s4 1983009808
    %v3978 = vunpack.c.0.s8 %v3977
    %v3979 = vperm.slane %v3975, %v3978
    %v3980 = vrot.slane %v3909, 4
    %v3981 = vsel %vm487, %v3980, %v3907
    %v3983 = vunpack.c.l.s4 1983009808
    %v3984 = vunpack.c.0.s8 %v3983
    %v3985 = vperm.slane %v3981, %v3984
    %v3986 = vrot.slane %v3974, 4
    %v3987 = vsel %vm487, %v3986, %v3968
    %v3988 = vrot.slane %v3968, 4
    %v3989 = vsel %vm487, %v3974, %v3988
    %v3991 = vunpack.c.l.s4 1934713408
    %v3992 = vunpack.c.0.s8 %v3991
    %v3993 = vperm.slane %v3987, %v3992
    %v3995 = vunpack.c.l.s4 1934713408
    %v3996 = vunpack.c.0.s8 %v3995
    %v3997 = vperm.slane %v3989, %v3996
    %v3998 = vrot.slane %v3985, 4
    %v3999 = vsel %vm487, %v3998, %v3979
    %v4000 = vrot.slane %v3979, 4
    %v4001 = vsel %vm487, %v3985, %v4000
    %v4003 = vunpack.c.l.s4 1934713408
    %v4004 = vunpack.c.0.s8 %v4003
    %v4005 = vperm.slane %v3999, %v4004
    %v4007 = vunpack.c.l.s4 1934713408
    %v4008 = vunpack.c.0.s8 %v4007
    %v4009 = vperm.slane %v4001, %v4008
    %v4010 = vrot.slane %v4005, 4
    %v4011 = vsel %vm487, %v4010, %v3993
    %v4012 = vrot.slane %v3993, 4
    %v4013 = vsel %vm487, %v4005, %v4012
    %v4014 = vrot.slane %v4009, 4
    %v4015 = vsel %vm487, %v4014, %v3997
    %v4016 = vrot.slane %v3997, 4
    %v4017 = vsel %vm487, %v4009, %v4016
    %4020 = vrot.lane.b32.xlu0 %v3533, 120
    %v4021 = vpop.permute.xlu0 %4020
    %4022 = vrot.lane.b32.xlu0 %v3536, 120
    %v4023 = vpop.permute.xlu0 %4022
    %4026 = vrot.lane.b32.xlu0 %v3533, 112
    %v4027 = vpop.permute.xlu0 %4026
    %4028 = vrot.lane.b32.xlu0 %v3536, 112
    %v4029 = vpop.permute.xlu0 %4028
    %4032 = vrot.lane.b32.xlu0 %v3533, 104
    %v4033 = vpop.permute.xlu0 %4032
    %4034 = vrot.lane.b32.xlu0 %v3536, 104
    %v4035 = vpop.permute.xlu0 %4034
    %v4038 = vrot.slane %v4027, 4
    %v4039 = vsel %vm487, %v4038, %v3533
    %v4040 = vrot.slane %v3533, 4
    %v4041 = vsel %vm487, %v4027, %v4040
    %v4043 = vunpack.c.l.s4 1983009808
    %v4044 = vunpack.c.0.s8 %v4043
    %v4045 = vperm.slane %v4039, %v4044
    %v4047 = vunpack.c.l.s4 1983009808
    %v4048 = vunpack.c.0.s8 %v4047
    %v4049 = vperm.slane %v4041, %v4048
    %v4050 = vrot.slane %v4033, 4
    %v4051 = vsel %vm487, %v4050, %v4021
    %v4052 = vrot.slane %v4021, 4
    %v4053 = vsel %vm487, %v4033, %v4052
    %v4055 = vunpack.c.l.s4 1983009808
    %v4056 = vunpack.c.0.s8 %v4055
    %v4057 = vperm.slane %v4051, %v4056
    %v4059 = vunpack.c.l.s4 1983009808
    %v4060 = vunpack.c.0.s8 %v4059
    %v4061 = vperm.slane %v4053, %v4060
    %v4062 = vrot.slane %v4057, 4
    %v4063 = vsel %vm487, %v4062, %v4045
    %v4064 = vrot.slane %v4045, 4
    %v4065 = vsel %vm487, %v4057, %v4064
    %v4067 = vunpack.c.l.s4 1934713408
    %v4068 = vunpack.c.0.s8 %v4067
    %v4069 = vperm.slane %v4063, %v4068
    %v4071 = vunpack.c.l.s4 1934713408
    %v4072 = vunpack.c.0.s8 %v4071
    %v4073 = vperm.slane %v4065, %v4072
    %v4074 = vrot.slane %v4061, 4
    %v4075 = vsel %vm487, %v4074, %v4049
    %v4076 = vrot.slane %v4049, 4
    %v4077 = vsel %vm487, %v4061, %v4076
    %v4079 = vunpack.c.l.s4 1934713408
    %v4080 = vunpack.c.0.s8 %v4079
    %v4081 = vperm.slane %v4075, %v4080
    %v4083 = vunpack.c.l.s4 1934713408
    %v4084 = vunpack.c.0.s8 %v4083
    %v4085 = vperm.slane %v4077, %v4084
    %v4086 = vrot.slane %v4069, 4
    %v4087 = vsel %vm487, 0.0, %v4086
    %v4088 = vrot.slane %v4073, 4
    %v4089 = vsel %vm487, 0.0, %v4088
    %v4090 = vrot.slane %v4081, 4
    %v4091 = vsel %vm487, 0.0, %v4090
    %v4092 = vrot.slane %v4085, 4
    %v4093 = vsel %vm487, 0.0, %v4092
    %v4094 = vrot.slane %v4029, 4
    %v4095 = vsel %vm487, %v4094, %v3536
    %v4096 = vrot.slane %v3536, 4
    %v4097 = vsel %vm487, %v4029, %v4096
    %v4099 = vunpack.c.l.s4 1983009808
    %v4100 = vunpack.c.0.s8 %v4099
    %v4101 = vperm.slane %v4095, %v4100
    %v4103 = vunpack.c.l.s4 1983009808
    %v4104 = vunpack.c.0.s8 %v4103
    %v4105 = vperm.slane %v4097, %v4104
    %v4106 = vrot.slane %v4035, 4
    %v4107 = vsel %vm487, %v4106, %v4023
    %v4108 = vrot.slane %v4023, 4
    %v4109 = vsel %vm487, %v4035, %v4108
    %v4111 = vunpack.c.l.s4 1983009808
    %v4112 = vunpack.c.0.s8 %v4111
    %v4113 = vperm.slane %v4107, %v4112
    %v4115 = vunpack.c.l.s4 1983009808
    %v4116 = vunpack.c.0.s8 %v4115
    %v4117 = vperm.slane %v4109, %v4116
    %v4118 = vrot.slane %v4113, 4
    %v4119 = vsel %vm487, %v4118, %v4101
    %v4120 = vrot.slane %v4101, 4
    %v4121 = vsel %vm487, %v4113, %v4120
    %v4123 = vunpack.c.l.s4 1934713408
    %v4124 = vunpack.c.0.s8 %v4123
    %v4125 = vperm.slane %v4119, %v4124
    %v4127 = vunpack.c.l.s4 1934713408
    %v4128 = vunpack.c.0.s8 %v4127
    %v4129 = vperm.slane %v4121, %v4128
    %v4130 = vrot.slane %v4117, 4
    %v4131 = vsel %vm487, %v4130, %v4105
    %v4132 = vrot.slane %v4105, 4
    %v4133 = vsel %vm487, %v4117, %v4132
    %v4135 = vunpack.c.l.s4 1934713408
    %v4136 = vunpack.c.0.s8 %v4135
    %v4137 = vperm.slane %v4131, %v4136
    %v4139 = vunpack.c.l.s4 1934713408
    %v4140 = vunpack.c.0.s8 %v4139
    %v4141 = vperm.slane %v4133, %v4140
    %v4142 = vrot.slane %v4125, 4
    %v4143 = vsel %vm487, 0.0, %v4142
    %v4144 = vrot.slane %v4129, 4
    %v4145 = vsel %vm487, 0.0, %v4144
    %v4146 = vrot.slane %v4137, 4
    %v4147 = vsel %vm487, 0.0, %v4146
    %v4148 = vrot.slane %v4141, 4
    %v4149 = vsel %vm487, 0.0, %v4148
    %v4150 = vsel %vm487, %v4088, %v4069
    %v4152 = vunpack.c.l.s4 1983009808
    %v4153 = vunpack.c.0.s8 %v4152
    %v4154 = vperm.slane %v4150, %v4153
    %v4155 = vrot.slane %v4089, 4
    %v4156 = vsel %vm487, %v4155, %v4087
    %v4158 = vunpack.c.l.s4 1983009808
    %v4159 = vunpack.c.0.s8 %v4158
    %v4160 = vperm.slane %v4156, %v4159
    %v4161 = vsel %vm487, %v4092, %v4081
    %v4163 = vunpack.c.l.s4 1983009808
    %v4164 = vunpack.c.0.s8 %v4163
    %v4165 = vperm.slane %v4161, %v4164
    %v4166 = vrot.slane %v4093, 4
    %v4167 = vsel %vm487, %v4166, %v4091
    %v4169 = vunpack.c.l.s4 1983009808
    %v4170 = vunpack.c.0.s8 %v4169
    %v4171 = vperm.slane %v4167, %v4170
    %v4172 = vrot.slane %v4160, 4
    %v4173 = vsel %vm487, %v4172, %v4154
    %v4174 = vrot.slane %v4154, 4
    %v4175 = vsel %vm487, %v4160, %v4174
    %v4177 = vunpack.c.l.s4 1934713408
    %v4178 = vunpack.c.0.s8 %v4177
    %v4179 = vperm.slane %v4173, %v4178
    %v4181 = vunpack.c.l.s4 1934713408
    %v4182 = vunpack.c.0.s8 %v4181
    %v4183 = vperm.slane %v4175, %v4182
    %v4184 = vrot.slane %v4171, 4
    %v4185 = vsel %vm487, %v4184, %v4165
    %v4186 = vrot.slane %v4165, 4
    %v4187 = vsel %vm487, %v4171, %v4186
    %v4189 = vunpack.c.l.s4 1934713408
    %v4190 = vunpack.c.0.s8 %v4189
    %v4191 = vperm.slane %v4185, %v4190
    %v4193 = vunpack.c.l.s4 1934713408
    %v4194 = vunpack.c.0.s8 %v4193
    %v4195 = vperm.slane %v4187, %v4194
    %v4196 = vrot.slane %v4191, 4
    %v4197 = vsel %vm487, %v4196, %v4179
    %v4198 = vrot.slane %v4179, 4
    %v4199 = vsel %vm487, %v4191, %v4198
    %v4200 = vrot.slane %v4195, 4
    %v4201 = vsel %vm487, %v4200, %v4183
    %v4202 = vrot.slane %v4183, 4
    %v4203 = vsel %vm487, %v4195, %v4202
    %v4204 = vsel %vm487, %v4144, %v4125
    %v4206 = vunpack.c.l.s4 1983009808
    %v4207 = vunpack.c.0.s8 %v4206
    %v4208 = vperm.slane %v4204, %v4207
    %v4209 = vrot.slane %v4145, 4
    %v4210 = vsel %vm487, %v4209, %v4143
    %v4212 = vunpack.c.l.s4 1983009808
    %v4213 = vunpack.c.0.s8 %v4212
    %v4214 = vperm.slane %v4210, %v4213
    %v4215 = vsel %vm487, %v4148, %v4137
    %v4217 = vunpack.c.l.s4 1983009808
    %v4218 = vunpack.c.0.s8 %v4217
    %v4219 = vperm.slane %v4215, %v4218
    %v4220 = vrot.slane %v4149, 4
    %v4221 = vsel %vm487, %v4220, %v4147
    %v4223 = vunpack.c.l.s4 1983009808
    %v4224 = vunpack.c.0.s8 %v4223
    %v4225 = vperm.slane %v4221, %v4224
    %v4226 = vrot.slane %v4214, 4
    %v4227 = vsel %vm487, %v4226, %v4208
    %v4228 = vrot.slane %v4208, 4
    %v4229 = vsel %vm487, %v4214, %v4228
    %v4231 = vunpack.c.l.s4 1934713408
    %v4232 = vunpack.c.0.s8 %v4231
    %v4233 = vperm.slane %v4227, %v4232
    %v4235 = vunpack.c.l.s4 1934713408
    %v4236 = vunpack.c.0.s8 %v4235
    %v4237 = vperm.slane %v4229, %v4236
    %v4238 = vrot.slane %v4225, 4
    %v4239 = vsel %vm487, %v4238, %v4219
    %v4240 = vrot.slane %v4219, 4
    %v4241 = vsel %vm487, %v4225, %v4240
    %v4243 = vunpack.c.l.s4 1934713408
    %v4244 = vunpack.c.0.s8 %v4243
    %v4245 = vperm.slane %v4239, %v4244
    %v4247 = vunpack.c.l.s4 1934713408
    %v4248 = vunpack.c.0.s8 %v4247
    %v4249 = vperm.slane %v4241, %v4248
    %v4250 = vrot.slane %v4245, 4
    %v4251 = vsel %vm487, %v4250, %v4233
    %v4252 = vrot.slane %v4233, 4
    %v4253 = vsel %vm487, %v4245, %v4252
    %v4254 = vrot.slane %v4249, 4
    %v4255 = vsel %vm487, %v4254, %v4237
    %v4256 = vrot.slane %v4237, 4
    %v4257 = vsel %vm487, %v4249, %v4256
    %v4259 = vsel %vm2076, %v3717, 0
    %v4262 = vsel %vm2076, %v3957, 0
    %4264 = vmatpush.xpose.msra.mxu0 0.0
    %4265 = vmatpush.xpose.msra.mxu0 0.0
    %4266 = vmatpush.xpose.msra.mxu0 0.0
    %4267 = vmatpush.xpose.msra.mxu0 0.0
    %4268 = vmatpush.xpose.msra.mxu0 0.0
    %4269 = vmatpush.xpose.msra.mxu0 0.0
    %4270 = vmatpush.xpose.msra.mxu0 0.0
    %4271 = vmatpush.xpose.msra.mxu0 0.0
    %4272 = vmatpush.xpose.msra.mxu0 0.0
    %4273 = vmatpush.xpose.msra.mxu0 0.0
    %4274 = vmatpush.xpose.msra.mxu0 0.0
    %4275 = vmatpush.xpose.msra.mxu0 0.0
    %4276 = vmatpush.xpose.msra.mxu0 0.0
    %4277 = vmatpush.xpose.msra.mxu0 0.0
    %4278 = vmatpush.xpose.msra.mxu0 0.0
    %4279 = vmatpush.xpose.msra.mxu0 %v4262
    %4280 = vmatmul.f32.gmra.mxu0 %v4259
    %v4281 = vpop.f32.mrf.mxu0
    %v4282 = vadd.f32 0.0, %v4281
    %4283 = vdwg.mxu0
    %v4285 = vsel %vm2076, %v3719, 0
    %v4288 = vsel %vm2076, %v3959, 0
    %4290 = vmatpush.xpose.msra.mxu0 0.0
    %4291 = vmatpush.xpose.msra.mxu0 0.0
    %4292 = vmatpush.xpose.msra.mxu0 0.0
    %4293 = vmatpush.xpose.msra.mxu0 0.0
    %4294 = vmatpush.xpose.msra.mxu0 0.0
    %4295 = vmatpush.xpose.msra.mxu0 0.0
    %4296 = vmatpush.xpose.msra.mxu0 0.0
    %4297 = vmatpush.xpose.msra.mxu0 0.0
    %4298 = vmatpush.xpose.msra.mxu0 0.0
    %4299 = vmatpush.xpose.msra.mxu0 0.0
    %4300 = vmatpush.xpose.msra.mxu0 0.0
    %4301 = vmatpush.xpose.msra.mxu0 0.0
    %4302 = vmatpush.xpose.msra.mxu0 0.0
    %4303 = vmatpush.xpose.msra.mxu0 0.0
    %4304 = vmatpush.xpose.msra.mxu0 0.0
    %4305 = vmatpush.xpose.msra.mxu0 %v4288
    %4306 = vmatmul.f32.gmra.mxu0 %v4285
    %v4307 = vpop.f32.mrf.mxu0
    %v4308 = vadd.f32 0.0, %v4307
    %4309 = vdwg.mxu0
    %v4311 = vsel %vm2076, %v3721, 0
    %v4314 = vsel %vm2076, %v3961, 0
    %4316 = vmatpush.xpose.msra.mxu0 0.0
    %4317 = vmatpush.xpose.msra.mxu0 0.0
    %4318 = vmatpush.xpose.msra.mxu0 0.0
    %4319 = vmatpush.xpose.msra.mxu0 0.0
    %4320 = vmatpush.xpose.msra.mxu0 0.0
    %4321 = vmatpush.xpose.msra.mxu0 0.0
    %4322 = vmatpush.xpose.msra.mxu0 0.0
    %4323 = vmatpush.xpose.msra.mxu0 0.0
    %4324 = vmatpush.xpose.msra.mxu0 0.0
    %4325 = vmatpush.xpose.msra.mxu0 0.0
    %4326 = vmatpush.xpose.msra.mxu0 0.0
    %4327 = vmatpush.xpose.msra.mxu0 0.0
    %4328 = vmatpush.xpose.msra.mxu0 0.0
    %4329 = vmatpush.xpose.msra.mxu0 0.0
    %4330 = vmatpush.xpose.msra.mxu0 0.0
    %4331 = vmatpush.xpose.msra.mxu0 %v4314
    %4332 = vmatmul.f32.gmra.mxu0 %v4311
    %v4333 = vpop.f32.mrf.mxu0
    %v4334 = vadd.f32 0.0, %v4333
    %4335 = vdwg.mxu0
    %v4337 = vsel %vm2076, %v3723, 0
    %v4340 = vsel %vm2076, %v3963, 0
    %4342 = vmatpush.xpose.msra.mxu0 0.0
    %4343 = vmatpush.xpose.msra.mxu0 0.0
    %4344 = vmatpush.xpose.msra.mxu0 0.0
    %4345 = vmatpush.xpose.msra.mxu0 0.0
    %4346 = vmatpush.xpose.msra.mxu0 0.0
    %4347 = vmatpush.xpose.msra.mxu0 0.0
    %4348 = vmatpush.xpose.msra.mxu0 0.0
    %4349 = vmatpush.xpose.msra.mxu0 0.0
    %4350 = vmatpush.xpose.msra.mxu0 0.0
    %4351 = vmatpush.xpose.msra.mxu0 0.0
    %4352 = vmatpush.xpose.msra.mxu0 0.0
    %4353 = vmatpush.xpose.msra.mxu0 0.0
    %4354 = vmatpush.xpose.msra.mxu0 0.0
    %4355 = vmatpush.xpose.msra.mxu0 0.0
    %4356 = vmatpush.xpose.msra.mxu0 0.0
    %4357 = vmatpush.xpose.msra.mxu0 %v4340
    %4358 = vmatmul.f32.gmra.mxu0 %v4337
    %v4359 = vpop.f32.mrf.mxu0
    %v4360 = vadd.f32 0.0, %v4359
    %4361 = vdwg.mxu0
    %v4363 = vsel %vm2076, %v3771, 0
    %v4366 = vsel %vm2076, %v4011, 0
    %4368 = vmatpush.xpose.msra.mxu0 0.0
    %4369 = vmatpush.xpose.msra.mxu0 0.0
    %4370 = vmatpush.xpose.msra.mxu0 0.0
    %4371 = vmatpush.xpose.msra.mxu0 0.0
    %4372 = vmatpush.xpose.msra.mxu0 0.0
    %4373 = vmatpush.xpose.msra.mxu0 0.0
    %4374 = vmatpush.xpose.msra.mxu0 0.0
    %4375 = vmatpush.xpose.msra.mxu0 0.0
    %4376 = vmatpush.xpose.msra.mxu0 0.0
    %4377 = vmatpush.xpose.msra.mxu0 0.0
    %4378 = vmatpush.xpose.msra.mxu0 0.0
    %4379 = vmatpush.xpose.msra.mxu0 0.0
    %4380 = vmatpush.xpose.msra.mxu0 0.0
    %4381 = vmatpush.xpose.msra.mxu0 0.0
    %4382 = vmatpush.xpose.msra.mxu0 0.0
    %4383 = vmatpush.xpose.msra.mxu0 %v4366
    %4384 = vmatmul.f32.gmra.mxu0 %v4363
    %v4385 = vpop.f32.mrf.mxu0
    %v4386 = vadd.f32 0.0, %v4385
    %4387 = vdwg.mxu0
    %v4389 = vsel %vm2076, %v3773, 0
    %v4392 = vsel %vm2076, %v4013, 0
    %4394 = vmatpush.xpose.msra.mxu0 0.0
    %4395 = vmatpush.xpose.msra.mxu0 0.0
    %4396 = vmatpush.xpose.msra.mxu0 0.0
    %4397 = vmatpush.xpose.msra.mxu0 0.0
    %4398 = vmatpush.xpose.msra.mxu0 0.0
    %4399 = vmatpush.xpose.msra.mxu0 0.0
    %4400 = vmatpush.xpose.msra.mxu0 0.0
    %4401 = vmatpush.xpose.msra.mxu0 0.0
    %4402 = vmatpush.xpose.msra.mxu0 0.0
    %4403 = vmatpush.xpose.msra.mxu0 0.0
    %4404 = vmatpush.xpose.msra.mxu0 0.0
    %4405 = vmatpush.xpose.msra.mxu0 0.0
    %4406 = vmatpush.xpose.msra.mxu0 0.0
    %4407 = vmatpush.xpose.msra.mxu0 0.0
    %4408 = vmatpush.xpose.msra.mxu0 0.0
    %4409 = vmatpush.xpose.msra.mxu0 %v4392
    %4410 = vmatmul.f32.gmra.mxu0 %v4389
    %v4411 = vpop.f32.mrf.mxu0
    %v4412 = vadd.f32 0.0, %v4411
    %4413 = vdwg.mxu0
    %v4415 = vsel %vm2076, %v3775, 0
    %v4418 = vsel %vm2076, %v4015, 0
    %4420 = vmatpush.xpose.msra.mxu0 0.0
    %4421 = vmatpush.xpose.msra.mxu0 0.0
    %4422 = vmatpush.xpose.msra.mxu0 0.0
    %4423 = vmatpush.xpose.msra.mxu0 0.0
    %4424 = vmatpush.xpose.msra.mxu0 0.0
    %4425 = vmatpush.xpose.msra.mxu0 0.0
    %4426 = vmatpush.xpose.msra.mxu0 0.0
    %4427 = vmatpush.xpose.msra.mxu0 0.0
    %4428 = vmatpush.xpose.msra.mxu0 0.0
    %4429 = vmatpush.xpose.msra.mxu0 0.0
    %4430 = vmatpush.xpose.msra.mxu0 0.0
    %4431 = vmatpush.xpose.msra.mxu0 0.0
    %4432 = vmatpush.xpose.msra.mxu0 0.0
    %4433 = vmatpush.xpose.msra.mxu0 0.0
    %4434 = vmatpush.xpose.msra.mxu0 0.0
    %4435 = vmatpush.xpose.msra.mxu0 %v4418
    %4436 = vmatmul.f32.gmra.mxu0 %v4415
    %v4437 = vpop.f32.mrf.mxu0
    %v4438 = vadd.f32 0.0, %v4437
    %4439 = vdwg.mxu0
    %v4441 = vsel %vm2076, %v3777, 0
    %v4444 = vsel %vm2076, %v4017, 0
    %4446 = vmatpush.xpose.msra.mxu0 0.0
    %4447 = vmatpush.xpose.msra.mxu0 0.0
    %4448 = vmatpush.xpose.msra.mxu0 0.0
    %4449 = vmatpush.xpose.msra.mxu0 0.0
    %4450 = vmatpush.xpose.msra.mxu0 0.0
    %4451 = vmatpush.xpose.msra.mxu0 0.0
    %4452 = vmatpush.xpose.msra.mxu0 0.0
    %4453 = vmatpush.xpose.msra.mxu0 0.0
    %4454 = vmatpush.xpose.msra.mxu0 0.0
    %4455 = vmatpush.xpose.msra.mxu0 0.0
    %4456 = vmatpush.xpose.msra.mxu0 0.0
    %4457 = vmatpush.xpose.msra.mxu0 0.0
    %4458 = vmatpush.xpose.msra.mxu0 0.0
    %4459 = vmatpush.xpose.msra.mxu0 0.0
    %4460 = vmatpush.xpose.msra.mxu0 0.0
    %4461 = vmatpush.xpose.msra.mxu0 %v4444
    %4462 = vmatmul.f32.gmra.mxu0 %v4441
    %v4463 = vpop.f32.mrf.mxu0
    %v4464 = vadd.f32 0.0, %v4463
    %4465 = vdwg.mxu0
    %v4466 = vmul.f32 %v4282, 0.35355338
    %v4467 = vmul.f32 %v4308, 0.35355338
    %v4468 = vmul.f32 %v4334, 0.35355338
    %v4469 = vmul.f32 %v4360, 0.35355338
    %v4470 = vmul.f32 %v4386, 0.35355338
    %v4471 = vmul.f32 %v4412, 0.35355338
    %v4472 = vmul.f32 %v4438, 0.35355338
    %v4473 = vmul.f32 %v4464, 0.35355338
    %v4474 = vsel %vm2076, %v4466, -inf
    %4475 = vmax.xlane.f32.xlu0 %v4474
    %v4476 = vpop.xlane.xlu0 %4475
    %v4477 = vsel %vm2076, %v4467, -inf
    %4478 = vmax.xlane.f32.xlu0 %v4477
    %v4479 = vpop.xlane.xlu0 %4478
    %v4480 = vsel %vm2076, %v4468, -inf
    %4481 = vmax.xlane.f32.xlu0 %v4480
    %v4482 = vpop.xlane.xlu0 %4481
    %v4483 = vsel %vm2076, %v4469, -inf
    %4484 = vmax.xlane.f32.xlu0 %v4483
    %v4485 = vpop.xlane.xlu0 %4484
    %v4486 = vsel %vm2076, %v4470, -inf
    %4487 = vmax.xlane.f32.xlu0 %v4486
    %v4488 = vpop.xlane.xlu0 %4487
    %v4489 = vsel %vm2076, %v4471, -inf
    %4490 = vmax.xlane.f32.xlu0 %v4489
    %v4491 = vpop.xlane.xlu0 %4490
    %v4492 = vsel %vm2076, %v4472, -inf
    %4493 = vmax.xlane.f32.xlu0 %v4492
    %v4494 = vpop.xlane.xlu0 %4493
    %v4495 = vsel %vm2076, %v4473, -inf
    %4496 = vmax.xlane.f32.xlu0 %v4495
    %v4497 = vpop.xlane.xlu0 %4496
    %v4498 = vsub.f32 %v4466, %v4476
    %v4499 = vsub.f32 %v4467, %v4479
    %v4500 = vsub.f32 %v4468, %v4482
    %v4501 = vsub.f32 %v4469, %v4485
    %v4502 = vsub.f32 %v4470, %v4488
    %v4503 = vsub.f32 %v4471, %v4491
    %v4504 = vsub.f32 %v4472, %v4494
    %v4505 = vsub.f32 %v4473, %v4497
    %v4506 = vmul.f32 %v4498, 1.442695
    %v4507 = vpow.pop %v4506
    %v4508 = vmul.f32 %v4499, 1.442695
    %v4509 = vpow.pop %v4508
    %v4510 = vmul.f32 %v4500, 1.442695
    %v4511 = vpow.pop %v4510
    %v4512 = vmul.f32 %v4501, 1.442695
    %v4513 = vpow.pop %v4512
    %v4514 = vmul.f32 %v4502, 1.442695
    %v4515 = vpow.pop %v4514
    %v4516 = vmul.f32 %v4503, 1.442695
    %v4517 = vpow.pop %v4516
    %v4518 = vmul.f32 %v4504, 1.442695
    %v4519 = vpow.pop %v4518
    %v4520 = vmul.f32 %v4505, 1.442695
    %v4521 = vpow.pop %v4520
    %v4522 = vsel %vm2076, %v4507, 0.0
    %4523 = vadd.xlane.f32.xlu0 %v4522
    %v4524 = vpop.xlane.xlu0 %4523
    %v4525 = vsel %vm2076, %v4509, 0.0
    %4526 = vadd.xlane.f32.xlu0 %v4525
    %v4527 = vpop.xlane.xlu0 %4526
    %v4528 = vsel %vm2076, %v4511, 0.0
    %4529 = vadd.xlane.f32.xlu0 %v4528
    %v4530 = vpop.xlane.xlu0 %4529
    %v4531 = vsel %vm2076, %v4513, 0.0
    %4532 = vadd.xlane.f32.xlu0 %v4531
    %v4533 = vpop.xlane.xlu0 %4532
    %v4534 = vsel %vm2076, %v4515, 0.0
    %4535 = vadd.xlane.f32.xlu0 %v4534
    %v4536 = vpop.xlane.xlu0 %4535
    %v4537 = vsel %vm2076, %v4517, 0.0
    %4538 = vadd.xlane.f32.xlu0 %v4537
    %v4539 = vpop.xlane.xlu0 %4538
    %v4540 = vsel %vm2076, %v4519, 0.0
    %4541 = vadd.xlane.f32.xlu0 %v4540
    %v4542 = vpop.xlane.xlu0 %4541
    %v4543 = vsel %vm2076, %v4521, 0.0
    %4544 = vadd.xlane.f32.xlu0 %v4543
    %v4545 = vpop.xlane.xlu0 %4544
    %v4546 = vrcp.pop %v4524
    %v4547 = vrcp.pop %v4527
    %v4548 = vrcp.pop %v4530
    %v4549 = vrcp.pop %v4533
    %v4550 = vrcp.pop %v4536
    %v4551 = vrcp.pop %v4539
    %v4552 = vrcp.pop %v4542
    %v4553 = vrcp.pop %v4545
    %v4554 = vmul.f32 %v4507, %v4546
    %v4555 = vmul.f32 %v4509, %v4547
    %v4556 = vmul.f32 %v4511, %v4548
    %v4557 = vmul.f32 %v4513, %v4549
    %v4558 = vmul.f32 %v4515, %v4550
    %v4559 = vmul.f32 %v4517, %v4551
    %v4560 = vmul.f32 %v4519, %v4552
    %v4561 = vmul.f32 %v4521, %v4553
    %v4563 = vsel %vm2076, %v4554, 0
    %4565 = vmatpush.msra.mxu0 0.0
    %4566 = vmatpush.msra.mxu0 0.0
    %4567 = vmatpush.msra.mxu0 0.0
    %4568 = vmatpush.msra.mxu0 0.0
    %4569 = vmatpush.msra.mxu0 0.0
    %4570 = vmatpush.msra.mxu0 0.0
    %4571 = vmatpush.msra.mxu0 0.0
    %4572 = vmatpush.msra.mxu0 0.0
    %4573 = vmatpush.msra.mxu0 0.0
    %4574 = vmatpush.msra.mxu0 0.0
    %4575 = vmatpush.msra.mxu0 0.0
    %4576 = vmatpush.msra.mxu0 0.0
    %4577 = vmatpush.msra.mxu0 0.0
    %4578 = vmatpush.msra.mxu0 0.0
    %4579 = vmatpush.msra.mxu0 0.0
    %4580 = vmatpush.msra.mxu0 %v4197
    %4581 = vmatmul.f32.gmra.mxu0 %v4563
    %v4582 = vpop.f32.mrf.mxu0
    %v4583 = vadd.f32 0.0, %v4582
    %4584 = vdwg.mxu0
    %v4586 = vsel %vm2076, %v4555, 0
    %4588 = vmatpush.msra.mxu0 0.0
    %4589 = vmatpush.msra.mxu0 0.0
    %4590 = vmatpush.msra.mxu0 0.0
    %4591 = vmatpush.msra.mxu0 0.0
    %4592 = vmatpush.msra.mxu0 0.0
    %4593 = vmatpush.msra.mxu0 0.0
    %4594 = vmatpush.msra.mxu0 0.0
    %4595 = vmatpush.msra.mxu0 0.0
    %4596 = vmatpush.msra.mxu0 0.0
    %4597 = vmatpush.msra.mxu0 0.0
    %4598 = vmatpush.msra.mxu0 0.0
    %4599 = vmatpush.msra.mxu0 0.0
    %4600 = vmatpush.msra.mxu0 0.0
    %4601 = vmatpush.msra.mxu0 0.0
    %4602 = vmatpush.msra.mxu0 0.0
    %4603 = vmatpush.msra.mxu0 %v4199
    %4604 = vmatmul.f32.gmra.mxu0 %v4586
    %v4605 = vpop.f32.mrf.mxu0
    %v4606 = vadd.f32 0.0, %v4605
    %4607 = vdwg.mxu0
    %v4609 = vsel %vm2076, %v4556, 0
    %4611 = vmatpush.msra.mxu0 0.0
    %4612 = vmatpush.msra.mxu0 0.0
    %4613 = vmatpush.msra.mxu0 0.0
    %4614 = vmatpush.msra.mxu0 0.0
    %4615 = vmatpush.msra.mxu0 0.0
    %4616 = vmatpush.msra.mxu0 0.0
    %4617 = vmatpush.msra.mxu0 0.0
    %4618 = vmatpush.msra.mxu0 0.0
    %4619 = vmatpush.msra.mxu0 0.0
    %4620 = vmatpush.msra.mxu0 0.0
    %4621 = vmatpush.msra.mxu0 0.0
    %4622 = vmatpush.msra.mxu0 0.0
    %4623 = vmatpush.msra.mxu0 0.0
    %4624 = vmatpush.msra.mxu0 0.0
    %4625 = vmatpush.msra.mxu0 0.0
    %4626 = vmatpush.msra.mxu0 %v4201
    %4627 = vmatmul.f32.gmra.mxu0 %v4609
    %v4628 = vpop.f32.mrf.mxu0
    %v4629 = vadd.f32 0.0, %v4628
    %4630 = vdwg.mxu0
    %v4632 = vsel %vm2076, %v4557, 0
    %4634 = vmatpush.msra.mxu0 0.0
    %4635 = vmatpush.msra.mxu0 0.0
    %4636 = vmatpush.msra.mxu0 0.0
    %4637 = vmatpush.msra.mxu0 0.0
    %4638 = vmatpush.msra.mxu0 0.0
    %4639 = vmatpush.msra.mxu0 0.0
    %4640 = vmatpush.msra.mxu0 0.0
    %4641 = vmatpush.msra.mxu0 0.0
    %4642 = vmatpush.msra.mxu0 0.0
    %4643 = vmatpush.msra.mxu0 0.0
    %4644 = vmatpush.msra.mxu0 0.0
    %4645 = vmatpush.msra.mxu0 0.0
    %4646 = vmatpush.msra.mxu0 0.0
    %4647 = vmatpush.msra.mxu0 0.0
    %4648 = vmatpush.msra.mxu0 0.0
    %4649 = vmatpush.msra.mxu0 %v4203
    %4650 = vmatmul.f32.gmra.mxu0 %v4632
    %v4651 = vpop.f32.mrf.mxu0
    %v4652 = vadd.f32 0.0, %v4651
    %4653 = vdwg.mxu0
    %v4655 = vsel %vm2076, %v4558, 0
    %4657 = vmatpush.msra.mxu0 0.0
    %4658 = vmatpush.msra.mxu0 0.0
    %4659 = vmatpush.msra.mxu0 0.0
    %4660 = vmatpush.msra.mxu0 0.0
    %4661 = vmatpush.msra.mxu0 0.0
    %4662 = vmatpush.msra.mxu0 0.0
    %4663 = vmatpush.msra.mxu0 0.0
    %4664 = vmatpush.msra.mxu0 0.0
    %4665 = vmatpush.msra.mxu0 0.0
    %4666 = vmatpush.msra.mxu0 0.0
    %4667 = vmatpush.msra.mxu0 0.0
    %4668 = vmatpush.msra.mxu0 0.0
    %4669 = vmatpush.msra.mxu0 0.0
    %4670 = vmatpush.msra.mxu0 0.0
    %4671 = vmatpush.msra.mxu0 0.0
    %4672 = vmatpush.msra.mxu0 %v4251
    %4673 = vmatmul.f32.gmra.mxu0 %v4655
    %v4674 = vpop.f32.mrf.mxu0
    %v4675 = vadd.f32 0.0, %v4674
    %4676 = vdwg.mxu0
    %v4678 = vsel %vm2076, %v4559, 0
    %4680 = vmatpush.msra.mxu0 0.0
    %4681 = vmatpush.msra.mxu0 0.0
    %4682 = vmatpush.msra.mxu0 0.0
    %4683 = vmatpush.msra.mxu0 0.0
    %4684 = vmatpush.msra.mxu0 0.0
    %4685 = vmatpush.msra.mxu0 0.0
    %4686 = vmatpush.msra.mxu0 0.0
    %4687 = vmatpush.msra.mxu0 0.0
    %4688 = vmatpush.msra.mxu0 0.0
    %4689 = vmatpush.msra.mxu0 0.0
    %4690 = vmatpush.msra.mxu0 0.0
    %4691 = vmatpush.msra.mxu0 0.0
    %4692 = vmatpush.msra.mxu0 0.0
    %4693 = vmatpush.msra.mxu0 0.0
    %4694 = vmatpush.msra.mxu0 0.0
    %4695 = vmatpush.msra.mxu0 %v4253
    %4696 = vmatmul.f32.gmra.mxu0 %v4678
    %v4697 = vpop.f32.mrf.mxu0
    %v4698 = vadd.f32 0.0, %v4697
    %4699 = vdwg.mxu0
    %v4701 = vsel %vm2076, %v4560, 0
    %4703 = vmatpush.msra.mxu0 0.0
    %4704 = vmatpush.msra.mxu0 0.0
    %4705 = vmatpush.msra.mxu0 0.0
    %4706 = vmatpush.msra.mxu0 0.0
    %4707 = vmatpush.msra.mxu0 0.0
    %4708 = vmatpush.msra.mxu0 0.0
    %4709 = vmatpush.msra.mxu0 0.0
    %4710 = vmatpush.msra.mxu0 0.0
    %4711 = vmatpush.msra.mxu0 0.0
    %4712 = vmatpush.msra.mxu0 0.0
    %4713 = vmatpush.msra.mxu0 0.0
    %4714 = vmatpush.msra.mxu0 0.0
    %4715 = vmatpush.msra.mxu0 0.0
    %4716 = vmatpush.msra.mxu0 0.0
    %4717 = vmatpush.msra.mxu0 0.0
    %4718 = vmatpush.msra.mxu0 %v4255
    %4719 = vmatmul.f32.gmra.mxu0 %v4701
    %v4720 = vpop.f32.mrf.mxu0
    %v4721 = vadd.f32 0.0, %v4720
    %4722 = vdwg.mxu0
    %v4724 = vsel %vm2076, %v4561, 0
    %4726 = vmatpush.msra.mxu0 0.0
    %4727 = vmatpush.msra.mxu0 0.0
    %4728 = vmatpush.msra.mxu0 0.0
    %4729 = vmatpush.msra.mxu0 0.0
    %4730 = vmatpush.msra.mxu0 0.0
    %4731 = vmatpush.msra.mxu0 0.0
    %4732 = vmatpush.msra.mxu0 0.0
    %4733 = vmatpush.msra.mxu0 0.0
    %4734 = vmatpush.msra.mxu0 0.0
    %4735 = vmatpush.msra.mxu0 0.0
    %4736 = vmatpush.msra.mxu0 0.0
    %4737 = vmatpush.msra.mxu0 0.0
    %4738 = vmatpush.msra.mxu0 0.0
    %4739 = vmatpush.msra.mxu0 0.0
    %4740 = vmatpush.msra.mxu0 0.0
    %4741 = vmatpush.msra.mxu0 %v4257
    %4742 = vmatmul.f32.gmra.mxu0 %v4724
    %v4743 = vpop.f32.mrf.mxu0
    %v4744 = vadd.f32 0.0, %v4743
    %4745 = vdwg.mxu0
    %v4746 = vrot.slane %v4629, 4
    %v4747 = vsel %vm487, %v4746, %v4583
    %v4748 = vrot.slane %v4583, 4
    %v4749 = vsel %vm487, %v4629, %v4748
    %v4751 = vunpack.c.l.s4 1983009808
    %v4752 = vunpack.c.0.s8 %v4751
    %v4753 = vperm.slane %v4747, %v4752
    %v4755 = vunpack.c.l.s4 1983009808
    %v4756 = vunpack.c.0.s8 %v4755
    %v4757 = vperm.slane %v4749, %v4756
    %v4758 = vrot.slane %v4652, 4
    %v4759 = vsel %vm487, %v4758, %v4606
    %v4760 = vrot.slane %v4606, 4
    %v4761 = vsel %vm487, %v4652, %v4760
    %v4763 = vunpack.c.l.s4 1983009808
    %v4764 = vunpack.c.0.s8 %v4763
    %v4765 = vperm.slane %v4759, %v4764
    %v4767 = vunpack.c.l.s4 1983009808
    %v4768 = vunpack.c.0.s8 %v4767
    %v4769 = vperm.slane %v4761, %v4768
    %v4770 = vrot.slane %v4765, 4
    %v4771 = vsel %vm487, %v4770, %v4753
    %v4772 = vrot.slane %v4753, 4
    %v4773 = vsel %vm487, %v4765, %v4772
    %v4775 = vunpack.c.l.s4 1934713408
    %v4776 = vunpack.c.0.s8 %v4775
    %v4777 = vperm.slane %v4771, %v4776
    %v4779 = vunpack.c.l.s4 1934713408
    %v4780 = vunpack.c.0.s8 %v4779
    %v4781 = vperm.slane %v4773, %v4780
    %v4782 = vrot.slane %v4769, 4
    %v4783 = vsel %vm487, %v4782, %v4757
    %v4784 = vrot.slane %v4757, 4
    %v4785 = vsel %vm487, %v4769, %v4784
    %v4787 = vunpack.c.l.s4 1934713408
    %v4788 = vunpack.c.0.s8 %v4787
    %v4789 = vperm.slane %v4783, %v4788
    %v4791 = vunpack.c.l.s4 1934713408
    %v4792 = vunpack.c.0.s8 %v4791
    %v4793 = vperm.slane %v4785, %v4792
    %v4794 = vrot.slane %v4777, 4
    %v4795 = vsel %vm487, 0.0, %v4794
    %v4796 = vrot.slane %v4781, 4
    %v4797 = vsel %vm487, 0.0, %v4796
    %v4798 = vrot.slane %v4789, 4
    %v4799 = vsel %vm487, 0.0, %v4798
    %v4800 = vrot.slane %v4793, 4
    %v4801 = vsel %vm487, 0.0, %v4800
    %v4802 = vrot.slane %v4721, 4
    %v4803 = vsel %vm487, %v4802, %v4675
    %v4804 = vrot.slane %v4675, 4
    %v4805 = vsel %vm487, %v4721, %v4804
    %v4807 = vunpack.c.l.s4 1983009808
    %v4808 = vunpack.c.0.s8 %v4807
    %v4809 = vperm.slane %v4803, %v4808
    %v4811 = vunpack.c.l.s4 1983009808
    %v4812 = vunpack.c.0.s8 %v4811
    %v4813 = vperm.slane %v4805, %v4812
    %v4814 = vrot.slane %v4744, 4
    %v4815 = vsel %vm487, %v4814, %v4698
    %v4816 = vrot.slane %v4698, 4
    %v4817 = vsel %vm487, %v4744, %v4816
    %v4819 = vunpack.c.l.s4 1983009808
    %v4820 = vunpack.c.0.s8 %v4819
    %v4821 = vperm.slane %v4815, %v4820
    %v4823 = vunpack.c.l.s4 1983009808
    %v4824 = vunpack.c.0.s8 %v4823
    %v4825 = vperm.slane %v4817, %v4824
    %v4826 = vrot.slane %v4821, 4
    %v4827 = vsel %vm487, %v4826, %v4809
    %v4828 = vrot.slane %v4809, 4
    %v4829 = vsel %vm487, %v4821, %v4828
    %v4831 = vunpack.c.l.s4 1934713408
    %v4832 = vunpack.c.0.s8 %v4831
    %v4833 = vperm.slane %v4827, %v4832
    %v4835 = vunpack.c.l.s4 1934713408
    %v4836 = vunpack.c.0.s8 %v4835
    %v4837 = vperm.slane %v4829, %v4836
    %v4838 = vrot.slane %v4825, 4
    %v4839 = vsel %vm487, %v4838, %v4813
    %v4840 = vrot.slane %v4813, 4
    %v4841 = vsel %vm487, %v4825, %v4840
    %v4843 = vunpack.c.l.s4 1934713408
    %v4844 = vunpack.c.0.s8 %v4843
    %v4845 = vperm.slane %v4839, %v4844
    %v4847 = vunpack.c.l.s4 1934713408
    %v4848 = vunpack.c.0.s8 %v4847
    %v4849 = vperm.slane %v4841, %v4848
    %v4850 = vrot.slane %v4833, 4
    %v4851 = vsel %vm487, 0.0, %v4850
    %v4852 = vrot.slane %v4837, 4
    %v4853 = vsel %vm487, 0.0, %v4852
    %v4854 = vrot.slane %v4845, 4
    %v4855 = vsel %vm487, 0.0, %v4854
    %v4856 = vrot.slane %v4849, 4
    %v4857 = vsel %vm487, 0.0, %v4856
    %v4858 = vsel %vm487, %v4796, %v4777
    %v4860 = vunpack.c.l.s4 1983009808
    %v4861 = vunpack.c.0.s8 %v4860
    %v4862 = vperm.slane %v4858, %v4861
    %v4863 = vrot.slane %v4797, 4
    %v4864 = vsel %vm487, %v4863, %v4795
    %v4866 = vunpack.c.l.s4 1983009808
    %v4867 = vunpack.c.0.s8 %v4866
    %v4868 = vperm.slane %v4864, %v4867
    %v4869 = vsel %vm487, %v4800, %v4789
    %v4871 = vunpack.c.l.s4 1983009808
    %v4872 = vunpack.c.0.s8 %v4871
    %v4873 = vperm.slane %v4869, %v4872
    %v4874 = vrot.slane %v4801, 4
    %v4875 = vsel %vm487, %v4874, %v4799
    %v4877 = vunpack.c.l.s4 1983009808
    %v4878 = vunpack.c.0.s8 %v4877
    %v4879 = vperm.slane %v4875, %v4878
    %v4880 = vrot.slane %v4868, 4
    %v4881 = vsel %vm487, %v4880, %v4862
    %v4882 = vrot.slane %v4862, 4
    %v4883 = vsel %vm487, %v4868, %v4882
    %v4885 = vunpack.c.l.s4 1934713408
    %v4886 = vunpack.c.0.s8 %v4885
    %v4887 = vperm.slane %v4881, %v4886
    %v4889 = vunpack.c.l.s4 1934713408
    %v4890 = vunpack.c.0.s8 %v4889
    %v4891 = vperm.slane %v4883, %v4890
    %v4892 = vrot.slane %v4879, 4
    %v4893 = vsel %vm487, %v4892, %v4873
    %v4894 = vrot.slane %v4873, 4
    %v4895 = vsel %vm487, %v4879, %v4894
    %v4897 = vunpack.c.l.s4 1934713408
    %v4898 = vunpack.c.0.s8 %v4897
    %v4899 = vperm.slane %v4893, %v4898
    %v4901 = vunpack.c.l.s4 1934713408
    %v4902 = vunpack.c.0.s8 %v4901
    %v4903 = vperm.slane %v4895, %v4902
    %v4904 = vrot.slane %v4899, 4
    %v4905 = vsel %vm487, %v4904, %v4887
    %v4906 = vrot.slane %v4887, 4
    %v4907 = vsel %vm487, %v4899, %v4906
    %v4908 = vrot.slane %v4903, 4
    %v4909 = vsel %vm487, %v4908, %v4891
    %v4910 = vrot.slane %v4891, 4
    %v4911 = vsel %vm487, %v4903, %v4910
    %v4912 = vsel %vm487, %v4852, %v4833
    %v4914 = vunpack.c.l.s4 1983009808
    %v4915 = vunpack.c.0.s8 %v4914
    %v4916 = vperm.slane %v4912, %v4915
    %v4917 = vrot.slane %v4853, 4
    %v4918 = vsel %vm487, %v4917, %v4851
    %v4920 = vunpack.c.l.s4 1983009808
    %v4921 = vunpack.c.0.s8 %v4920
    %v4922 = vperm.slane %v4918, %v4921
    %v4923 = vsel %vm487, %v4856, %v4845
    %v4925 = vunpack.c.l.s4 1983009808
    %v4926 = vunpack.c.0.s8 %v4925
    %v4927 = vperm.slane %v4923, %v4926
    %v4928 = vrot.slane %v4857, 4
    %v4929 = vsel %vm487, %v4928, %v4855
    %v4931 = vunpack.c.l.s4 1983009808
    %v4932 = vunpack.c.0.s8 %v4931
    %v4933 = vperm.slane %v4929, %v4932
    %v4934 = vrot.slane %v4922, 4
    %v4935 = vsel %vm487, %v4934, %v4916
    %v4936 = vrot.slane %v4916, 4
    %v4937 = vsel %vm487, %v4922, %v4936
    %v4939 = vunpack.c.l.s4 1934713408
    %v4940 = vunpack.c.0.s8 %v4939
    %v4941 = vperm.slane %v4935, %v4940
    %v4943 = vunpack.c.l.s4 1934713408
    %v4944 = vunpack.c.0.s8 %v4943
    %v4945 = vperm.slane %v4937, %v4944
    %v4946 = vrot.slane %v4933, 4
    %v4947 = vsel %vm487, %v4946, %v4927
    %v4948 = vrot.slane %v4927, 4
    %v4949 = vsel %vm487, %v4933, %v4948
    %v4951 = vunpack.c.l.s4 1934713408
    %v4952 = vunpack.c.0.s8 %v4951
    %v4953 = vperm.slane %v4947, %v4952
    %v4955 = vunpack.c.l.s4 1934713408
    %v4956 = vunpack.c.0.s8 %v4955
    %v4957 = vperm.slane %v4949, %v4956
    %v4958 = vrot.slane %v4953, 4
    %v4959 = vsel %vm487, %v4958, %v4941
    %v4960 = vrot.slane %v4941, 4
    %v4961 = vsel %vm487, %v4953, %v4960
    %v4962 = vrot.slane %v4957, 4
    %v4963 = vsel %vm487, %v4962, %v4945
    %v4964 = vrot.slane %v4945, 4
    %v4965 = vsel %vm487, %v4957, %v4964
    %4968 = vrot.lane.b32.xlu0 %v4907, 8
    %v4969 = vpop.permute.xlu0 %4968
    %4970 = vrot.lane.b32.xlu0 %v4961, 8
    %v4971 = vpop.permute.xlu0 %4970
    %4976 = vrot.lane.b32.xlu0 %v4909, 16
    %v4977 = vpop.permute.xlu0 %4976
    %4978 = vrot.lane.b32.xlu0 %v4963, 16
    %v4979 = vpop.permute.xlu0 %4978
    %4984 = vrot.lane.b32.xlu0 %v4911, 24
    %v4985 = vpop.permute.xlu0 %4984
    %4986 = vrot.lane.b32.xlu0 %v4965, 24
    %v4987 = vpop.permute.xlu0 %4986
    %v4990 = vsel %vm2076, %v4905, %v4969
    %v4991 = vsel %vm2076, %v4959, %v4971
    %v4992 = vsel %vm354, %v4990, %v4977
    %v4993 = vsel %vm354, %v4991, %v4979
    %vm4994 = vcmask 195584
    %v4995 = vsel %vm4994, %v4992, %v4985
    %v4996 = vsel %vm4994, %v4993, %v4987
    %v4997 = vld [vmem:[#allocation25] sm:$0xff]
    %v4998 = vld [vmem:[#allocation25 + $0x8] sm:$0xff]
    %v4999 = vld [vmem:[#allocation25 + $0x10] sm:$0xff]
    %v5000 = vld [vmem:[#allocation25 + $0x18] sm:$0xff]
    %v5001 = vld [vmem:[%s26] sm:$0x1]
    %v5003 = vperm.slane %v5001, 0
    %v5006 = vsel %vm318, %v4995, 0
    %v5009 = vsel %vm318, %v4996, 0
    %5011 = vmatpush.msra.mxu0 0.0
    %5012 = vmatpush.msra.mxu0 0.0
    %5013 = vmatpush.msra.mxu0 0.0
    %5014 = vmatpush.msra.mxu0 0.0
    %5015 = vmatpush.msra.mxu0 0.0
    %5016 = vmatpush.msra.mxu0 0.0
    %5017 = vmatpush.msra.mxu0 0.0
    %5018 = vmatpush.msra.mxu0 0.0
    %5019 = vmatpush.msra.mxu0 0.0
    %5020 = vmatpush.msra.mxu0 0.0
    %5021 = vmatpush.msra.mxu0 0.0
    %5022 = vmatpush.msra.mxu0 0.0
    %5023 = vmatpush.msra.mxu0 %v5000
    %5024 = vmatpush.msra.mxu0 %v4999
    %5025 = vmatpush.msra.mxu0 %v4998
    %5026 = vmatpush.msra.mxu0 %v4997
    %5027 = vmatmul.f32.gmra.mxu0 %v5006
    %v5028 = vpop.f32.mrf.mxu0
    %v5029 = vadd.f32 %v5003, %v5028
    %5030 = vmatmul.f32.gmra.mxu0 %v5009
    %v5031 = vpop.f32.mrf.mxu0
    %v5032 = vadd.f32 %v5003, %v5031
    %5033 = vdwg.mxu0
    %v5034 = vrot.slane %v3385, 4
    %v5035 = vsel %vm487, 0.0, %v5034
    %v5037 = vunpack.c.l.s4 1983009808
    %v5038 = vunpack.c.0.s8 %v5037
    %v5039 = vperm.slane %v3385, %v5038
    %v5041 = vunpack.c.l.s4 1983009808
    %v5042 = vunpack.c.0.s8 %v5041
    %v5043 = vperm.slane %v5035, %v5042
    %v5044 = vrot.slane %v3386, 4
    %v5045 = vsel %vm487, 0.0, %v5044
    %v5047 = vunpack.c.l.s4 1983009808
    %v5048 = vunpack.c.0.s8 %v5047
    %v5049 = vperm.slane %v3386, %v5048
    %v5051 = vunpack.c.l.s4 1983009808
    %v5052 = vunpack.c.0.s8 %v5051
    %v5053 = vperm.slane %v5045, %v5052
    %v5054 = vrot.slane %v5049, 4
    %v5055 = vsel %vm487, %v5054, %v5039
    %v5056 = vrot.slane %v5039, 4
    %v5057 = vsel %vm487, %v5049, %v5056
    %v5059 = vunpack.c.l.s4 1934713408
    %v5060 = vunpack.c.0.s8 %v5059
    %v5061 = vperm.slane %v5055, %v5060
    %v5063 = vunpack.c.l.s4 1934713408
    %v5064 = vunpack.c.0.s8 %v5063
    %v5065 = vperm.slane %v5057, %v5064
    %v5066 = vrot.slane %v5053, 4
    %v5067 = vsel %vm487, %v5066, %v5043
    %v5068 = vrot.slane %v5043, 4
    %v5069 = vsel %vm487, %v5053, %v5068
    %v5071 = vunpack.c.l.s4 1934713408
    %v5072 = vunpack.c.0.s8 %v5071
    %v5073 = vperm.slane %v5067, %v5072
    %v5075 = vunpack.c.l.s4 1934713408
    %v5076 = vunpack.c.0.s8 %v5075
    %v5077 = vperm.slane %v5069, %v5076
    %v5078 = vrot.slane %v5061, 4
    %v5079 = vsel %vm487, 0.0, %v5078
    %v5080 = vrot.slane %v5065, 4
    %v5081 = vsel %vm487, 0.0, %v5080
    %v5082 = vrot.slane %v5073, 4
    %v5083 = vsel %vm487, 0.0, %v5082
    %v5084 = vrot.slane %v5077, 4
    %v5085 = vsel %vm487, 0.0, %v5084
    %v5086 = vrot.slane %v3387, 4
    %v5087 = vsel %vm487, 0.0, %v5086
    %v5089 = vunpack.c.l.s4 1983009808
    %v5090 = vunpack.c.0.s8 %v5089
    %v5091 = vperm.slane %v3387, %v5090
    %v5093 = vunpack.c.l.s4 1983009808
    %v5094 = vunpack.c.0.s8 %v5093
    %v5095 = vperm.slane %v5087, %v5094
    %v5096 = vrot.slane %v3388, 4
    %v5097 = vsel %vm487, 0.0, %v5096
    %v5099 = vunpack.c.l.s4 1983009808
    %v5100 = vunpack.c.0.s8 %v5099
    %v5101 = vperm.slane %v3388, %v5100
    %v5103 = vunpack.c.l.s4 1983009808
    %v5104 = vunpack.c.0.s8 %v5103
    %v5105 = vperm.slane %v5097, %v5104
    %v5106 = vrot.slane %v5101, 4
    %v5107 = vsel %vm487, %v5106, %v5091
    %v5108 = vrot.slane %v5091, 4
    %v5109 = vsel %vm487, %v5101, %v5108
    %v5111 = vunpack.c.l.s4 1934713408
    %v5112 = vunpack.c.0.s8 %v5111
    %v5113 = vperm.slane %v5107, %v5112
    %v5115 = vunpack.c.l.s4 1934713408
    %v5116 = vunpack.c.0.s8 %v5115
    %v5117 = vperm.slane %v5109, %v5116
    %v5118 = vrot.slane %v5105, 4
    %v5119 = vsel %vm487, %v5118, %v5095
    %v5120 = vrot.slane %v5095, 4
    %v5121 = vsel %vm487, %v5105, %v5120
    %v5123 = vunpack.c.l.s4 1934713408
    %v5124 = vunpack.c.0.s8 %v5123
    %v5125 = vperm.slane %v5119, %v5124
    %v5127 = vunpack.c.l.s4 1934713408
    %v5128 = vunpack.c.0.s8 %v5127
    %v5129 = vperm.slane %v5121, %v5128
    %v5130 = vrot.slane %v5113, 4
    %v5131 = vsel %vm487, 0.0, %v5130
    %v5132 = vrot.slane %v5117, 4
    %v5133 = vsel %vm487, 0.0, %v5132
    %v5134 = vrot.slane %v5125, 4
    %v5135 = vsel %vm487, 0.0, %v5134
    %v5136 = vrot.slane %v5129, 4
    %v5137 = vsel %vm487, 0.0, %v5136
    %v5138 = vsel %vm487, %v5080, %v5061
    %v5140 = vunpack.c.l.s4 1983009808
    %v5141 = vunpack.c.0.s8 %v5140
    %v5142 = vperm.slane %v5138, %v5141
    %v5143 = vrot.slane %v5081, 4
    %v5144 = vsel %vm487, %v5143, %v5079
    %v5146 = vunpack.c.l.s4 1983009808
    %v5147 = vunpack.c.0.s8 %v5146
    %v5148 = vperm.slane %v5144, %v5147
    %v5149 = vsel %vm487, %v5084, %v5073
    %v5151 = vunpack.c.l.s4 1983009808
    %v5152 = vunpack.c.0.s8 %v5151
    %v5153 = vperm.slane %v5149, %v5152
    %v5154 = vrot.slane %v5085, 4
    %v5155 = vsel %vm487, %v5154, %v5083
    %v5157 = vunpack.c.l.s4 1983009808
    %v5158 = vunpack.c.0.s8 %v5157
    %v5159 = vperm.slane %v5155, %v5158
    %v5160 = vrot.slane %v5148, 4
    %v5161 = vsel %vm487, %v5160, %v5142
    %v5163 = vunpack.c.l.s4 1934713408
    %v5164 = vunpack.c.0.s8 %v5163
    %v5165 = vperm.slane %v5161, %v5164
    %v5166 = vrot.slane %v5159, 4
    %v5167 = vsel %vm487, %v5166, %v5153
    %v5169 = vunpack.c.l.s4 1934713408
    %v5170 = vunpack.c.0.s8 %v5169
    %v5171 = vperm.slane %v5167, %v5170
    %v5172 = vrot.slane %v5171, 4
    %v5173 = vsel %vm487, %v5172, %v5165
    %v5174 = vrot.slane %v5165, 4
    %v5175 = vsel %vm487, %v5171, %v5174
    %v5176 = vsel %vm487, %v5132, %v5113
    %v5178 = vunpack.c.l.s4 1983009808
    %v5179 = vunpack.c.0.s8 %v5178
    %v5180 = vperm.slane %v5176, %v5179
    %v5181 = vrot.slane %v5133, 4
    %v5182 = vsel %vm487, %v5181, %v5131
    %v5184 = vunpack.c.l.s4 1983009808
    %v5185 = vunpack.c.0.s8 %v5184
    %v5186 = vperm.slane %v5182, %v5185
    %v5187 = vsel %vm487, %v5136, %v5125
    %v5189 = vunpack.c.l.s4 1983009808
    %v5190 = vunpack.c.0.s8 %v5189
    %v5191 = vperm.slane %v5187, %v5190
    %v5192 = vrot.slane %v5137, 4
    %v5193 = vsel %vm487, %v5192, %v5135
    %v5195 = vunpack.c.l.s4 1983009808
    %v5196 = vunpack.c.0.s8 %v5195
    %v5197 = vperm.slane %v5193, %v5196
    %v5198 = vrot.slane %v5186, 4
    %v5199 = vsel %vm487, %v5198, %v5180
    %v5201 = vunpack.c.l.s4 1934713408
    %v5202 = vunpack.c.0.s8 %v5201
    %v5203 = vperm.slane %v5199, %v5202
    %v5204 = vrot.slane %v5197, 4
    %v5205 = vsel %vm487, %v5204, %v5191
    %v5207 = vunpack.c.l.s4 1934713408
    %v5208 = vunpack.c.0.s8 %v5207
    %v5209 = vperm.slane %v5205, %v5208
    %v5210 = vrot.slane %v5209, 4
    %v5211 = vsel %vm487, %v5210, %v5203
    %v5212 = vrot.slane %v5203, 4
    %v5213 = vsel %vm487, %v5209, %v5212
    %5216 = vrot.lane.b32.xlu0 %v5175, 16
    %v5217 = vpop.permute.xlu0 %5216
    %5218 = vrot.lane.b32.xlu0 %v5213, 16
    %v5219 = vpop.permute.xlu0 %5218
    %v5222 = vsel %vm354, %v5173, %v5217
    %v5223 = vsel %vm354, %v5211, %v5219
    %5226 = vrot.lane.b32.xlu0 %v5222, 32
    %v5227 = vpop.permute.xlu0 %5226
    %5228 = vrot.lane.b32.xlu0 %v5223, 32
    %v5229 = vpop.permute.xlu0 %5228
    %v5232 = vsel %vm318, %v5029, %v5227
    %v5233 = vsel %vm318, %v5032, %v5229
    %vm5234 = vcmask 523264
    %5235 = vst.msk [vmem:[#allocation26] sm:$0xff] %vm5234, %v5232
    %5236 = vst.msk [vmem:[#allocation26 + $0x8] sm:$0xff] %vm5234, %v5233
    // Predicated region
    $region170: #{tpu_custom_call.1} parent=1 // pred_check
      _
    $region171: #{tpu_custom_call.1} parent=1 // pred_check_branch
      %5238 = sbr.rel (0) target = $region173
    $region172: #{tpu_custom_call.1} parent=1 // pred_region
      %5240 = vsyncadd [#allocation4], 0
      %s5241 = sshll.u32 [#allocation26], 4
      %s5242 = int_to_ptr.vmem [resolvable:$true] %s5241
      %s5243 = sshll.u32 %s27, 4
      %s5244 = int_to_ptr.hbm [resolvable:$true] %s5243
      %5249 = dma.vmem_to_hbm [thread:$0]  %s5242, 256, %s5244, [#allocation4], 128, 128, 8
    $region173: #{tpu_custom_call.1} parent=1 // pred_fallthru
      _
    // Predicated region
    $region174: #{tpu_custom_call.1} parent=1 // pred_check
      _
    $region175: #{tpu_custom_call.1} parent=1 // pred_check_branch
      %5251 = sbr.rel (0) target = $region177
    $region176: #{tpu_custom_call.1} parent=1 // pred_region
      %5253 = dma.done [#allocation4], 256
    $region177: #{tpu_custom_call.1} parent=1 // pred_fallthru
      _
    %5254 = vsyncpa [#allocation3], 1
    %5255 = vsyncpa [#allocation6], 1
    %5256 = vsyncpa [#allocation9], 1
    %5257 = vsyncpa [#allocation12], 1
    %5258 = vsyncpa [#allocation15], 1
    %5259 = vsyncpa [#allocation18], 1
    %5260 = vsyncpa [#allocation21], 1
    %5261 = vsyncpa [#allocation24], 1
    %5262 = vsyncpa [#allocation4], 1

</llo_original>
